<compile_context>
chip_gen: v7x
topology: tpu7x:2x2x1
jax: 0.10.0
libtpu: 0.0.40
codegen_flags: <defaults>
</compile_context>

<pallas_src>
import math

import jax
import jax.numpy as jnp
from jax.experimental import pallas as pl
from jax.experimental.pallas import tpu as pltpu


def _round_up(x, m):
    return (x + m - 1) // m * m


def _cdiv(a, b):
    return (a + b - 1) // b


def _vmem_capacity_bytes():
    """Physical VMEM per TensorCore; conservative fallback (v7x) if unknown."""
    try:
        return int(pltpu.get_tpu_info().vmem_capacity_bytes)
    except Exception:
        return 64 << 20


# ---------------------------------------------------------------------------
# Kernel
# ---------------------------------------------------------------------------
def _sine_kernel(x_ref, w_ref, b_ref, o_ref):
    # x_ref: (tm, K)  w_ref: (K, tn)  b_ref: (1, tn)  o_ref: (tm, tn)
    # omega_0 is already folded into w_ref / b_ref.
    x = x_ref[...]
    w = w_ref[...]
    if w.dtype != x.dtype:
        # bf16 weight fast path (v6e/v7x MXU): cast activations, accumulate f32.
        x = x.astype(w.dtype)
    z = jnp.dot(x, w, preferred_element_type=jnp.float32)
    z = z + b_ref[...]                    # bias broadcast over rows (f32)
    o_ref[...] = jnp.sin(z).astype(o_ref.dtype)


# ---------------------------------------------------------------------------
# One-time parameter prep (do this at init, NOT per forward call)
# ---------------------------------------------------------------------------
def prepare_sine_layer_params(weight, bias, omega_0, *, weights_dtype=jnp.float32):
    """Fold omega_0 into (W, b), transpose, pad N up to a multiple of 128.

    weight: [N, K] (PyTorch nn.Linear layout), bias: [N].
    Returns (w_t, b2d, n_out):
      w_t : [K, Npad] = (omega_0 * W)^T, cast to `weights_dtype`
      b2d : [1, Npad] = omega_0 * b (always f32), zero-padded
    Padding keeps output stores lane-dense; padded columns are sin(0)=0.
    Use weights_dtype=jnp.bfloat16 on v6e/v7x for ~3x MXU throughput on wide
    hidden layers (re-validate SIREN accuracy before enabling).
    """
    n_out, _k = weight.shape
    n_pad = _round_up(n_out, 128)
    w_t = (jnp.float32(omega_0) * weight.astype(jnp.float32)).T       # [K, N]
    w_t = jnp.pad(w_t, ((0, 0), (0, n_pad - n_out))).astype(weights_dtype)
    b = (jnp.float32(omega_0) * bias.astype(jnp.float32))
    b2d = jnp.pad(b, (0, n_pad - n_out)).reshape(1, n_pad)             # [1, Npad]
    return w_t, b2d, n_out


# ---------------------------------------------------------------------------
# Tile selection
# ---------------------------------------------------------------------------
def _select_tiles(M, K, n_pad, x_bytes, w_bytes, o_bytes, vmem_budget,
                  tm_cap, tn_cap):
    m8 = _round_up(max(M, 1), 8)

    # N tiles: multiple of 128, balanced.
    num_n = max(1, _cdiv(n_pad, tn_cap))
    tn = _round_up(_cdiv(n_pad, num_n), 128)
    num_n = _cdiv(n_pad, tn)

    # Weight/bias are grid-invariant iff N is not tiled -> single buffer then.
    w_bufs = 1 if num_n == 1 else 2
    weight_vmem = w_bufs * (K * tn * w_bytes + tn * 4)

    # M tile from the remaining VMEM budget (double-buffered x + out tiles).
    per_row = 2 * (K * x_bytes + tn * o_bytes)
    tm_fit = (vmem_budget - weight_vmem) // max(per_row, 1)
    tm = max(8, min(tm_cap, m8, (tm_fit // 8) * 8 if tm_fit > 0 else 8))

    # Balance M tiles so the boundary tile is not nearly empty (e.g. M=300).
    num_m = max(1, _cdiv(m8, tm))
    tm = _round_up(_cdiv(m8, num_m), 8)

    # Give v7x's two TensorCores >= 2 parallel steps; one extra grid step is
    # ~0.35us on single-TC v5e/v6e, i.e. negligible.
    if num_n * num_m == 1 and m8 >= 16:
        tm = _round_up(_cdiv(m8, 2), 8)

    num_m = _cdiv(m8, tm)
    return tm, num_m, tn, num_n, w_bufs


# ---------------------------------------------------------------------------
# Forward call
# ---------------------------------------------------------------------------
def sine_layer(x, w_t, b2d, n_out, *, tm_cap=1024, tn_cap=1024,
               slice_output=True):
    """Apply the SIREN sine layer.

    x    : [M, K] f32 (or bf16)
    w_t  : [K, Npad]   (from prepare_sine_layer_params; omega_0 folded in)
    b2d  : [1, Npad] f32
    n_out: true out_features.
    slice_output=False returns the lane-padded [M, Npad] activation (padded
    columns are exactly 0) so a following layer can consume it without an
    extra HBM slice copy.
    """
    M, K = x.shape
    k_w, n_pad = w_t.shape
    assert k_w == K, "weight / input feature mismatch"

    vmem_cap = _vmem_capacity_bytes()
    x_bytes = x.dtype.itemsize
    w_bytes = w_t.dtype.itemsize
    o_bytes = x.dtype.itemsize

    tm, num_m, tn, num_n, w_bufs = _select_tiles(
        M, K, n_pad, x_bytes, w_bytes, o_bytes,
        vmem_budget=int(vmem_cap * 0.6), tm_cap=tm_cap, tn_cap=tn_cap)

    # Grid: N tiles outer, M tiles inner (weight slice stays resident while the
    # activation rows stream underneath it). Both axes are fully parallel.
    grid = (num_n, num_m)

    if num_n == 1:
        # Grid-invariant weight & bias -> single VMEM buffer (no wasted copy).
        w_spec = pl.BlockSpec((K, tn), lambda j, i: (0, 0),
                              pipeline_mode=pl.Buffered(buffer_count=1))
        b_spec = pl.BlockSpec((1, tn), lambda j, i: (0, 0),
                              pipeline_mode=pl.Buffered(buffer_count=1))
    else:
        w_spec = pl.BlockSpec((K, tn), lambda j, i: (0, j))
        b_spec = pl.BlockSpec((1, tn), lambda j, i: (0, j))

    cost = pl.CostEstimate(
        flops=2 * M * K * n_pad,
        transcendentals=M * n_pad,
        bytes_accessed=(x_bytes * M * K * num_n + w_bytes * K * n_pad
                        + 4 * n_pad + o_bytes * M * n_pad),
    )

    vmem_bytes = (w_bufs * (K * tn * w_bytes + tn * 4)
                  + 2 * tm * K * x_bytes
                  + 2 * tm * tn * o_bytes)
    compiler_kwargs = dict(dimension_semantics=("parallel", "parallel"))
    if vmem_bytes > (16 << 20):
        # Raise the scoped-VMEM limit only when needed; cap at ~3/4 of the
        # chip's physical VMEM (48 MiB on v7x, 96 MiB on v5e/v6e).
        compiler_kwargs["vmem_limit_bytes"] = min(
            vmem_bytes + (4 << 20), (vmem_cap * 3) // 4)

    out = pl.pallas_call(
        _sine_kernel,
        out_shape=jax.ShapeDtypeStruct((M, n_pad), x.dtype),
        grid_spec=pltpu.PrefetchScalarGridSpec(
            num_scalar_prefetch=0,
            grid=grid,
            in_specs=[
                pl.BlockSpec((tm, K), lambda j, i: (i, 0)),   # activation rows
                w_spec,                                       # weight slice
                b_spec,                                       # bias slice
            ],
            out_specs=pl.BlockSpec((tm, tn), lambda j, i: (i, j)),
        ),
        compiler_params=pltpu.CompilerParams(**compiler_kwargs),
        cost_estimate=cost,
    )(x, w_t, b2d)

    if slice_output and n_pad != n_out:
        out = out[:, :n_out]
    return out


# ---------------------------------------------------------------------------
# SIREN init (matches SineLayer.init_weights + nn.Linear default bias init)
# ---------------------------------------------------------------------------
def init_sine_layer_params(key, in_features, out_features, *, is_first, omega_0):
    kw, kb = jax.random.split(key)
    if is_first:
        bound_w = 1.0 / in_features
    else:
        bound_w = math.sqrt(6.0 / in_features) / omega_0
    weight = jax.random.uniform(
        kw, (out_features, in_features), jnp.float32, -bound_w, bound_w)
    bound_b = 1.0 / math.sqrt(in_features)
    bias = jax.random.uniform(kb, (out_features,), jnp.float32, -bound_b, bound_b)
    return weight, bias


if __name__ == "__main__":
    key = jax.random.PRNGKey(0)
    k_x, k_p = jax.random.split(key)

    M = 512            # number of input coordinates (batch of points)
    in_features = 32
    out_features = 64
    omega_0 = 30.0
    is_first = True

    x = jax.random.uniform(k_x, (M, in_features), jnp.float32, -1.0, 1.0)
    weight, bias = init_sine_layer_params(
        k_p, in_features, out_features, is_first=is_first, omega_0=omega_0)

    # One-time prep: fold omega_0, transpose, lane-pad N (f32 path for accuracy).
    w_t, b2d, n_out = prepare_sine_layer_params(weight, bias, omega_0)

    out = sine_layer(x, w_t, b2d, n_out)
    out = jax.block_until_ready(out)

    # Sanity check against plain-JAX reference of the PyTorch module semantics.
    ref = jnp.sin(omega_0 * (x @ weight.T + bias))
    assert out.shape == (M, out_features)
    assert jnp.allclose(out, ref, atol=1e-4, rtol=1e-5), "mismatch vs reference"

    print("KERNEL_OK")
</pallas_src>

<mosaic_0001>
module attributes {stable_mosaic.version = 11 : i64} {
  func.func @_sine_kernel(%arg0: i32, %arg1: i32, %arg2: memref<256x32xf32, #tpu.memory_space<vmem>>, %arg3: memref<32x128xf32, #tpu.memory_space<vmem>>, %arg4: memref<1x128xf32, #tpu.memory_space<vmem>>, %arg5: memref<256x128xf32, #tpu.memory_space<vmem>>) attributes {dimension_semantics = [#tpu.dimension_semantics<parallel>, #tpu.dimension_semantics<parallel>], iteration_bounds = array<i64: 1, 2>, scalar_prefetch = 0 : i64, scratch_operands = 0 : i64, tpu.core_type = #tpu.core_type<tc>, window_params = [{transform_indices = @transform_0, window_bounds = array<i64: 256, 32>}, {pipeline_mode = #tpu.pipeline_mode<synchronous>, transform_indices = @transform_1, window_bounds = array<i64: 32, 128>}, {pipeline_mode = #tpu.pipeline_mode<synchronous>, transform_indices = @transform_2, window_bounds = array<i64: 1, 128>}, {transform_indices = @transform_3, window_bounds = array<i64: 256, 128>}]} {
    %c0 = arith.constant 0 : index
    %c0_0 = arith.constant 0 : index
    %0 = vector.load %arg2[%c0, %c0_0] : memref<256x32xf32, #tpu.memory_space<vmem>>, vector<256x32xf32>
    %c0_1 = arith.constant 0 : index
    %c0_2 = arith.constant 0 : index
    %1 = vector.load %arg3[%c0_1, %c0_2] : memref<32x128xf32, #tpu.memory_space<vmem>>, vector<32x128xf32>
    %cst = arith.constant dense<0.000000e+00> : vector<256x128xf32>
    %2 = tpu.matmul %0, %1, %cst {dimension_numbers = #tpu.dot_dimension_numbers<[1], [0], [0], [1], [0, 0, 1, 1], [], []>} : vector<256x32xf32>, vector<32x128xf32>, vector<256x128xf32> -> vector<256x128xf32>
    %c0_3 = arith.constant 0 : index
    %c0_4 = arith.constant 0 : index
    %3 = vector.load %arg4[%c0_3, %c0_4] : memref<1x128xf32, #tpu.memory_space<vmem>>, vector<1x128xf32>
    %4 = vector.broadcast %3 : vector<1x128xf32> to vector<256x128xf32>
    %5 = arith.addf %2, %4 : vector<256x128xf32>
    %6 = math.sin %5 : vector<256x128xf32>
    %c0_5 = arith.constant 0 : index
    %c0_6 = arith.constant 0 : index
    %7 = vector.load %arg5[%c0_5, %c0_6] : memref<256x128xf32, #tpu.memory_space<vmem>>, vector<256x128xf32>
    tpu.vector_store %arg5[%c0_5, %c0_6], %6 {strides = array<i32>} : memref<256x128xf32, #tpu.memory_space<vmem>>, vector<256x128xf32>,
    return
  }
  func.func @transform_0(%arg0: i32, %arg1: i32) -> (i32, i32) {
    %c0_i32 = arith.constant 0 : i32
    %c0_i32_0 = arith.constant 0 : i32
    return %arg1, %c0_i32 : i32, i32
  }
  func.func @transform_1(%arg0: i32, %arg1: i32) -> (i32, i32) {
    %c0_i32 = arith.constant 0 : i32
    %c0_i32_0 = arith.constant 0 : i32
    %c0_i32_1 = arith.constant 0 : i32
    return %c0_i32, %c0_i32_0 : i32, i32
  }
  func.func @transform_2(%arg0: i32, %arg1: i32) -> (i32, i32) {
    %c0_i32 = arith.constant 0 : i32
    %c0_i32_0 = arith.constant 0 : i32
    %c0_i32_1 = arith.constant 0 : i32
    return %c0_i32, %c0_i32_0 : i32, i32
  }
  func.func @transform_3(%arg0: i32, %arg1: i32) -> (i32, i32) {
    %c0_i32 = arith.constant 0 : i32
    return %arg1, %arg0 : i32, i32
  }
}

</mosaic_0001>

<llo_original>
// kernel: tpu_custom_call.1
$region0: #{tpu_custom_call.1}
  #allocation0 [shape = 'u32[]', space=smem, size = 0x4, offset = 0x4, fixed_abs, tag = 'smem constant byte address 0x4 - core index']
  #allocation1 [shape = 'u32[144,128]{1,0:T(1,128)}', space=vmem, size = 0x12000, scoped, tag = 'internal scratch']
  %s0 = inlined_call_operand.vmem [shape: f32[512,32], index: 0, kind: input, shape index: {}]
  %s1 = inlined_call_operand.vmem [shape: f32[32,128], index: 1, kind: input, shape index: {}]
  %s2 = inlined_call_operand.vmem [shape: f32[1,128], index: 2, kind: input, shape index: {}]
  %s3 = inlined_call_operand.hbm [shape: f32[512,128], index: 3, kind: output, shape index: {}]
  %s4 = sld [smem:[#allocation0]]
  $region45: #{tpu_custom_call.1} parent=0
    _
  %s6 = ssub.s32 1, %s4
  %s7 = scalar_select 0, %s6, %s4
  $region1: #{tpu_custom_call.1} parent=0
    #allocation2 [shape = 'u8[262144]{0}', space=vmem, size = 0x40000, scoped, tag = 'output window, operand 0']
    #allocation3 [shape = 's32[2]{0}', space=sflag, size = 0x8, scoped, tag = 'scoped memory for tpu_custom_call.1']
    %8 = vsyncpa [#allocation3], 0
    %s9 = scalar_lea.sflag [#allocation3], 1
    %10 = vsyncpa %s9, 0
    loop: start=0, step=1, limit=4
    $region2: #{tpu_custom_call.1} parent=1 // loop_pre_header
      _
    $region3: #{tpu_custom_call.1} parent=1 // loop_header
      %s12 = sphi 0, %s16
      %p13 = scmp.ge.s32.totalorder %s12, 4
      %s19 = sphi 0, %s31
      %s20 = sphi 0, %s27
      %s21 = sphi 0, %s19
      %s22 = sphi 0, %s20
      %s23 = sphi 0, %s21
      %s24 = sphi 0, %s22
      %s34 = sphi 0, %s36
      %s37 = sphi 0, %s34
      %s38 = sphi 0, %s37
      %s54 = sphi 0, %s38
      %s58 = sphi 0, %s58
      %s60 = sphi 0, %s58
      %s61 = sphi 0, %s60
      %s75 = sphi 0, %s61
      %s79 = sphi 0, %s79
      %s81 = sphi 0, %s79
      %s82 = sphi 0, %s81
      %s96 = sphi 0, %s82
      %s104 = sphi 0, %s106
      %s107 = sphi 0, %s104
      %s108 = sphi 0, %s107
      %s124 = sphi 0, %s108
    $region4: #{tpu_custom_call.1} parent=1 // loop_header_branch
      %15 = sbr.rel (%p13) target = $region8
    $region5: #{tpu_custom_call.1} parent=1 // loop_body
      %s17 = ssub.s32 %s12, 1
      %s18 = ssub.s32 %s12, 2
      %s25 = sadd.s32 1, %s20
      %p26 = scmp.ge.s32.totalorder %s25, 2
      %s27 = scalar_select %p26, 0, %s25
      %s28 = sadd.s32 1, %s19
      %s29 = scalar_select %p26, %s28, %s19
      %p30 = scmp.ge.s32.totalorder %s29, 1
      %s31 = scalar_select %p30, 0, %s29
      %s32 = ssub.s32 %s20, %s27
      %p33 = scmp.eq.s32.totalorder %s32, 0
      %s35 = sadd.s32 %s34, 1
      %s36 = scalar_select %p33, %s34, %s35
      %p39 = pneg %p33
      %p40 = scmp.eq.s32.totalorder %s12, 1
      %p41 = por %p39, %p40
      %p42 = scmp.ne.s32.totalorder %s34, %s37
      %p43 = scmp.eq.s32.totalorder %s12, 0
      %p44 = por %p42, %p43
      %p45 = scmp.ne.s32.totalorder %s34, %s37
      %p46 = scmp.eq.s32.totalorder %s17, 1
      %p47 = por %p45, %p46
      %p48 = scmp.ne.s32.totalorder %s37, %s38
      %p49 = scmp.eq.s32.totalorder %s17, 0
      %p50 = por %p48, %p49
      %p51 = scmp.ne.s32.totalorder %s37, %s38
      %p52 = scmp.eq.s32.totalorder %s18, 1
      %p53 = por %p51, %p52
      %p55 = scmp.ne.s32.totalorder %s38, %s54
      %p56 = scmp.eq.s32.totalorder %s18, 0
      %p57 = por %p55, %p56
      %s59 = sadd.s32 %s58, 1
      %p62 = scmp.eq.s32.totalorder %s12, 1
      %p63 = scmp.ne.s32.totalorder %s58, %s60
      %p64 = scmp.eq.s32.totalorder %s12, 0
      %p65 = por %p63, %p64
      %p66 = scmp.ne.s32.totalorder %s58, %s60
      %p67 = scmp.eq.s32.totalorder %s17, 1
      %p68 = por %p66, %p67
      %p69 = scmp.ne.s32.totalorder %s60, %s61
      %p70 = scmp.eq.s32.totalorder %s17, 0
      %p71 = por %p69, %p70
      %p72 = scmp.ne.s32.totalorder %s60, %s61
      %p73 = scmp.eq.s32.totalorder %s18, 1
      %p74 = por %p72, %p73
      %p76 = scmp.ne.s32.totalorder %s61, %s75
      %p77 = scmp.eq.s32.totalorder %s18, 0
      %p78 = por %p76, %p77
      %s80 = sadd.s32 %s79, 1
      %p83 = scmp.eq.s32.totalorder %s12, 1
      %p84 = scmp.ne.s32.totalorder %s79, %s81
      %p85 = scmp.eq.s32.totalorder %s12, 0
      %p86 = por %p84, %p85
      %p87 = scmp.ne.s32.totalorder %s79, %s81
      %p88 = scmp.eq.s32.totalorder %s17, 1
      %p89 = por %p87, %p88
      %p90 = scmp.ne.s32.totalorder %s81, %s82
      %p91 = scmp.eq.s32.totalorder %s17, 0
      %p92 = por %p90, %p91
      %p93 = scmp.ne.s32.totalorder %s81, %s82
      %p94 = scmp.eq.s32.totalorder %s18, 1
      %p95 = por %p93, %p94
      %p97 = scmp.ne.s32.totalorder %s82, %s96
      %p98 = scmp.eq.s32.totalorder %s18, 0
      %p99 = por %p97, %p98
      %s100 = ssub.s32 %s20, %s27
      %s101 = ssub.s32 %s19, %s31
      %s102 = sor.u32 %s100, %s101
      %p103 = scmp.eq.s32.totalorder %s102, 0
      %s105 = sadd.s32 %s104, 1
      %s106 = scalar_select %p103, %s104, %s105
      %p109 = pneg %p103
      %p110 = scmp.eq.s32.totalorder %s12, 1
      %p111 = por %p109, %p110
      %p112 = scmp.ne.s32.totalorder %s104, %s107
      %p113 = scmp.eq.s32.totalorder %s12, 0
      %p114 = por %p112, %p113
      %p115 = scmp.ne.s32.totalorder %s104, %s107
      %p116 = scmp.eq.s32.totalorder %s17, 1
      %p117 = por %p115, %p116
      %p118 = scmp.ne.s32.totalorder %s107, %s108
      %p119 = scmp.eq.s32.totalorder %s17, 0
      %p120 = por %p118, %p119
      %p121 = scmp.ne.s32.totalorder %s107, %s108
      %p122 = scmp.eq.s32.totalorder %s18, 1
      %p123 = por %p121, %p122
      %p125 = scmp.ne.s32.totalorder %s108, %s124
      %p126 = scmp.eq.s32.totalorder %s18, 0
      %p127 = por %p125, %p126
      %p128 = scmp.le.s32.totalorder 1, %s12
      %p129 = scmp.lt.s32.totalorder %s12, 3
      %p130 = pnand %p128, %p129
      %p131 = pneg %p130
      // Predicated region
      $region9: #{tpu_custom_call.1} parent=5 // pred_check
        _
      $region10: #{tpu_custom_call.1} parent=5 // pred_check_branch
        %133 = sbr.rel (%p130) target = $region12
      $region11: #{tpu_custom_call.1} parent=5 // pred_region
        %s134 = ssub.s32 %s12, 1
        // Predicated region
        $region13: #{tpu_custom_call.1} parent=11 // pred_check
          %p135 = pneg %p71
        $region14: #{tpu_custom_call.1} parent=11 // pred_check_branch
          %137 = sbr.rel (%p135) target = $region16
        $region15: #{tpu_custom_call.1} parent=11 // pred_region
          _
        $region16: #{tpu_custom_call.1} parent=11 // pred_fallthru
          _
        // Predicated region
        $region17: #{tpu_custom_call.1} parent=11 // pred_check
          %p138 = pneg %p92
        $region18: #{tpu_custom_call.1} parent=11 // pred_check_branch
          %140 = sbr.rel (%p138) target = $region20
        $region19: #{tpu_custom_call.1} parent=11 // pred_region
          _
        $region20: #{tpu_custom_call.1} parent=11 // pred_fallthru
          _
      $region12: #{tpu_custom_call.1} parent=5 // pred_fallthru
        _
      %p141 = scmp.lt.s32.totalorder %s12, 2
      // Predicated region
      $region21: #{tpu_custom_call.1} parent=5 // pred_check
        %p142 = pneg %p141
      $region22: #{tpu_custom_call.1} parent=5 // pred_check_branch
        %144 = sbr.rel (%p142) target = $region24
      $region23: #{tpu_custom_call.1} parent=5 // pred_region
        // Predicated region
        $region25: #{tpu_custom_call.1} parent=23 // pred_check
          %p145 = pneg %p44
        $region26: #{tpu_custom_call.1} parent=23 // pred_check_branch
          %147 = sbr.rel (%p145) target = $region28
        $region27: #{tpu_custom_call.1} parent=23 // pred_region
          %s148 = smul.u32 32, %s20
          %p149 = scmp.lt.s32.totalorder %s148, 63
          %s150 = scalar_select %p149, %s148, 63
          %s151 = smul.addr %s150, 8
          %s152 = scalar_lea.vmem %s0, %s151
          %s153 = smul.u32 32, %s20
        $region28: #{tpu_custom_call.1} parent=23 // pred_fallthru
          _
      $region24: #{tpu_custom_call.1} parent=5 // pred_fallthru
        _
      %p154 = scmp.le.s32.totalorder 1, %s12
      %p155 = scmp.lt.s32.totalorder %s12, 3
      %p156 = pnand %p154, %p155
      %p157 = pneg %p156
      // Predicated region
      $region29: #{tpu_custom_call.1} parent=5 // pred_check
        _
      $region30: #{tpu_custom_call.1} parent=5 // pred_check_branch
        %159 = sbr.rel (%p156) target = $region32
      $region31: #{tpu_custom_call.1} parent=5 // pred_region
        %s160 = ssub.s32 %s12, 1
        %s161 = smul.u32 32, %s22
        %p162 = scmp.lt.s32.totalorder %s161, 63
        %s163 = scalar_select %p162, %s161, 63
        %s164 = smul.addr %s163, 8
        %s165 = scalar_lea.vmem %s0, %s164
        %p166 = pneg %p50
        %p167 = pneg %p47
        %p168 = pneg %p71
        %p169 = pneg %p68
        %p170 = pneg %p92
        %p171 = pneg %p89
        %p172 = pneg %p120
        %p173 = pneg %p117
        %s174 = sand.u32 %s107, 1
        %s175 = scalar_lea.sflag [#allocation3], %s174
        %s176 = sand.u32 %s107, 1
        %s177 = smul.addr %s176, 256
        %s178 = scalar_lea.vmem [#allocation2], %s177
        %s179 = smul.u32 32, %s22
        %p180 = scmp.lt.s32.totalorder %s179, 63
        %s181 = scalar_select %p180, %s179, 63
        %s182 = smul.addr %s181, 8
        %s183 = scalar_lea.vmem %s0, %s182
        %s184 = smul.u32 32, %s22
        %s185 = smul.u32 32, %s22
        %v186 = vld [vmem:[%s183] sm:$0xff]
        %v187 = vld [vmem:[%s183 + $0x8] sm:$0xff]
        %v188 = vld [vmem:[%s183 + $0x10] sm:$0xff]
        %v189 = vld [vmem:[%s183 + $0x18] sm:$0xff]
        %v190 = vld [vmem:[%s183 + $0x20] sm:$0xff]
        %v191 = vld [vmem:[%s183 + $0x28] sm:$0xff]
        %v192 = vld [vmem:[%s183 + $0x30] sm:$0xff]
        %v193 = vld [vmem:[%s183 + $0x38] sm:$0xff]
        %v194 = vld [vmem:[%s183 + $0x40] sm:$0xff]
        %v195 = vld [vmem:[%s183 + $0x48] sm:$0xff]
        %v196 = vld [vmem:[%s183 + $0x50] sm:$0xff]
        %v197 = vld [vmem:[%s183 + $0x58] sm:$0xff]
        %v198 = vld [vmem:[%s183 + $0x60] sm:$0xff]
        %v199 = vld [vmem:[%s183 + $0x68] sm:$0xff]
        %v200 = vld [vmem:[%s183 + $0x70] sm:$0xff]
        %v201 = vld [vmem:[%s183 + $0x78] sm:$0xff]
        %v202 = vld [vmem:[%s183 + $0x80] sm:$0xff]
        %v203 = vld [vmem:[%s183 + $0x88] sm:$0xff]
        %v204 = vld [vmem:[%s183 + $0x90] sm:$0xff]
        %v205 = vld [vmem:[%s183 + $0x98] sm:$0xff]
        %v206 = vld [vmem:[%s183 + $0xa0] sm:$0xff]
        %v207 = vld [vmem:[%s183 + $0xa8] sm:$0xff]
        %v208 = vld [vmem:[%s183 + $0xb0] sm:$0xff]
        %v209 = vld [vmem:[%s183 + $0xb8] sm:$0xff]
        %v210 = vld [vmem:[%s183 + $0xc0] sm:$0xff]
        %v211 = vld [vmem:[%s183 + $0xc8] sm:$0xff]
        %v212 = vld [vmem:[%s183 + $0xd0] sm:$0xff]
        %v213 = vld [vmem:[%s183 + $0xd8] sm:$0xff]
        %v214 = vld [vmem:[%s183 + $0xe0] sm:$0xff]
        %v215 = vld [vmem:[%s183 + $0xe8] sm:$0xff]
        %v216 = vld [vmem:[%s183 + $0xf0] sm:$0xff]
        %v217 = vld [vmem:[%s183 + $0xf8] sm:$0xff]
        %v218 = vld [vmem:[%s1] sm:$0xff]
        %v219 = vld [vmem:[%s1 + $0x8] sm:$0xff]
        %v220 = vld [vmem:[%s1 + $0x10] sm:$0xff]
        %v221 = vld [vmem:[%s1 + $0x18] sm:$0xff]
        %v222 = vld [vmem:[%s2] sm:$0x1]
        %v224 = vlaneseq
        %v225 = vshrl.u32 %v224, 7
        %v226 = vsub.s32 0, %v225
        %v227 = vrot.slane %v222, %v226
        %vm229 = vcmask 261120
        %v231 = vsel %vm229, %v186, 0
        %v234 = vsel %vm229, %v187, 0
        %v237 = vsel %vm229, %v188, 0
        %v240 = vsel %vm229, %v189, 0
        %v243 = vsel %vm229, %v190, 0
        %v246 = vsel %vm229, %v191, 0
        %v249 = vsel %vm229, %v192, 0
        %v252 = vsel %vm229, %v193, 0
        %v255 = vsel %vm229, %v194, 0
        %v258 = vsel %vm229, %v195, 0
        %v261 = vsel %vm229, %v196, 0
        %v264 = vsel %vm229, %v197, 0
        %v267 = vsel %vm229, %v198, 0
        %v270 = vsel %vm229, %v199, 0
        %v273 = vsel %vm229, %v200, 0
        %v276 = vsel %vm229, %v201, 0
        %v279 = vsel %vm229, %v202, 0
        %v282 = vsel %vm229, %v203, 0
        %v285 = vsel %vm229, %v204, 0
        %v288 = vsel %vm229, %v205, 0
        %v291 = vsel %vm229, %v206, 0
        %v294 = vsel %vm229, %v207, 0
        %v297 = vsel %vm229, %v208, 0
        %v300 = vsel %vm229, %v209, 0
        %v303 = vsel %vm229, %v210, 0
        %v306 = vsel %vm229, %v211, 0
        %v309 = vsel %vm229, %v212, 0
        %v312 = vsel %vm229, %v213, 0
        %v315 = vsel %vm229, %v214, 0
        %v318 = vsel %vm229, %v215, 0
        %v321 = vsel %vm229, %v216, 0
        %v324 = vsel %vm229, %v217, 0
        %326 = vmatprep.subr.mxu0 0.0
        %327 = vmatpush1.msra.mxu0 %v218
        %328 = vmatprep.subr.mxu0 0.0
        %329 = vmatpush1.msra.mxu0 %v219
        %330 = vmatprep.subr.mxu0 0.0
        %331 = vmatpush1.msra.mxu0 %v220
        %332 = vmatprep.subr.mxu0 0.0
        %333 = vmatpush1.msra.mxu0 %v221
        %334 = vmatprep.subr.mxu0 0.0
        %335 = vmatpush1.msra.mxu0 0.0
        %336 = vmatprep.subr.mxu0 0.0
        %337 = vmatpush1.msra.mxu0 0.0
        %338 = vmatprep.subr.mxu0 0.0
        %339 = vmatpush1.msra.mxu0 0.0
        %340 = vmatprep.subr.mxu0 0.0
        %341 = vmatpush1.msra.mxu0 0.0
        %342 = vmatprep.subr.mxu0 0.0
        %343 = vmatpush1.msra.mxu0 0.0
        %344 = vmatprep.subr.mxu0 0.0
        %345 = vmatpush1.msra.mxu0 0.0
        %346 = vmatprep.subr.mxu0 0.0
        %347 = vmatpush1.msra.mxu0 0.0
        %348 = vmatprep.subr.mxu0 0.0
        %349 = vmatpush1.msra.mxu0 0.0
        %350 = vmatprep.subr.mxu0 0.0
        %351 = vmatpush1.msra.mxu0 0.0
        %352 = vmatprep.subr.mxu0 0.0
        %353 = vmatpush1.msra.mxu0 0.0
        %354 = vmatprep.subr.mxu0 0.0
        %355 = vmatpush1.msra.mxu0 0.0
        %356 = vmatprep.subr.mxu0 0.0
        %357 = vmatpush1.msra.mxu0 0.0
        %358 = vmatprep.subr.mxu0 0.0
        %359 = vmatpush1.msra.mxu0 0.0
        %360 = vmatprep.subr.mxu0 0.0
        %361 = vmatpush1.msra.mxu0 0.0
        %362 = vmatprep.subr.mxu0 0.0
        %363 = vmatpush1.msra.mxu0 0.0
        %364 = vmatprep.subr.mxu0 0.0
        %365 = vmatpush1.msra.mxu0 0.0
        %366 = vmatprep.subr.mxu0 0.0
        %367 = vmatpush1.msra.mxu0 0.0
        %368 = vmatprep.subr.mxu0 0.0
        %369 = vmatpush1.msra.mxu0 0.0
        %370 = vmatprep.subr.mxu0 0.0
        %371 = vmatpush1.msra.mxu0 0.0
        %372 = vmatprep.subr.mxu0 0.0
        %373 = vmatpush1.msra.mxu0 0.0
        %374 = vmatprep.subr.mxu0 0.0
        %375 = vmatpush1.msra.mxu0 0.0
        %376 = vmatprep.subr.mxu0 0.0
        %377 = vmatpush1.msra.mxu0 0.0
        %378 = vmatprep.subr.mxu0 0.0
        %379 = vmatpush1.msra.mxu0 0.0
        %380 = vmatprep.subr.mxu0 0.0
        %381 = vmatpush1.msra.mxu0 0.0
        %382 = vmatprep.subr.mxu0 0.0
        %383 = vmatpush1.msra.mxu0 0.0
        %384 = vmatprep.subr.mxu0 0.0
        %385 = vmatpush1.msra.mxu0 0.0
        %386 = vmatprep.subr.mxu0 0.0
        %387 = vmatpush1.msra.mxu0 0.0
        %388 = vmatprep.subr.mxu0 0.0
        %389 = vmatpush1.msra.mxu0 0.0
        %390 = vmatprep.mubr.f32.mxu0 0.0
        %391 = vmatmul.mubr.f32.gmra.mrb[0].mxu0 %v231
        %v392 = vpop.f32.mrb[0].mxu0
        %v393 = vadd.f32 %v227, %v392
        %v394 = vpop.f32.mrb[0].mxu0
        %395 = vmatprep.mubr.f32.mxu0 0.0
        %396 = vmatmul.mubr.f32.gmra.mrb[0].mxu0 %v234
        %v397 = vpop.f32.mrb[0].mxu0
        %v398 = vadd.f32 %v227, %v397
        %v399 = vpop.f32.mrb[0].mxu0
        %400 = vmatprep.mubr.f32.mxu0 0.0
        %401 = vmatmul.mubr.f32.gmra.mrb[0].mxu0 %v237
        %v402 = vpop.f32.mrb[0].mxu0
        %v403 = vadd.f32 %v227, %v402
        %v404 = vpop.f32.mrb[0].mxu0
        %405 = vmatprep.mubr.f32.mxu0 0.0
        %406 = vmatmul.mubr.f32.gmra.mrb[0].mxu0 %v240
        %v407 = vpop.f32.mrb[0].mxu0
        %v408 = vadd.f32 %v227, %v407
        %v409 = vpop.f32.mrb[0].mxu0
        %410 = vmatprep.mubr.f32.mxu0 0.0
        %411 = vmatmul.mubr.f32.gmra.mrb[0].mxu0 %v243
        %v412 = vpop.f32.mrb[0].mxu0
        %v413 = vadd.f32 %v227, %v412
        %v414 = vpop.f32.mrb[0].mxu0
        %415 = vmatprep.mubr.f32.mxu0 0.0
        %416 = vmatmul.mubr.f32.gmra.mrb[0].mxu0 %v246
        %v417 = vpop.f32.mrb[0].mxu0
        %v418 = vadd.f32 %v227, %v417
        %v419 = vpop.f32.mrb[0].mxu0
        %420 = vmatprep.mubr.f32.mxu0 0.0
        %421 = vmatmul.mubr.f32.gmra.mrb[0].mxu0 %v249
        %v422 = vpop.f32.mrb[0].mxu0
        %v423 = vadd.f32 %v227, %v422
        %v424 = vpop.f32.mrb[0].mxu0
        %425 = vmatprep.mubr.f32.mxu0 0.0
        %426 = vmatmul.mubr.f32.gmra.mrb[0].mxu0 %v252
        %v427 = vpop.f32.mrb[0].mxu0
        %v428 = vadd.f32 %v227, %v427
        %v429 = vpop.f32.mrb[0].mxu0
        %430 = vmatprep.mubr.f32.mxu0 0.0
        %431 = vmatmul.mubr.f32.gmra.mrb[0].mxu0 %v255
        %v432 = vpop.f32.mrb[0].mxu0
        %v433 = vadd.f32 %v227, %v432
        %v434 = vpop.f32.mrb[0].mxu0
        %435 = vmatprep.mubr.f32.mxu0 0.0
        %436 = vmatmul.mubr.f32.gmra.mrb[0].mxu0 %v258
        %v437 = vpop.f32.mrb[0].mxu0
        %v438 = vadd.f32 %v227, %v437
        %v439 = vpop.f32.mrb[0].mxu0
        %440 = vmatprep.mubr.f32.mxu0 0.0
        %441 = vmatmul.mubr.f32.gmra.mrb[0].mxu0 %v261
        %v442 = vpop.f32.mrb[0].mxu0
        %v443 = vadd.f32 %v227, %v442
        %v444 = vpop.f32.mrb[0].mxu0
        %445 = vmatprep.mubr.f32.mxu0 0.0
        %446 = vmatmul.mubr.f32.gmra.mrb[0].mxu0 %v264
        %v447 = vpop.f32.mrb[0].mxu0
        %v448 = vadd.f32 %v227, %v447
        %v449 = vpop.f32.mrb[0].mxu0
        %450 = vmatprep.mubr.f32.mxu0 0.0
        %451 = vmatmul.mubr.f32.gmra.mrb[0].mxu0 %v267
        %v452 = vpop.f32.mrb[0].mxu0
        %v453 = vadd.f32 %v227, %v452
        %v454 = vpop.f32.mrb[0].mxu0
        %455 = vmatprep.mubr.f32.mxu0 0.0
        %456 = vmatmul.mubr.f32.gmra.mrb[0].mxu0 %v270
        %v457 = vpop.f32.mrb[0].mxu0
        %v458 = vadd.f32 %v227, %v457
        %v459 = vpop.f32.mrb[0].mxu0
        %460 = vmatprep.mubr.f32.mxu0 0.0
        %461 = vmatmul.mubr.f32.gmra.mrb[0].mxu0 %v273
        %v462 = vpop.f32.mrb[0].mxu0
        %v463 = vadd.f32 %v227, %v462
        %v464 = vpop.f32.mrb[0].mxu0
        %465 = vmatprep.mubr.f32.mxu0 0.0
        %466 = vmatmul.mubr.f32.gmra.mrb[0].mxu0 %v276
        %v467 = vpop.f32.mrb[0].mxu0
        %v468 = vadd.f32 %v227, %v467
        %v469 = vpop.f32.mrb[0].mxu0
        %470 = vmatprep.mubr.f32.mxu0 0.0
        %471 = vmatmul.mubr.f32.gmra.mrb[0].mxu0 %v279
        %v472 = vpop.f32.mrb[0].mxu0
        %v473 = vadd.f32 %v227, %v472
        %v474 = vpop.f32.mrb[0].mxu0
        %475 = vmatprep.mubr.f32.mxu0 0.0
        %476 = vmatmul.mubr.f32.gmra.mrb[0].mxu0 %v282
        %v477 = vpop.f32.mrb[0].mxu0
        %v478 = vadd.f32 %v227, %v477
        %v479 = vpop.f32.mrb[0].mxu0
        %480 = vmatprep.mubr.f32.mxu0 0.0
        %481 = vmatmul.mubr.f32.gmra.mrb[0].mxu0 %v285
        %v482 = vpop.f32.mrb[0].mxu0
        %v483 = vadd.f32 %v227, %v482
        %v484 = vpop.f32.mrb[0].mxu0
        %485 = vmatprep.mubr.f32.mxu0 0.0
        %486 = vmatmul.mubr.f32.gmra.mrb[0].mxu0 %v288
        %v487 = vpop.f32.mrb[0].mxu0
        %v488 = vadd.f32 %v227, %v487
        %v489 = vpop.f32.mrb[0].mxu0
        %490 = vmatprep.mubr.f32.mxu0 0.0
        %491 = vmatmul.mubr.f32.gmra.mrb[0].mxu0 %v291
        %v492 = vpop.f32.mrb[0].mxu0
        %v493 = vadd.f32 %v227, %v492
        %v494 = vpop.f32.mrb[0].mxu0
        %495 = vmatprep.mubr.f32.mxu0 0.0
        %496 = vmatmul.mubr.f32.gmra.mrb[0].mxu0 %v294
        %v497 = vpop.f32.mrb[0].mxu0
        %v498 = vadd.f32 %v227, %v497
        %v499 = vpop.f32.mrb[0].mxu0
        %500 = vmatprep.mubr.f32.mxu0 0.0
        %501 = vmatmul.mubr.f32.gmra.mrb[0].mxu0 %v297
        %v502 = vpop.f32.mrb[0].mxu0
        %v503 = vadd.f32 %v227, %v502
        %v504 = vpop.f32.mrb[0].mxu0
        %505 = vmatprep.mubr.f32.mxu0 0.0
        %506 = vmatmul.mubr.f32.gmra.mrb[0].mxu0 %v300
        %v507 = vpop.f32.mrb[0].mxu0
        %v508 = vadd.f32 %v227, %v507
        %v509 = vpop.f32.mrb[0].mxu0
        %510 = vmatprep.mubr.f32.mxu0 0.0
        %511 = vmatmul.mubr.f32.gmra.mrb[0].mxu0 %v303
        %v512 = vpop.f32.mrb[0].mxu0
        %v513 = vadd.f32 %v227, %v512
        %v514 = vpop.f32.mrb[0].mxu0
        %515 = vmatprep.mubr.f32.mxu0 0.0
        %516 = vmatmul.mubr.f32.gmra.mrb[0].mxu0 %v306
        %v517 = vpop.f32.mrb[0].mxu0
        %v518 = vadd.f32 %v227, %v517
        %v519 = vpop.f32.mrb[0].mxu0
        %520 = vmatprep.mubr.f32.mxu0 0.0
        %521 = vmatmul.mubr.f32.gmra.mrb[0].mxu0 %v309
        %v522 = vpop.f32.mrb[0].mxu0
        %v523 = vadd.f32 %v227, %v522
        %v524 = vpop.f32.mrb[0].mxu0
        %525 = vmatprep.mubr.f32.mxu0 0.0
        %526 = vmatmul.mubr.f32.gmra.mrb[0].mxu0 %v312
        %v527 = vpop.f32.mrb[0].mxu0
        %v528 = vadd.f32 %v227, %v527
        %v529 = vpop.f32.mrb[0].mxu0
        %530 = vmatprep.mubr.f32.mxu0 0.0
        %531 = vmatmul.mubr.f32.gmra.mrb[0].mxu0 %v315
        %v532 = vpop.f32.mrb[0].mxu0
        %v533 = vadd.f32 %v227, %v532
        %v534 = vpop.f32.mrb[0].mxu0
        %535 = vmatprep.mubr.f32.mxu0 0.0
        %536 = vmatmul.mubr.f32.gmra.mrb[0].mxu0 %v318
        %v537 = vpop.f32.mrb[0].mxu0
        %v538 = vadd.f32 %v227, %v537
        %v539 = vpop.f32.mrb[0].mxu0
        %540 = vmatprep.mubr.f32.mxu0 0.0
        %541 = vmatmul.mubr.f32.gmra.mrb[0].mxu0 %v321
        %v542 = vpop.f32.mrb[0].mxu0
        %v543 = vadd.f32 %v227, %v542
        %v544 = vpop.f32.mrb[0].mxu0
        %545 = vmatprep.mubr.f32.mxu0 0.0
        %546 = vmatmul.mubr.f32.gmra.mrb[0].mxu0 %v324
        %v547 = vpop.f32.mrb[0].mxu0
        %v548 = vadd.f32 %v227, %v547
        %v549 = vpop.f32.mrb[0].mxu0
        %550 = vdwg.mxu0
        %v551 = vand.u32 2147483647, %v393
        %vm552 = vcmp.le.f32.partialorder %v551, 0.7853982
        %vm553 = vcmp.lt.s32.totalorder %v393, 0
        %v554 = vand.u32 %v393, 2139095040
        %v555 = vshrl.u32 %v554, 23
        %v556 = vsub.s32 %v555, 127
        %v557 = vand.u32 2147483647, %v393
        %v558 = vand.u32 %v557, 8388607
        %v559 = vor.u32 %v558, 8388608
        %v560 = vsub.s32 0, %v559
        %v561 = vadd.s32 %v556, 1
        %vm562 = vcmp.gt.s32.totalorder %v561, 0
        %v563 = vsel %vm562, %v561, 0
        %v564 = vshrl.u32 %v563, 5
        %v565 = vand.u32 %v563, 31
        %v566 = vsub.s32 32, %v565
        %v567 = vshrl.u32 683565275, %v566
        %v568 = vshll.u32 683565275, %v565
        %v569 = vshrl.u32 2475754826, %v566
        %v570 = vor.u32 %v568, %v569
        %v571 = vshll.u32 2475754826, %v565
        %v572 = vshrl.u32 2131351028, %v566
        %v573 = vor.u32 %v571, %v572
        %v574 = vshll.u32 2131351028, %v565
        %v575 = vshrl.u32 2102212464, %v566
        %v576 = vor.u32 %v574, %v575
        %v577 = vshll.u32 2102212464, %v565
        %v578 = vshrl.u32 920167782, %v566
        %v579 = vor.u32 %v577, %v578
        %v580 = vshll.u32 920167782, %v565
        %v581 = vshrl.u32 1326507024, %v566
        %v582 = vor.u32 %v580, %v581
        %vm583 = vcmp.lt.s32.totalorder %v564, 1
        %vm584 = vcmp.lt.s32.totalorder %v564, 2
        %vm585 = vcmp.lt.s32.totalorder %v564, 3
        %vm586 = vcmp.lt.s32.totalorder %v564, 4
        %v587 = vsel %vm583, %v567, %v570
        %v588 = vsel %vm586, %v576, 2102212464
        %v589 = vsel %vm585, %v573, %v588
        %v590 = vsel %vm584, %v587, %v589
        %v591 = vsel %vm583, %v570, %v573
        %v592 = vsel %vm586, %v579, 920167782
        %v593 = vsel %vm585, %v576, %v592
        %v594 = vsel %vm584, %v591, %v593
        %v595 = vsel %vm583, %v573, %v576
        %v596 = vsel %vm586, %v582, 1326507024
        %v597 = vsel %vm585, %v579, %v596
        %v598 = vsel %vm584, %v595, %v597
        %v599 = vshll.u32 %v559, 8
        %v600 = vmul.u32.u64.compose %v599, %v598
        %v601 = vextract.low.u32 %v600
        %v602 = vextract.high.u32 %v600
        %v603 = vmul.u32.u64.compose %v599, %v594
        %v604 = vextract.low.u32 %v603
        %v605 = vextract.high.u32 %v603
        %v606 = vmul.u32 %v599, %v590
        %v607 = vadd.s32 %v602, %v604
        %vm608 = vc.u32 %v602, %v604
        %v609 = vadd.s32 %v605, 1
        %v610 = vsel %vm608, %v609, %v605
        %v611 = vadd.s32 %v606, %v610
        %v612 = vadd.s32 %v611, 536870912
        %v613 = vshrl.u32 %v612, 30
        %v614 = vshll.u32 %v613, 30
        %v615 = vsub.s32 %v611, %v614
        %vm616 = vcmp.lt.s32.totalorder %v615, 0
        %v617 = vsub.s32 0, %v615
        %v618 = vsel %vm616, %v617, %v615
        %v619 = vclz %v618
        %v620 = vsub.s32 %v619, 2
        %vm621 = vcmp.gt.s32.totalorder 0, %v620
        %v622 = vsel %vm621, 0, %v620
        %v623 = vsub.s32 32, %v622
        %v624 = vshll.u32 %v615, %v622
        %v625 = vshrl.u32 %v607, %v623
        %v626 = vor.u32 %v624, %v625
        %v627 = vsub.s32 4294967266, %v622
        %v628 = vadd.s32 %v627, 127
        %v629 = vshll.u32 %v628, 23
        %v630 = vor.u32 4788187, %v629
        %v631 = vand.u32 2147483647, %v630
        %v633 = vcvt.s32.f32 %v626
        %v634 = vmul.f32 %v633, %v631
        %v635 = vxor.u32 %v634, 2147483648
        %v636 = vsel %vm553, %v635, %v634
        %v637 = vsub.s32 4, %v613
        %v638 = vsel %vm553, %v637, %v613
        %v639 = vsel %vm552, %v393, %v636
        %v640 = vsel %vm552, 0, %v638
        %v641 = vcosq.f32.pop %v639
        %v642 = vsinq.f32.pop %v639
        %vm643 = vweird.f32 %v393
        %v644 = vadd.s32 %v640, 3
        %v645 = vand.u32 %v644, 3
        %vm646 = vcmp.lt.s32.totalorder %v645, 2
        %vm647 = vcmp.eq.s32.totalorder %v645, 0
        %v648 = vxor.u32 %v642, 2147483648
        %v649 = vsel %vm647, %v641, %v648
        %vm650 = vcmp.eq.s32.totalorder %v645, 2
        %v651 = vxor.u32 %v641, 2147483648
        %v652 = vsel %vm650, %v651, %v642
        %v653 = vsel %vm646, %v649, %v652
        %v654 = vsel %vm643, nan, %v653
        %v655 = vand.u32 2147483647, %v398
        %vm656 = vcmp.le.f32.partialorder %v655, 0.7853982
        %vm657 = vcmp.lt.s32.totalorder %v398, 0
        %v658 = vand.u32 %v398, 2139095040
        %v659 = vshrl.u32 %v658, 23
        %v660 = vsub.s32 %v659, 127
        %v661 = vand.u32 2147483647, %v398
        %v662 = vand.u32 %v661, 8388607
        %v663 = vor.u32 %v662, 8388608
        %v664 = vsub.s32 0, %v663
        %v665 = vadd.s32 %v660, 1
        %vm666 = vcmp.gt.s32.totalorder %v665, 0
        %v667 = vsel %vm666, %v665, 0
        %v668 = vshrl.u32 %v667, 5
        %v669 = vand.u32 %v667, 31
        %v670 = vsub.s32 32, %v669
        %v671 = vshrl.u32 683565275, %v670
        %v672 = vshll.u32 683565275, %v669
        %v673 = vshrl.u32 2475754826, %v670
        %v674 = vor.u32 %v672, %v673
        %v675 = vshll.u32 2475754826, %v669
        %v676 = vshrl.u32 2131351028, %v670
        %v677 = vor.u32 %v675, %v676
        %v678 = vshll.u32 2131351028, %v669
        %v679 = vshrl.u32 2102212464, %v670
        %v680 = vor.u32 %v678, %v679
        %v681 = vshll.u32 2102212464, %v669
        %v682 = vshrl.u32 920167782, %v670
        %v683 = vor.u32 %v681, %v682
        %v684 = vshll.u32 920167782, %v669
        %v685 = vshrl.u32 1326507024, %v670
        %v686 = vor.u32 %v684, %v685
        %vm687 = vcmp.lt.s32.totalorder %v668, 1
        %vm688 = vcmp.lt.s32.totalorder %v668, 2
        %vm689 = vcmp.lt.s32.totalorder %v668, 3
        %vm690 = vcmp.lt.s32.totalorder %v668, 4
        %v691 = vsel %vm687, %v671, %v674
        %v692 = vsel %vm690, %v680, 2102212464
        %v693 = vsel %vm689, %v677, %v692
        %v694 = vsel %vm688, %v691, %v693
        %v695 = vsel %vm687, %v674, %v677
        %v696 = vsel %vm690, %v683, 920167782
        %v697 = vsel %vm689, %v680, %v696
        %v698 = vsel %vm688, %v695, %v697
        %v699 = vsel %vm687, %v677, %v680
        %v700 = vsel %vm690, %v686, 1326507024
        %v701 = vsel %vm689, %v683, %v700
        %v702 = vsel %vm688, %v699, %v701
        %v703 = vshll.u32 %v663, 8
        %v704 = vmul.u32.u64.compose %v703, %v702
        %v705 = vextract.low.u32 %v704
        %v706 = vextract.high.u32 %v704
        %v707 = vmul.u32.u64.compose %v703, %v698
        %v708 = vextract.low.u32 %v707
        %v709 = vextract.high.u32 %v707
        %v710 = vmul.u32 %v703, %v694
        %v711 = vadd.s32 %v706, %v708
        %vm712 = vc.u32 %v706, %v708
        %v713 = vadd.s32 %v709, 1
        %v714 = vsel %vm712, %v713, %v709
        %v715 = vadd.s32 %v710, %v714
        %v716 = vadd.s32 %v715, 536870912
        %v717 = vshrl.u32 %v716, 30
        %v718 = vshll.u32 %v717, 30
        %v719 = vsub.s32 %v715, %v718
        %vm720 = vcmp.lt.s32.totalorder %v719, 0
        %v721 = vsub.s32 0, %v719
        %v722 = vsel %vm720, %v721, %v719
        %v723 = vclz %v722
        %v724 = vsub.s32 %v723, 2
        %vm725 = vcmp.gt.s32.totalorder 0, %v724
        %v726 = vsel %vm725, 0, %v724
        %v727 = vsub.s32 32, %v726
        %v728 = vshll.u32 %v719, %v726
        %v729 = vshrl.u32 %v711, %v727
        %v730 = vor.u32 %v728, %v729
        %v731 = vsub.s32 4294967266, %v726
        %v732 = vadd.s32 %v731, 127
        %v733 = vshll.u32 %v732, 23
        %v734 = vor.u32 4788187, %v733
        %v735 = vand.u32 2147483647, %v734
        %v737 = vcvt.s32.f32 %v730
        %v738 = vmul.f32 %v737, %v735
        %v739 = vxor.u32 %v738, 2147483648
        %v740 = vsel %vm657, %v739, %v738
        %v741 = vsub.s32 4, %v717
        %v742 = vsel %vm657, %v741, %v717
        %v743 = vsel %vm656, %v398, %v740
        %v744 = vsel %vm656, 0, %v742
        %v745 = vcosq.f32.pop %v743
        %v746 = vsinq.f32.pop %v743
        %vm747 = vweird.f32 %v398
        %v748 = vadd.s32 %v744, 3
        %v749 = vand.u32 %v748, 3
        %vm750 = vcmp.lt.s32.totalorder %v749, 2
        %vm751 = vcmp.eq.s32.totalorder %v749, 0
        %v752 = vxor.u32 %v746, 2147483648
        %v753 = vsel %vm751, %v745, %v752
        %vm754 = vcmp.eq.s32.totalorder %v749, 2
        %v755 = vxor.u32 %v745, 2147483648
        %v756 = vsel %vm754, %v755, %v746
        %v757 = vsel %vm750, %v753, %v756
        %v758 = vsel %vm747, nan, %v757
        %v759 = vand.u32 2147483647, %v403
        %vm760 = vcmp.le.f32.partialorder %v759, 0.7853982
        %vm761 = vcmp.lt.s32.totalorder %v403, 0
        %v762 = vand.u32 %v403, 2139095040
        %v763 = vshrl.u32 %v762, 23
        %v764 = vsub.s32 %v763, 127
        %v765 = vand.u32 2147483647, %v403
        %v766 = vand.u32 %v765, 8388607
        %v767 = vor.u32 %v766, 8388608
        %v768 = vsub.s32 0, %v767
        %v769 = vadd.s32 %v764, 1
        %vm770 = vcmp.gt.s32.totalorder %v769, 0
        %v771 = vsel %vm770, %v769, 0
        %v772 = vshrl.u32 %v771, 5
        %v773 = vand.u32 %v771, 31
        %v774 = vsub.s32 32, %v773
        %v775 = vshrl.u32 683565275, %v774
        %v776 = vshll.u32 683565275, %v773
        %v777 = vshrl.u32 2475754826, %v774
        %v778 = vor.u32 %v776, %v777
        %v779 = vshll.u32 2475754826, %v773
        %v780 = vshrl.u32 2131351028, %v774
        %v781 = vor.u32 %v779, %v780
        %v782 = vshll.u32 2131351028, %v773
        %v783 = vshrl.u32 2102212464, %v774
        %v784 = vor.u32 %v782, %v783
        %v785 = vshll.u32 2102212464, %v773
        %v786 = vshrl.u32 920167782, %v774
        %v787 = vor.u32 %v785, %v786
        %v788 = vshll.u32 920167782, %v773
        %v789 = vshrl.u32 1326507024, %v774
        %v790 = vor.u32 %v788, %v789
        %vm791 = vcmp.lt.s32.totalorder %v772, 1
        %vm792 = vcmp.lt.s32.totalorder %v772, 2
        %vm793 = vcmp.lt.s32.totalorder %v772, 3
        %vm794 = vcmp.lt.s32.totalorder %v772, 4
        %v795 = vsel %vm791, %v775, %v778
        %v796 = vsel %vm794, %v784, 2102212464
        %v797 = vsel %vm793, %v781, %v796
        %v798 = vsel %vm792, %v795, %v797
        %v799 = vsel %vm791, %v778, %v781
        %v800 = vsel %vm794, %v787, 920167782
        %v801 = vsel %vm793, %v784, %v800
        %v802 = vsel %vm792, %v799, %v801
        %v803 = vsel %vm791, %v781, %v784
        %v804 = vsel %vm794, %v790, 1326507024
        %v805 = vsel %vm793, %v787, %v804
        %v806 = vsel %vm792, %v803, %v805
        %v807 = vshll.u32 %v767, 8
        %v808 = vmul.u32.u64.compose %v807, %v806
        %v809 = vextract.low.u32 %v808
        %v810 = vextract.high.u32 %v808
        %v811 = vmul.u32.u64.compose %v807, %v802
        %v812 = vextract.low.u32 %v811
        %v813 = vextract.high.u32 %v811
        %v814 = vmul.u32 %v807, %v798
        %v815 = vadd.s32 %v810, %v812
        %vm816 = vc.u32 %v810, %v812
        %v817 = vadd.s32 %v813, 1
        %v818 = vsel %vm816, %v817, %v813
        %v819 = vadd.s32 %v814, %v818
        %v820 = vadd.s32 %v819, 536870912
        %v821 = vshrl.u32 %v820, 30
        %v822 = vshll.u32 %v821, 30
        %v823 = vsub.s32 %v819, %v822
        %vm824 = vcmp.lt.s32.totalorder %v823, 0
        %v825 = vsub.s32 0, %v823
        %v826 = vsel %vm824, %v825, %v823
        %v827 = vclz %v826
        %v828 = vsub.s32 %v827, 2
        %vm829 = vcmp.gt.s32.totalorder 0, %v828
        %v830 = vsel %vm829, 0, %v828
        %v831 = vsub.s32 32, %v830
        %v832 = vshll.u32 %v823, %v830
        %v833 = vshrl.u32 %v815, %v831
        %v834 = vor.u32 %v832, %v833
        %v835 = vsub.s32 4294967266, %v830
        %v836 = vadd.s32 %v835, 127
        %v837 = vshll.u32 %v836, 23
        %v838 = vor.u32 4788187, %v837
        %v839 = vand.u32 2147483647, %v838
        %v841 = vcvt.s32.f32 %v834
        %v842 = vmul.f32 %v841, %v839
        %v843 = vxor.u32 %v842, 2147483648
        %v844 = vsel %vm761, %v843, %v842
        %v845 = vsub.s32 4, %v821
        %v846 = vsel %vm761, %v845, %v821
        %v847 = vsel %vm760, %v403, %v844
        %v848 = vsel %vm760, 0, %v846
        %v849 = vcosq.f32.pop %v847
        %v850 = vsinq.f32.pop %v847
        %vm851 = vweird.f32 %v403
        %v852 = vadd.s32 %v848, 3
        %v853 = vand.u32 %v852, 3
        %vm854 = vcmp.lt.s32.totalorder %v853, 2
        %vm855 = vcmp.eq.s32.totalorder %v853, 0
        %v856 = vxor.u32 %v850, 2147483648
        %v857 = vsel %vm855, %v849, %v856
        %vm858 = vcmp.eq.s32.totalorder %v853, 2
        %v859 = vxor.u32 %v849, 2147483648
        %v860 = vsel %vm858, %v859, %v850
        %v861 = vsel %vm854, %v857, %v860
        %v862 = vsel %vm851, nan, %v861
        %v863 = vand.u32 2147483647, %v408
        %vm864 = vcmp.le.f32.partialorder %v863, 0.7853982
        %vm865 = vcmp.lt.s32.totalorder %v408, 0
        %v866 = vand.u32 %v408, 2139095040
        %v867 = vshrl.u32 %v866, 23
        %v868 = vsub.s32 %v867, 127
        %v869 = vand.u32 2147483647, %v408
        %v870 = vand.u32 %v869, 8388607
        %v871 = vor.u32 %v870, 8388608
        %v872 = vsub.s32 0, %v871
        %v873 = vadd.s32 %v868, 1
        %vm874 = vcmp.gt.s32.totalorder %v873, 0
        %v875 = vsel %vm874, %v873, 0
        %v876 = vshrl.u32 %v875, 5
        %v877 = vand.u32 %v875, 31
        %v878 = vsub.s32 32, %v877
        %v879 = vshrl.u32 683565275, %v878
        %v880 = vshll.u32 683565275, %v877
        %v881 = vshrl.u32 2475754826, %v878
        %v882 = vor.u32 %v880, %v881
        %v883 = vshll.u32 2475754826, %v877
        %v884 = vshrl.u32 2131351028, %v878
        %v885 = vor.u32 %v883, %v884
        %v886 = vshll.u32 2131351028, %v877
        %v887 = vshrl.u32 2102212464, %v878
        %v888 = vor.u32 %v886, %v887
        %v889 = vshll.u32 2102212464, %v877
        %v890 = vshrl.u32 920167782, %v878
        %v891 = vor.u32 %v889, %v890
        %v892 = vshll.u32 920167782, %v877
        %v893 = vshrl.u32 1326507024, %v878
        %v894 = vor.u32 %v892, %v893
        %vm895 = vcmp.lt.s32.totalorder %v876, 1
        %vm896 = vcmp.lt.s32.totalorder %v876, 2
        %vm897 = vcmp.lt.s32.totalorder %v876, 3
        %vm898 = vcmp.lt.s32.totalorder %v876, 4
        %v899 = vsel %vm895, %v879, %v882
        %v900 = vsel %vm898, %v888, 2102212464
        %v901 = vsel %vm897, %v885, %v900
        %v902 = vsel %vm896, %v899, %v901
        %v903 = vsel %vm895, %v882, %v885
        %v904 = vsel %vm898, %v891, 920167782
        %v905 = vsel %vm897, %v888, %v904
        %v906 = vsel %vm896, %v903, %v905
        %v907 = vsel %vm895, %v885, %v888
        %v908 = vsel %vm898, %v894, 1326507024
        %v909 = vsel %vm897, %v891, %v908
        %v910 = vsel %vm896, %v907, %v909
        %v911 = vshll.u32 %v871, 8
        %v912 = vmul.u32.u64.compose %v911, %v910
        %v913 = vextract.low.u32 %v912
        %v914 = vextract.high.u32 %v912
        %v915 = vmul.u32.u64.compose %v911, %v906
        %v916 = vextract.low.u32 %v915
        %v917 = vextract.high.u32 %v915
        %v918 = vmul.u32 %v911, %v902
        %v919 = vadd.s32 %v914, %v916
        %vm920 = vc.u32 %v914, %v916
        %v921 = vadd.s32 %v917, 1
        %v922 = vsel %vm920, %v921, %v917
        %v923 = vadd.s32 %v918, %v922
        %v924 = vadd.s32 %v923, 536870912
        %v925 = vshrl.u32 %v924, 30
        %v926 = vshll.u32 %v925, 30
        %v927 = vsub.s32 %v923, %v926
        %vm928 = vcmp.lt.s32.totalorder %v927, 0
        %v929 = vsub.s32 0, %v927
        %v930 = vsel %vm928, %v929, %v927
        %v931 = vclz %v930
        %v932 = vsub.s32 %v931, 2
        %vm933 = vcmp.gt.s32.totalorder 0, %v932
        %v934 = vsel %vm933, 0, %v932
        %v935 = vsub.s32 32, %v934
        %v936 = vshll.u32 %v927, %v934
        %v937 = vshrl.u32 %v919, %v935
        %v938 = vor.u32 %v936, %v937
        %v939 = vsub.s32 4294967266, %v934
        %v940 = vadd.s32 %v939, 127
        %v941 = vshll.u32 %v940, 23
        %v942 = vor.u32 4788187, %v941
        %v943 = vand.u32 2147483647, %v942
        %v945 = vcvt.s32.f32 %v938
        %v946 = vmul.f32 %v945, %v943
        %v947 = vxor.u32 %v946, 2147483648
        %v948 = vsel %vm865, %v947, %v946
        %v949 = vsub.s32 4, %v925
        %v950 = vsel %vm865, %v949, %v925
        %v951 = vsel %vm864, %v408, %v948
        %v952 = vsel %vm864, 0, %v950
        %v953 = vcosq.f32.pop %v951
        %v954 = vsinq.f32.pop %v951
        %vm955 = vweird.f32 %v408
        %v956 = vadd.s32 %v952, 3
        %v957 = vand.u32 %v956, 3
        %vm958 = vcmp.lt.s32.totalorder %v957, 2
        %vm959 = vcmp.eq.s32.totalorder %v957, 0
        %v960 = vxor.u32 %v954, 2147483648
        %v961 = vsel %vm959, %v953, %v960
        %vm962 = vcmp.eq.s32.totalorder %v957, 2
        %v963 = vxor.u32 %v953, 2147483648
        %v964 = vsel %vm962, %v963, %v954
        %v965 = vsel %vm958, %v961, %v964
        %v966 = vsel %vm955, nan, %v965
        %v967 = vand.u32 2147483647, %v413
        %vm968 = vcmp.le.f32.partialorder %v967, 0.7853982
        %vm969 = vcmp.lt.s32.totalorder %v413, 0
        %v970 = vand.u32 %v413, 2139095040
        %v971 = vshrl.u32 %v970, 23
        %v972 = vsub.s32 %v971, 127
        %v973 = vand.u32 2147483647, %v413
        %v974 = vand.u32 %v973, 8388607
        %v975 = vor.u32 %v974, 8388608
        %v976 = vsub.s32 0, %v975
        %v977 = vadd.s32 %v972, 1
        %vm978 = vcmp.gt.s32.totalorder %v977, 0
        %v979 = vsel %vm978, %v977, 0
        %v980 = vshrl.u32 %v979, 5
        %v981 = vand.u32 %v979, 31
        %v982 = vsub.s32 32, %v981
        %v983 = vshrl.u32 683565275, %v982
        %v984 = vshll.u32 683565275, %v981
        %v985 = vshrl.u32 2475754826, %v982
        %v986 = vor.u32 %v984, %v985
        %v987 = vshll.u32 2475754826, %v981
        %v988 = vshrl.u32 2131351028, %v982
        %v989 = vor.u32 %v987, %v988
        %v990 = vshll.u32 2131351028, %v981
        %v991 = vshrl.u32 2102212464, %v982
        %v992 = vor.u32 %v990, %v991
        %v993 = vshll.u32 2102212464, %v981
        %v994 = vshrl.u32 920167782, %v982
        %v995 = vor.u32 %v993, %v994
        %v996 = vshll.u32 920167782, %v981
        %v997 = vshrl.u32 1326507024, %v982
        %v998 = vor.u32 %v996, %v997
        %vm999 = vcmp.lt.s32.totalorder %v980, 1
        %vm1000 = vcmp.lt.s32.totalorder %v980, 2
        %vm1001 = vcmp.lt.s32.totalorder %v980, 3
        %vm1002 = vcmp.lt.s32.totalorder %v980, 4
        %v1003 = vsel %vm999, %v983, %v986
        %v1004 = vsel %vm1002, %v992, 2102212464
        %v1005 = vsel %vm1001, %v989, %v1004
        %v1006 = vsel %vm1000, %v1003, %v1005
        %v1007 = vsel %vm999, %v986, %v989
        %v1008 = vsel %vm1002, %v995, 920167782
        %v1009 = vsel %vm1001, %v992, %v1008
        %v1010 = vsel %vm1000, %v1007, %v1009
        %v1011 = vsel %vm999, %v989, %v992
        %v1012 = vsel %vm1002, %v998, 1326507024
        %v1013 = vsel %vm1001, %v995, %v1012
        %v1014 = vsel %vm1000, %v1011, %v1013
        %v1015 = vshll.u32 %v975, 8
        %v1016 = vmul.u32.u64.compose %v1015, %v1014
        %v1017 = vextract.low.u32 %v1016
        %v1018 = vextract.high.u32 %v1016
        %v1019 = vmul.u32.u64.compose %v1015, %v1010
        %v1020 = vextract.low.u32 %v1019
        %v1021 = vextract.high.u32 %v1019
        %v1022 = vmul.u32 %v1015, %v1006
        %v1023 = vadd.s32 %v1018, %v1020
        %vm1024 = vc.u32 %v1018, %v1020
        %v1025 = vadd.s32 %v1021, 1
        %v1026 = vsel %vm1024, %v1025, %v1021
        %v1027 = vadd.s32 %v1022, %v1026
        %v1028 = vadd.s32 %v1027, 536870912
        %v1029 = vshrl.u32 %v1028, 30
        %v1030 = vshll.u32 %v1029, 30
        %v1031 = vsub.s32 %v1027, %v1030
        %vm1032 = vcmp.lt.s32.totalorder %v1031, 0
        %v1033 = vsub.s32 0, %v1031
        %v1034 = vsel %vm1032, %v1033, %v1031
        %v1035 = vclz %v1034
        %v1036 = vsub.s32 %v1035, 2
        %vm1037 = vcmp.gt.s32.totalorder 0, %v1036
        %v1038 = vsel %vm1037, 0, %v1036
        %v1039 = vsub.s32 32, %v1038
        %v1040 = vshll.u32 %v1031, %v1038
        %v1041 = vshrl.u32 %v1023, %v1039
        %v1042 = vor.u32 %v1040, %v1041
        %v1043 = vsub.s32 4294967266, %v1038
        %v1044 = vadd.s32 %v1043, 127
        %v1045 = vshll.u32 %v1044, 23
        %v1046 = vor.u32 4788187, %v1045
        %v1047 = vand.u32 2147483647, %v1046
        %v1049 = vcvt.s32.f32 %v1042
        %v1050 = vmul.f32 %v1049, %v1047
        %v1051 = vxor.u32 %v1050, 2147483648
        %v1052 = vsel %vm969, %v1051, %v1050
        %v1053 = vsub.s32 4, %v1029
        %v1054 = vsel %vm969, %v1053, %v1029
        %v1055 = vsel %vm968, %v413, %v1052
        %v1056 = vsel %vm968, 0, %v1054
        %v1057 = vcosq.f32.pop %v1055
        %v1058 = vsinq.f32.pop %v1055
        %vm1059 = vweird.f32 %v413
        %v1060 = vadd.s32 %v1056, 3
        %v1061 = vand.u32 %v1060, 3
        %vm1062 = vcmp.lt.s32.totalorder %v1061, 2
        %vm1063 = vcmp.eq.s32.totalorder %v1061, 0
        %v1064 = vxor.u32 %v1058, 2147483648
        %v1065 = vsel %vm1063, %v1057, %v1064
        %vm1066 = vcmp.eq.s32.totalorder %v1061, 2
        %v1067 = vxor.u32 %v1057, 2147483648
        %v1068 = vsel %vm1066, %v1067, %v1058
        %v1069 = vsel %vm1062, %v1065, %v1068
        %v1070 = vsel %vm1059, nan, %v1069
        %v1071 = vand.u32 2147483647, %v418
        %vm1072 = vcmp.le.f32.partialorder %v1071, 0.7853982
        %vm1073 = vcmp.lt.s32.totalorder %v418, 0
        %v1074 = vand.u32 %v418, 2139095040
        %v1075 = vshrl.u32 %v1074, 23
        %v1076 = vsub.s32 %v1075, 127
        %v1077 = vand.u32 2147483647, %v418
        %v1078 = vand.u32 %v1077, 8388607
        %v1079 = vor.u32 %v1078, 8388608
        %v1080 = vsub.s32 0, %v1079
        %v1081 = vadd.s32 %v1076, 1
        %vm1082 = vcmp.gt.s32.totalorder %v1081, 0
        %v1083 = vsel %vm1082, %v1081, 0
        %v1084 = vshrl.u32 %v1083, 5
        %v1085 = vand.u32 %v1083, 31
        %v1086 = vsub.s32 32, %v1085
        %v1087 = vshrl.u32 683565275, %v1086
        %v1088 = vshll.u32 683565275, %v1085
        %v1089 = vshrl.u32 2475754826, %v1086
        %v1090 = vor.u32 %v1088, %v1089
        %v1091 = vshll.u32 2475754826, %v1085
        %v1092 = vshrl.u32 2131351028, %v1086
        %v1093 = vor.u32 %v1091, %v1092
        %v1094 = vshll.u32 2131351028, %v1085
        %v1095 = vshrl.u32 2102212464, %v1086
        %v1096 = vor.u32 %v1094, %v1095
        %v1097 = vshll.u32 2102212464, %v1085
        %v1098 = vshrl.u32 920167782, %v1086
        %v1099 = vor.u32 %v1097, %v1098
        %v1100 = vshll.u32 920167782, %v1085
        %v1101 = vshrl.u32 1326507024, %v1086
        %v1102 = vor.u32 %v1100, %v1101
        %vm1103 = vcmp.lt.s32.totalorder %v1084, 1
        %vm1104 = vcmp.lt.s32.totalorder %v1084, 2
        %vm1105 = vcmp.lt.s32.totalorder %v1084, 3
        %vm1106 = vcmp.lt.s32.totalorder %v1084, 4
        %v1107 = vsel %vm1103, %v1087, %v1090
        %v1108 = vsel %vm1106, %v1096, 2102212464
        %v1109 = vsel %vm1105, %v1093, %v1108
        %v1110 = vsel %vm1104, %v1107, %v1109
        %v1111 = vsel %vm1103, %v1090, %v1093
        %v1112 = vsel %vm1106, %v1099, 920167782
        %v1113 = vsel %vm1105, %v1096, %v1112
        %v1114 = vsel %vm1104, %v1111, %v1113
        %v1115 = vsel %vm1103, %v1093, %v1096
        %v1116 = vsel %vm1106, %v1102, 1326507024
        %v1117 = vsel %vm1105, %v1099, %v1116
        %v1118 = vsel %vm1104, %v1115, %v1117
        %v1119 = vshll.u32 %v1079, 8
        %v1120 = vmul.u32.u64.compose %v1119, %v1118
        %v1121 = vextract.low.u32 %v1120
        %v1122 = vextract.high.u32 %v1120
        %v1123 = vmul.u32.u64.compose %v1119, %v1114
        %v1124 = vextract.low.u32 %v1123
        %v1125 = vextract.high.u32 %v1123
        %v1126 = vmul.u32 %v1119, %v1110
        %v1127 = vadd.s32 %v1122, %v1124
        %vm1128 = vc.u32 %v1122, %v1124
        %v1129 = vadd.s32 %v1125, 1
        %v1130 = vsel %vm1128, %v1129, %v1125
        %v1131 = vadd.s32 %v1126, %v1130
        %v1132 = vadd.s32 %v1131, 536870912
        %v1133 = vshrl.u32 %v1132, 30
        %v1134 = vshll.u32 %v1133, 30
        %v1135 = vsub.s32 %v1131, %v1134
        %vm1136 = vcmp.lt.s32.totalorder %v1135, 0
        %v1137 = vsub.s32 0, %v1135
        %v1138 = vsel %vm1136, %v1137, %v1135
        %v1139 = vclz %v1138
        %v1140 = vsub.s32 %v1139, 2
        %vm1141 = vcmp.gt.s32.totalorder 0, %v1140
        %v1142 = vsel %vm1141, 0, %v1140
        %v1143 = vsub.s32 32, %v1142
        %v1144 = vshll.u32 %v1135, %v1142
        %v1145 = vshrl.u32 %v1127, %v1143
        %v1146 = vor.u32 %v1144, %v1145
        %v1147 = vsub.s32 4294967266, %v1142
        %v1148 = vadd.s32 %v1147, 127
        %v1149 = vshll.u32 %v1148, 23
        %v1150 = vor.u32 4788187, %v1149
        %v1151 = vand.u32 2147483647, %v1150
        %v1153 = vcvt.s32.f32 %v1146
        %v1154 = vmul.f32 %v1153, %v1151
        %v1155 = vxor.u32 %v1154, 2147483648
        %v1156 = vsel %vm1073, %v1155, %v1154
        %v1157 = vsub.s32 4, %v1133
        %v1158 = vsel %vm1073, %v1157, %v1133
        %v1159 = vsel %vm1072, %v418, %v1156
        %v1160 = vsel %vm1072, 0, %v1158
        %v1161 = vcosq.f32.pop %v1159
        %v1162 = vsinq.f32.pop %v1159
        %vm1163 = vweird.f32 %v418
        %v1164 = vadd.s32 %v1160, 3
        %v1165 = vand.u32 %v1164, 3
        %vm1166 = vcmp.lt.s32.totalorder %v1165, 2
        %vm1167 = vcmp.eq.s32.totalorder %v1165, 0
        %v1168 = vxor.u32 %v1162, 2147483648
        %v1169 = vsel %vm1167, %v1161, %v1168
        %vm1170 = vcmp.eq.s32.totalorder %v1165, 2
        %v1171 = vxor.u32 %v1161, 2147483648
        %v1172 = vsel %vm1170, %v1171, %v1162
        %v1173 = vsel %vm1166, %v1169, %v1172
        %v1174 = vsel %vm1163, nan, %v1173
        %v1175 = vand.u32 2147483647, %v423
        %vm1176 = vcmp.le.f32.partialorder %v1175, 0.7853982
        %vm1177 = vcmp.lt.s32.totalorder %v423, 0
        %v1178 = vand.u32 %v423, 2139095040
        %v1179 = vshrl.u32 %v1178, 23
        %v1180 = vsub.s32 %v1179, 127
        %v1181 = vand.u32 2147483647, %v423
        %v1182 = vand.u32 %v1181, 8388607
        %v1183 = vor.u32 %v1182, 8388608
        %v1184 = vsub.s32 0, %v1183
        %v1185 = vadd.s32 %v1180, 1
        %vm1186 = vcmp.gt.s32.totalorder %v1185, 0
        %v1187 = vsel %vm1186, %v1185, 0
        %v1188 = vshrl.u32 %v1187, 5
        %v1189 = vand.u32 %v1187, 31
        %v1190 = vsub.s32 32, %v1189
        %v1191 = vshrl.u32 683565275, %v1190
        %v1192 = vshll.u32 683565275, %v1189
        %v1193 = vshrl.u32 2475754826, %v1190
        %v1194 = vor.u32 %v1192, %v1193
        %v1195 = vshll.u32 2475754826, %v1189
        %v1196 = vshrl.u32 2131351028, %v1190
        %v1197 = vor.u32 %v1195, %v1196
        %v1198 = vshll.u32 2131351028, %v1189
        %v1199 = vshrl.u32 2102212464, %v1190
        %v1200 = vor.u32 %v1198, %v1199
        %v1201 = vshll.u32 2102212464, %v1189
        %v1202 = vshrl.u32 920167782, %v1190
        %v1203 = vor.u32 %v1201, %v1202
        %v1204 = vshll.u32 920167782, %v1189
        %v1205 = vshrl.u32 1326507024, %v1190
        %v1206 = vor.u32 %v1204, %v1205
        %vm1207 = vcmp.lt.s32.totalorder %v1188, 1
        %vm1208 = vcmp.lt.s32.totalorder %v1188, 2
        %vm1209 = vcmp.lt.s32.totalorder %v1188, 3
        %vm1210 = vcmp.lt.s32.totalorder %v1188, 4
        %v1211 = vsel %vm1207, %v1191, %v1194
        %v1212 = vsel %vm1210, %v1200, 2102212464
        %v1213 = vsel %vm1209, %v1197, %v1212
        %v1214 = vsel %vm1208, %v1211, %v1213
        %v1215 = vsel %vm1207, %v1194, %v1197
        %v1216 = vsel %vm1210, %v1203, 920167782
        %v1217 = vsel %vm1209, %v1200, %v1216
        %v1218 = vsel %vm1208, %v1215, %v1217
        %v1219 = vsel %vm1207, %v1197, %v1200
        %v1220 = vsel %vm1210, %v1206, 1326507024
        %v1221 = vsel %vm1209, %v1203, %v1220
        %v1222 = vsel %vm1208, %v1219, %v1221
        %v1223 = vshll.u32 %v1183, 8
        %v1224 = vmul.u32.u64.compose %v1223, %v1222
        %v1225 = vextract.low.u32 %v1224
        %v1226 = vextract.high.u32 %v1224
        %v1227 = vmul.u32.u64.compose %v1223, %v1218
        %v1228 = vextract.low.u32 %v1227
        %v1229 = vextract.high.u32 %v1227
        %v1230 = vmul.u32 %v1223, %v1214
        %v1231 = vadd.s32 %v1226, %v1228
        %vm1232 = vc.u32 %v1226, %v1228
        %v1233 = vadd.s32 %v1229, 1
        %v1234 = vsel %vm1232, %v1233, %v1229
        %v1235 = vadd.s32 %v1230, %v1234
        %v1236 = vadd.s32 %v1235, 536870912
        %v1237 = vshrl.u32 %v1236, 30
        %v1238 = vshll.u32 %v1237, 30
        %v1239 = vsub.s32 %v1235, %v1238
        %vm1240 = vcmp.lt.s32.totalorder %v1239, 0
        %v1241 = vsub.s32 0, %v1239
        %v1242 = vsel %vm1240, %v1241, %v1239
        %v1243 = vclz %v1242
        %v1244 = vsub.s32 %v1243, 2
        %vm1245 = vcmp.gt.s32.totalorder 0, %v1244
        %v1246 = vsel %vm1245, 0, %v1244
        %v1247 = vsub.s32 32, %v1246
        %v1248 = vshll.u32 %v1239, %v1246
        %v1249 = vshrl.u32 %v1231, %v1247
        %v1250 = vor.u32 %v1248, %v1249
        %v1251 = vsub.s32 4294967266, %v1246
        %v1252 = vadd.s32 %v1251, 127
        %v1253 = vshll.u32 %v1252, 23
        %v1254 = vor.u32 4788187, %v1253
        %v1255 = vand.u32 2147483647, %v1254
        %v1257 = vcvt.s32.f32 %v1250
        %v1258 = vmul.f32 %v1257, %v1255
        %v1259 = vxor.u32 %v1258, 2147483648
        %v1260 = vsel %vm1177, %v1259, %v1258
        %v1261 = vsub.s32 4, %v1237
        %v1262 = vsel %vm1177, %v1261, %v1237
        %v1263 = vsel %vm1176, %v423, %v1260
        %v1264 = vsel %vm1176, 0, %v1262
        %v1265 = vcosq.f32.pop %v1263
        %v1266 = vsinq.f32.pop %v1263
        %vm1267 = vweird.f32 %v423
        %v1268 = vadd.s32 %v1264, 3
        %v1269 = vand.u32 %v1268, 3
        %vm1270 = vcmp.lt.s32.totalorder %v1269, 2
        %vm1271 = vcmp.eq.s32.totalorder %v1269, 0
        %v1272 = vxor.u32 %v1266, 2147483648
        %v1273 = vsel %vm1271, %v1265, %v1272
        %vm1274 = vcmp.eq.s32.totalorder %v1269, 2
        %v1275 = vxor.u32 %v1265, 2147483648
        %v1276 = vsel %vm1274, %v1275, %v1266
        %v1277 = vsel %vm1270, %v1273, %v1276
        %v1278 = vsel %vm1267, nan, %v1277
        %v1279 = vand.u32 2147483647, %v428
        %vm1280 = vcmp.le.f32.partialorder %v1279, 0.7853982
        %vm1281 = vcmp.lt.s32.totalorder %v428, 0
        %v1282 = vand.u32 %v428, 2139095040
        %v1283 = vshrl.u32 %v1282, 23
        %v1284 = vsub.s32 %v1283, 127
        %v1285 = vand.u32 2147483647, %v428
        %v1286 = vand.u32 %v1285, 8388607
        %v1287 = vor.u32 %v1286, 8388608
        %v1288 = vsub.s32 0, %v1287
        %v1289 = vadd.s32 %v1284, 1
        %vm1290 = vcmp.gt.s32.totalorder %v1289, 0
        %v1291 = vsel %vm1290, %v1289, 0
        %v1292 = vshrl.u32 %v1291, 5
        %v1293 = vand.u32 %v1291, 31
        %v1294 = vsub.s32 32, %v1293
        %v1295 = vshrl.u32 683565275, %v1294
        %v1296 = vshll.u32 683565275, %v1293
        %v1297 = vshrl.u32 2475754826, %v1294
        %v1298 = vor.u32 %v1296, %v1297
        %v1299 = vshll.u32 2475754826, %v1293
        %v1300 = vshrl.u32 2131351028, %v1294
        %v1301 = vor.u32 %v1299, %v1300
        %v1302 = vshll.u32 2131351028, %v1293
        %v1303 = vshrl.u32 2102212464, %v1294
        %v1304 = vor.u32 %v1302, %v1303
        %v1305 = vshll.u32 2102212464, %v1293
        %v1306 = vshrl.u32 920167782, %v1294
        %v1307 = vor.u32 %v1305, %v1306
        %v1308 = vshll.u32 920167782, %v1293
        %v1309 = vshrl.u32 1326507024, %v1294
        %v1310 = vor.u32 %v1308, %v1309
        %vm1311 = vcmp.lt.s32.totalorder %v1292, 1
        %vm1312 = vcmp.lt.s32.totalorder %v1292, 2
        %vm1313 = vcmp.lt.s32.totalorder %v1292, 3
        %vm1314 = vcmp.lt.s32.totalorder %v1292, 4
        %v1315 = vsel %vm1311, %v1295, %v1298
        %v1316 = vsel %vm1314, %v1304, 2102212464
        %v1317 = vsel %vm1313, %v1301, %v1316
        %v1318 = vsel %vm1312, %v1315, %v1317
        %v1319 = vsel %vm1311, %v1298, %v1301
        %v1320 = vsel %vm1314, %v1307, 920167782
        %v1321 = vsel %vm1313, %v1304, %v1320
        %v1322 = vsel %vm1312, %v1319, %v1321
        %v1323 = vsel %vm1311, %v1301, %v1304
        %v1324 = vsel %vm1314, %v1310, 1326507024
        %v1325 = vsel %vm1313, %v1307, %v1324
        %v1326 = vsel %vm1312, %v1323, %v1325
        %v1327 = vshll.u32 %v1287, 8
        %v1328 = vmul.u32.u64.compose %v1327, %v1326
        %v1329 = vextract.low.u32 %v1328
        %v1330 = vextract.high.u32 %v1328
        %v1331 = vmul.u32.u64.compose %v1327, %v1322
        %v1332 = vextract.low.u32 %v1331
        %v1333 = vextract.high.u32 %v1331
        %v1334 = vmul.u32 %v1327, %v1318
        %v1335 = vadd.s32 %v1330, %v1332
        %vm1336 = vc.u32 %v1330, %v1332
        %v1337 = vadd.s32 %v1333, 1
        %v1338 = vsel %vm1336, %v1337, %v1333
        %v1339 = vadd.s32 %v1334, %v1338
        %v1340 = vadd.s32 %v1339, 536870912
        %v1341 = vshrl.u32 %v1340, 30
        %v1342 = vshll.u32 %v1341, 30
        %v1343 = vsub.s32 %v1339, %v1342
        %vm1344 = vcmp.lt.s32.totalorder %v1343, 0
        %v1345 = vsub.s32 0, %v1343
        %v1346 = vsel %vm1344, %v1345, %v1343
        %v1347 = vclz %v1346
        %v1348 = vsub.s32 %v1347, 2
        %vm1349 = vcmp.gt.s32.totalorder 0, %v1348
        %v1350 = vsel %vm1349, 0, %v1348
        %v1351 = vsub.s32 32, %v1350
        %v1352 = vshll.u32 %v1343, %v1350
        %v1353 = vshrl.u32 %v1335, %v1351
        %v1354 = vor.u32 %v1352, %v1353
        %v1355 = vsub.s32 4294967266, %v1350
        %v1356 = vadd.s32 %v1355, 127
        %v1357 = vshll.u32 %v1356, 23
        %v1358 = vor.u32 4788187, %v1357
        %v1359 = vand.u32 2147483647, %v1358
        %v1361 = vcvt.s32.f32 %v1354
        %v1362 = vmul.f32 %v1361, %v1359
        %v1363 = vxor.u32 %v1362, 2147483648
        %v1364 = vsel %vm1281, %v1363, %v1362
        %v1365 = vsub.s32 4, %v1341
        %v1366 = vsel %vm1281, %v1365, %v1341
        %v1367 = vsel %vm1280, %v428, %v1364
        %v1368 = vsel %vm1280, 0, %v1366
        %v1369 = vcosq.f32.pop %v1367
        %v1370 = vsinq.f32.pop %v1367
        %vm1371 = vweird.f32 %v428
        %v1372 = vadd.s32 %v1368, 3
        %v1373 = vand.u32 %v1372, 3
        %vm1374 = vcmp.lt.s32.totalorder %v1373, 2
        %vm1375 = vcmp.eq.s32.totalorder %v1373, 0
        %v1376 = vxor.u32 %v1370, 2147483648
        %v1377 = vsel %vm1375, %v1369, %v1376
        %vm1378 = vcmp.eq.s32.totalorder %v1373, 2
        %v1379 = vxor.u32 %v1369, 2147483648
        %v1380 = vsel %vm1378, %v1379, %v1370
        %v1381 = vsel %vm1374, %v1377, %v1380
        %v1382 = vsel %vm1371, nan, %v1381
        %v1383 = vand.u32 2147483647, %v433
        %vm1384 = vcmp.le.f32.partialorder %v1383, 0.7853982
        %vm1385 = vcmp.lt.s32.totalorder %v433, 0
        %v1386 = vand.u32 %v433, 2139095040
        %v1387 = vshrl.u32 %v1386, 23
        %v1388 = vsub.s32 %v1387, 127
        %v1389 = vand.u32 2147483647, %v433
        %v1390 = vand.u32 %v1389, 8388607
        %v1391 = vor.u32 %v1390, 8388608
        %v1392 = vsub.s32 0, %v1391
        %v1393 = vadd.s32 %v1388, 1
        %vm1394 = vcmp.gt.s32.totalorder %v1393, 0
        %v1395 = vsel %vm1394, %v1393, 0
        %v1396 = vshrl.u32 %v1395, 5
        %v1397 = vand.u32 %v1395, 31
        %v1398 = vsub.s32 32, %v1397
        %v1399 = vshrl.u32 683565275, %v1398
        %v1400 = vshll.u32 683565275, %v1397
        %v1401 = vshrl.u32 2475754826, %v1398
        %v1402 = vor.u32 %v1400, %v1401
        %v1403 = vshll.u32 2475754826, %v1397
        %v1404 = vshrl.u32 2131351028, %v1398
        %v1405 = vor.u32 %v1403, %v1404
        %v1406 = vshll.u32 2131351028, %v1397
        %v1407 = vshrl.u32 2102212464, %v1398
        %v1408 = vor.u32 %v1406, %v1407
        %v1409 = vshll.u32 2102212464, %v1397
        %v1410 = vshrl.u32 920167782, %v1398
        %v1411 = vor.u32 %v1409, %v1410
        %v1412 = vshll.u32 920167782, %v1397
        %v1413 = vshrl.u32 1326507024, %v1398
        %v1414 = vor.u32 %v1412, %v1413
        %vm1415 = vcmp.lt.s32.totalorder %v1396, 1
        %vm1416 = vcmp.lt.s32.totalorder %v1396, 2
        %vm1417 = vcmp.lt.s32.totalorder %v1396, 3
        %vm1418 = vcmp.lt.s32.totalorder %v1396, 4
        %v1419 = vsel %vm1415, %v1399, %v1402
        %v1420 = vsel %vm1418, %v1408, 2102212464
        %v1421 = vsel %vm1417, %v1405, %v1420
        %v1422 = vsel %vm1416, %v1419, %v1421
        %v1423 = vsel %vm1415, %v1402, %v1405
        %v1424 = vsel %vm1418, %v1411, 920167782
        %v1425 = vsel %vm1417, %v1408, %v1424
        %v1426 = vsel %vm1416, %v1423, %v1425
        %v1427 = vsel %vm1415, %v1405, %v1408
        %v1428 = vsel %vm1418, %v1414, 1326507024
        %v1429 = vsel %vm1417, %v1411, %v1428
        %v1430 = vsel %vm1416, %v1427, %v1429
        %v1431 = vshll.u32 %v1391, 8
        %v1432 = vmul.u32.u64.compose %v1431, %v1430
        %v1433 = vextract.low.u32 %v1432
        %v1434 = vextract.high.u32 %v1432
        %v1435 = vmul.u32.u64.compose %v1431, %v1426
        %v1436 = vextract.low.u32 %v1435
        %v1437 = vextract.high.u32 %v1435
        %v1438 = vmul.u32 %v1431, %v1422
        %v1439 = vadd.s32 %v1434, %v1436
        %vm1440 = vc.u32 %v1434, %v1436
        %v1441 = vadd.s32 %v1437, 1
        %v1442 = vsel %vm1440, %v1441, %v1437
        %v1443 = vadd.s32 %v1438, %v1442
        %v1444 = vadd.s32 %v1443, 536870912
        %v1445 = vshrl.u32 %v1444, 30
        %v1446 = vshll.u32 %v1445, 30
        %v1447 = vsub.s32 %v1443, %v1446
        %vm1448 = vcmp.lt.s32.totalorder %v1447, 0
        %v1449 = vsub.s32 0, %v1447
        %v1450 = vsel %vm1448, %v1449, %v1447
        %v1451 = vclz %v1450
        %v1452 = vsub.s32 %v1451, 2
        %vm1453 = vcmp.gt.s32.totalorder 0, %v1452
        %v1454 = vsel %vm1453, 0, %v1452
        %v1455 = vsub.s32 32, %v1454
        %v1456 = vshll.u32 %v1447, %v1454
        %v1457 = vshrl.u32 %v1439, %v1455
        %v1458 = vor.u32 %v1456, %v1457
        %v1459 = vsub.s32 4294967266, %v1454
        %v1460 = vadd.s32 %v1459, 127
        %v1461 = vshll.u32 %v1460, 23
        %v1462 = vor.u32 4788187, %v1461
        %v1463 = vand.u32 2147483647, %v1462
        %v1465 = vcvt.s32.f32 %v1458
        %v1466 = vmul.f32 %v1465, %v1463
        %v1467 = vxor.u32 %v1466, 2147483648
        %v1468 = vsel %vm1385, %v1467, %v1466
        %v1469 = vsub.s32 4, %v1445
        %v1470 = vsel %vm1385, %v1469, %v1445
        %v1471 = vsel %vm1384, %v433, %v1468
        %v1472 = vsel %vm1384, 0, %v1470
        %v1473 = vcosq.f32.pop %v1471
        %v1474 = vsinq.f32.pop %v1471
        %vm1475 = vweird.f32 %v433
        %v1476 = vadd.s32 %v1472, 3
        %v1477 = vand.u32 %v1476, 3
        %vm1478 = vcmp.lt.s32.totalorder %v1477, 2
        %vm1479 = vcmp.eq.s32.totalorder %v1477, 0
        %v1480 = vxor.u32 %v1474, 2147483648
        %v1481 = vsel %vm1479, %v1473, %v1480
        %vm1482 = vcmp.eq.s32.totalorder %v1477, 2
        %v1483 = vxor.u32 %v1473, 2147483648
        %v1484 = vsel %vm1482, %v1483, %v1474
        %v1485 = vsel %vm1478, %v1481, %v1484
        %v1486 = vsel %vm1475, nan, %v1485
        %v1487 = vand.u32 2147483647, %v438
        %vm1488 = vcmp.le.f32.partialorder %v1487, 0.7853982
        %vm1489 = vcmp.lt.s32.totalorder %v438, 0
        %v1490 = vand.u32 %v438, 2139095040
        %v1491 = vshrl.u32 %v1490, 23
        %v1492 = vsub.s32 %v1491, 127
        %v1493 = vand.u32 2147483647, %v438
        %v1494 = vand.u32 %v1493, 8388607
        %v1495 = vor.u32 %v1494, 8388608
        %v1496 = vsub.s32 0, %v1495
        %v1497 = vadd.s32 %v1492, 1
        %vm1498 = vcmp.gt.s32.totalorder %v1497, 0
        %v1499 = vsel %vm1498, %v1497, 0
        %v1500 = vshrl.u32 %v1499, 5
        %v1501 = vand.u32 %v1499, 31
        %v1502 = vsub.s32 32, %v1501
        %v1503 = vshrl.u32 683565275, %v1502
        %v1504 = vshll.u32 683565275, %v1501
        %v1505 = vshrl.u32 2475754826, %v1502
        %v1506 = vor.u32 %v1504, %v1505
        %v1507 = vshll.u32 2475754826, %v1501
        %v1508 = vshrl.u32 2131351028, %v1502
        %v1509 = vor.u32 %v1507, %v1508
        %v1510 = vshll.u32 2131351028, %v1501
        %v1511 = vshrl.u32 2102212464, %v1502
        %v1512 = vor.u32 %v1510, %v1511
        %v1513 = vshll.u32 2102212464, %v1501
        %v1514 = vshrl.u32 920167782, %v1502
        %v1515 = vor.u32 %v1513, %v1514
        %v1516 = vshll.u32 920167782, %v1501
        %v1517 = vshrl.u32 1326507024, %v1502
        %v1518 = vor.u32 %v1516, %v1517
        %vm1519 = vcmp.lt.s32.totalorder %v1500, 1
        %vm1520 = vcmp.lt.s32.totalorder %v1500, 2
        %vm1521 = vcmp.lt.s32.totalorder %v1500, 3
        %vm1522 = vcmp.lt.s32.totalorder %v1500, 4
        %v1523 = vsel %vm1519, %v1503, %v1506
        %v1524 = vsel %vm1522, %v1512, 2102212464
        %v1525 = vsel %vm1521, %v1509, %v1524
        %v1526 = vsel %vm1520, %v1523, %v1525
        %v1527 = vsel %vm1519, %v1506, %v1509
        %v1528 = vsel %vm1522, %v1515, 920167782
        %v1529 = vsel %vm1521, %v1512, %v1528
        %v1530 = vsel %vm1520, %v1527, %v1529
        %v1531 = vsel %vm1519, %v1509, %v1512
        %v1532 = vsel %vm1522, %v1518, 1326507024
        %v1533 = vsel %vm1521, %v1515, %v1532
        %v1534 = vsel %vm1520, %v1531, %v1533
        %v1535 = vshll.u32 %v1495, 8
        %v1536 = vmul.u32.u64.compose %v1535, %v1534
        %v1537 = vextract.low.u32 %v1536
        %v1538 = vextract.high.u32 %v1536
        %v1539 = vmul.u32.u64.compose %v1535, %v1530
        %v1540 = vextract.low.u32 %v1539
        %v1541 = vextract.high.u32 %v1539
        %v1542 = vmul.u32 %v1535, %v1526
        %v1543 = vadd.s32 %v1538, %v1540
        %vm1544 = vc.u32 %v1538, %v1540
        %v1545 = vadd.s32 %v1541, 1
        %v1546 = vsel %vm1544, %v1545, %v1541
        %v1547 = vadd.s32 %v1542, %v1546
        %v1548 = vadd.s32 %v1547, 536870912
        %v1549 = vshrl.u32 %v1548, 30
        %v1550 = vshll.u32 %v1549, 30
        %v1551 = vsub.s32 %v1547, %v1550
        %vm1552 = vcmp.lt.s32.totalorder %v1551, 0
        %v1553 = vsub.s32 0, %v1551
        %v1554 = vsel %vm1552, %v1553, %v1551
        %v1555 = vclz %v1554
        %v1556 = vsub.s32 %v1555, 2
        %vm1557 = vcmp.gt.s32.totalorder 0, %v1556
        %v1558 = vsel %vm1557, 0, %v1556
        %v1559 = vsub.s32 32, %v1558
        %v1560 = vshll.u32 %v1551, %v1558
        %v1561 = vshrl.u32 %v1543, %v1559
        %v1562 = vor.u32 %v1560, %v1561
        %v1563 = vsub.s32 4294967266, %v1558
        %v1564 = vadd.s32 %v1563, 127
        %v1565 = vshll.u32 %v1564, 23
        %v1566 = vor.u32 4788187, %v1565
        %v1567 = vand.u32 2147483647, %v1566
        %v1569 = vcvt.s32.f32 %v1562
        %v1570 = vmul.f32 %v1569, %v1567
        %v1571 = vxor.u32 %v1570, 2147483648
        %v1572 = vsel %vm1489, %v1571, %v1570
        %v1573 = vsub.s32 4, %v1549
        %v1574 = vsel %vm1489, %v1573, %v1549
        %v1575 = vsel %vm1488, %v438, %v1572
        %v1576 = vsel %vm1488, 0, %v1574
        %v1577 = vcosq.f32.pop %v1575
        %v1578 = vsinq.f32.pop %v1575
        %vm1579 = vweird.f32 %v438
        %v1580 = vadd.s32 %v1576, 3
        %v1581 = vand.u32 %v1580, 3
        %vm1582 = vcmp.lt.s32.totalorder %v1581, 2
        %vm1583 = vcmp.eq.s32.totalorder %v1581, 0
        %v1584 = vxor.u32 %v1578, 2147483648
        %v1585 = vsel %vm1583, %v1577, %v1584
        %vm1586 = vcmp.eq.s32.totalorder %v1581, 2
        %v1587 = vxor.u32 %v1577, 2147483648
        %v1588 = vsel %vm1586, %v1587, %v1578
        %v1589 = vsel %vm1582, %v1585, %v1588
        %v1590 = vsel %vm1579, nan, %v1589
        %v1591 = vand.u32 2147483647, %v443
        %vm1592 = vcmp.le.f32.partialorder %v1591, 0.7853982
        %vm1593 = vcmp.lt.s32.totalorder %v443, 0
        %v1594 = vand.u32 %v443, 2139095040
        %v1595 = vshrl.u32 %v1594, 23
        %v1596 = vsub.s32 %v1595, 127
        %v1597 = vand.u32 2147483647, %v443
        %v1598 = vand.u32 %v1597, 8388607
        %v1599 = vor.u32 %v1598, 8388608
        %v1600 = vsub.s32 0, %v1599
        %v1601 = vadd.s32 %v1596, 1
        %vm1602 = vcmp.gt.s32.totalorder %v1601, 0
        %v1603 = vsel %vm1602, %v1601, 0
        %v1604 = vshrl.u32 %v1603, 5
        %v1605 = vand.u32 %v1603, 31
        %v1606 = vsub.s32 32, %v1605
        %v1607 = vshrl.u32 683565275, %v1606
        %v1608 = vshll.u32 683565275, %v1605
        %v1609 = vshrl.u32 2475754826, %v1606
        %v1610 = vor.u32 %v1608, %v1609
        %v1611 = vshll.u32 2475754826, %v1605
        %v1612 = vshrl.u32 2131351028, %v1606
        %v1613 = vor.u32 %v1611, %v1612
        %v1614 = vshll.u32 2131351028, %v1605
        %v1615 = vshrl.u32 2102212464, %v1606
        %v1616 = vor.u32 %v1614, %v1615
        %v1617 = vshll.u32 2102212464, %v1605
        %v1618 = vshrl.u32 920167782, %v1606
        %v1619 = vor.u32 %v1617, %v1618
        %v1620 = vshll.u32 920167782, %v1605
        %v1621 = vshrl.u32 1326507024, %v1606
        %v1622 = vor.u32 %v1620, %v1621
        %vm1623 = vcmp.lt.s32.totalorder %v1604, 1
        %vm1624 = vcmp.lt.s32.totalorder %v1604, 2
        %vm1625 = vcmp.lt.s32.totalorder %v1604, 3
        %vm1626 = vcmp.lt.s32.totalorder %v1604, 4
        %v1627 = vsel %vm1623, %v1607, %v1610
        %v1628 = vsel %vm1626, %v1616, 2102212464
        %v1629 = vsel %vm1625, %v1613, %v1628
        %v1630 = vsel %vm1624, %v1627, %v1629
        %v1631 = vsel %vm1623, %v1610, %v1613
        %v1632 = vsel %vm1626, %v1619, 920167782
        %v1633 = vsel %vm1625, %v1616, %v1632
        %v1634 = vsel %vm1624, %v1631, %v1633
        %v1635 = vsel %vm1623, %v1613, %v1616
        %v1636 = vsel %vm1626, %v1622, 1326507024
        %v1637 = vsel %vm1625, %v1619, %v1636
        %v1638 = vsel %vm1624, %v1635, %v1637
        %v1639 = vshll.u32 %v1599, 8
        %v1640 = vmul.u32.u64.compose %v1639, %v1638
        %v1641 = vextract.low.u32 %v1640
        %v1642 = vextract.high.u32 %v1640
        %v1643 = vmul.u32.u64.compose %v1639, %v1634
        %v1644 = vextract.low.u32 %v1643
        %v1645 = vextract.high.u32 %v1643
        %v1646 = vmul.u32 %v1639, %v1630
        %v1647 = vadd.s32 %v1642, %v1644
        %vm1648 = vc.u32 %v1642, %v1644
        %v1649 = vadd.s32 %v1645, 1
        %v1650 = vsel %vm1648, %v1649, %v1645
        %v1651 = vadd.s32 %v1646, %v1650
        %v1652 = vadd.s32 %v1651, 536870912
        %v1653 = vshrl.u32 %v1652, 30
        %v1654 = vshll.u32 %v1653, 30
        %v1655 = vsub.s32 %v1651, %v1654
        %vm1656 = vcmp.lt.s32.totalorder %v1655, 0
        %v1657 = vsub.s32 0, %v1655
        %v1658 = vsel %vm1656, %v1657, %v1655
        %v1659 = vclz %v1658
        %v1660 = vsub.s32 %v1659, 2
        %vm1661 = vcmp.gt.s32.totalorder 0, %v1660
        %v1662 = vsel %vm1661, 0, %v1660
        %v1663 = vsub.s32 32, %v1662
        %v1664 = vshll.u32 %v1655, %v1662
        %v1665 = vshrl.u32 %v1647, %v1663
        %v1666 = vor.u32 %v1664, %v1665
        %v1667 = vsub.s32 4294967266, %v1662
        %v1668 = vadd.s32 %v1667, 127
        %v1669 = vshll.u32 %v1668, 23
        %v1670 = vor.u32 4788187, %v1669
        %v1671 = vand.u32 2147483647, %v1670
        %v1673 = vcvt.s32.f32 %v1666
        %v1674 = vmul.f32 %v1673, %v1671
        %v1675 = vxor.u32 %v1674, 2147483648
        %v1676 = vsel %vm1593, %v1675, %v1674
        %v1677 = vsub.s32 4, %v1653
        %v1678 = vsel %vm1593, %v1677, %v1653
        %v1679 = vsel %vm1592, %v443, %v1676
        %v1680 = vsel %vm1592, 0, %v1678
        %v1681 = vcosq.f32.pop %v1679
        %v1682 = vsinq.f32.pop %v1679
        %vm1683 = vweird.f32 %v443
        %v1684 = vadd.s32 %v1680, 3
        %v1685 = vand.u32 %v1684, 3
        %vm1686 = vcmp.lt.s32.totalorder %v1685, 2
        %vm1687 = vcmp.eq.s32.totalorder %v1685, 0
        %v1688 = vxor.u32 %v1682, 2147483648
        %v1689 = vsel %vm1687, %v1681, %v1688
        %vm1690 = vcmp.eq.s32.totalorder %v1685, 2
        %v1691 = vxor.u32 %v1681, 2147483648
        %v1692 = vsel %vm1690, %v1691, %v1682
        %v1693 = vsel %vm1686, %v1689, %v1692
        %v1694 = vsel %vm1683, nan, %v1693
        %v1695 = vand.u32 2147483647, %v448
        %vm1696 = vcmp.le.f32.partialorder %v1695, 0.7853982
        %vm1697 = vcmp.lt.s32.totalorder %v448, 0
        %v1698 = vand.u32 %v448, 2139095040
        %v1699 = vshrl.u32 %v1698, 23
        %v1700 = vsub.s32 %v1699, 127
        %v1701 = vand.u32 2147483647, %v448
        %v1702 = vand.u32 %v1701, 8388607
        %v1703 = vor.u32 %v1702, 8388608
        %v1704 = vsub.s32 0, %v1703
        %v1705 = vadd.s32 %v1700, 1
        %vm1706 = vcmp.gt.s32.totalorder %v1705, 0
        %v1707 = vsel %vm1706, %v1705, 0
        %v1708 = vshrl.u32 %v1707, 5
        %v1709 = vand.u32 %v1707, 31
        %v1710 = vsub.s32 32, %v1709
        %v1711 = vshrl.u32 683565275, %v1710
        %v1712 = vshll.u32 683565275, %v1709
        %v1713 = vshrl.u32 2475754826, %v1710
        %v1714 = vor.u32 %v1712, %v1713
        %v1715 = vshll.u32 2475754826, %v1709
        %v1716 = vshrl.u32 2131351028, %v1710
        %v1717 = vor.u32 %v1715, %v1716
        %v1718 = vshll.u32 2131351028, %v1709
        %v1719 = vshrl.u32 2102212464, %v1710
        %v1720 = vor.u32 %v1718, %v1719
        %v1721 = vshll.u32 2102212464, %v1709
        %v1722 = vshrl.u32 920167782, %v1710
        %v1723 = vor.u32 %v1721, %v1722
        %v1724 = vshll.u32 920167782, %v1709
        %v1725 = vshrl.u32 1326507024, %v1710
        %v1726 = vor.u32 %v1724, %v1725
        %vm1727 = vcmp.lt.s32.totalorder %v1708, 1
        %vm1728 = vcmp.lt.s32.totalorder %v1708, 2
        %vm1729 = vcmp.lt.s32.totalorder %v1708, 3
        %vm1730 = vcmp.lt.s32.totalorder %v1708, 4
        %v1731 = vsel %vm1727, %v1711, %v1714
        %v1732 = vsel %vm1730, %v1720, 2102212464
        %v1733 = vsel %vm1729, %v1717, %v1732
        %v1734 = vsel %vm1728, %v1731, %v1733
        %v1735 = vsel %vm1727, %v1714, %v1717
        %v1736 = vsel %vm1730, %v1723, 920167782
        %v1737 = vsel %vm1729, %v1720, %v1736
        %v1738 = vsel %vm1728, %v1735, %v1737
        %v1739 = vsel %vm1727, %v1717, %v1720
        %v1740 = vsel %vm1730, %v1726, 1326507024
        %v1741 = vsel %vm1729, %v1723, %v1740
        %v1742 = vsel %vm1728, %v1739, %v1741
        %v1743 = vshll.u32 %v1703, 8
        %v1744 = vmul.u32.u64.compose %v1743, %v1742
        %v1745 = vextract.low.u32 %v1744
        %v1746 = vextract.high.u32 %v1744
        %v1747 = vmul.u32.u64.compose %v1743, %v1738
        %v1748 = vextract.low.u32 %v1747
        %v1749 = vextract.high.u32 %v1747
        %v1750 = vmul.u32 %v1743, %v1734
        %v1751 = vadd.s32 %v1746, %v1748
        %vm1752 = vc.u32 %v1746, %v1748
        %v1753 = vadd.s32 %v1749, 1
        %v1754 = vsel %vm1752, %v1753, %v1749
        %v1755 = vadd.s32 %v1750, %v1754
        %v1756 = vadd.s32 %v1755, 536870912
        %v1757 = vshrl.u32 %v1756, 30
        %v1758 = vshll.u32 %v1757, 30
        %v1759 = vsub.s32 %v1755, %v1758
        %vm1760 = vcmp.lt.s32.totalorder %v1759, 0
        %v1761 = vsub.s32 0, %v1759
        %v1762 = vsel %vm1760, %v1761, %v1759
        %v1763 = vclz %v1762
        %v1764 = vsub.s32 %v1763, 2
        %vm1765 = vcmp.gt.s32.totalorder 0, %v1764
        %v1766 = vsel %vm1765, 0, %v1764
        %v1767 = vsub.s32 32, %v1766
        %v1768 = vshll.u32 %v1759, %v1766
        %v1769 = vshrl.u32 %v1751, %v1767
        %v1770 = vor.u32 %v1768, %v1769
        %v1771 = vsub.s32 4294967266, %v1766
        %v1772 = vadd.s32 %v1771, 127
        %v1773 = vshll.u32 %v1772, 23
        %v1774 = vor.u32 4788187, %v1773
        %v1775 = vand.u32 2147483647, %v1774
        %v1777 = vcvt.s32.f32 %v1770
        %v1778 = vmul.f32 %v1777, %v1775
        %v1779 = vxor.u32 %v1778, 2147483648
        %v1780 = vsel %vm1697, %v1779, %v1778
        %v1781 = vsub.s32 4, %v1757
        %v1782 = vsel %vm1697, %v1781, %v1757
        %v1783 = vsel %vm1696, %v448, %v1780
        %v1784 = vsel %vm1696, 0, %v1782
        %v1785 = vcosq.f32.pop %v1783
        %v1786 = vsinq.f32.pop %v1783
        %vm1787 = vweird.f32 %v448
        %v1788 = vadd.s32 %v1784, 3
        %v1789 = vand.u32 %v1788, 3
        %vm1790 = vcmp.lt.s32.totalorder %v1789, 2
        %vm1791 = vcmp.eq.s32.totalorder %v1789, 0
        %v1792 = vxor.u32 %v1786, 2147483648
        %v1793 = vsel %vm1791, %v1785, %v1792
        %vm1794 = vcmp.eq.s32.totalorder %v1789, 2
        %v1795 = vxor.u32 %v1785, 2147483648
        %v1796 = vsel %vm1794, %v1795, %v1786
        %v1797 = vsel %vm1790, %v1793, %v1796
        %v1798 = vsel %vm1787, nan, %v1797
        %v1799 = vand.u32 2147483647, %v453
        %vm1800 = vcmp.le.f32.partialorder %v1799, 0.7853982
        %vm1801 = vcmp.lt.s32.totalorder %v453, 0
        %v1802 = vand.u32 %v453, 2139095040
        %v1803 = vshrl.u32 %v1802, 23
        %v1804 = vsub.s32 %v1803, 127
        %v1805 = vand.u32 2147483647, %v453
        %v1806 = vand.u32 %v1805, 8388607
        %v1807 = vor.u32 %v1806, 8388608
        %v1808 = vsub.s32 0, %v1807
        %v1809 = vadd.s32 %v1804, 1
        %vm1810 = vcmp.gt.s32.totalorder %v1809, 0
        %v1811 = vsel %vm1810, %v1809, 0
        %v1812 = vshrl.u32 %v1811, 5
        %v1813 = vand.u32 %v1811, 31
        %v1814 = vsub.s32 32, %v1813
        %v1815 = vshrl.u32 683565275, %v1814
        %v1816 = vshll.u32 683565275, %v1813
        %v1817 = vshrl.u32 2475754826, %v1814
        %v1818 = vor.u32 %v1816, %v1817
        %v1819 = vshll.u32 2475754826, %v1813
        %v1820 = vshrl.u32 2131351028, %v1814
        %v1821 = vor.u32 %v1819, %v1820
        %v1822 = vshll.u32 2131351028, %v1813
        %v1823 = vshrl.u32 2102212464, %v1814
        %v1824 = vor.u32 %v1822, %v1823
        %v1825 = vshll.u32 2102212464, %v1813
        %v1826 = vshrl.u32 920167782, %v1814
        %v1827 = vor.u32 %v1825, %v1826
        %v1828 = vshll.u32 920167782, %v1813
        %v1829 = vshrl.u32 1326507024, %v1814
        %v1830 = vor.u32 %v1828, %v1829
        %vm1831 = vcmp.lt.s32.totalorder %v1812, 1
        %vm1832 = vcmp.lt.s32.totalorder %v1812, 2
        %vm1833 = vcmp.lt.s32.totalorder %v1812, 3
        %vm1834 = vcmp.lt.s32.totalorder %v1812, 4
        %v1835 = vsel %vm1831, %v1815, %v1818
        %v1836 = vsel %vm1834, %v1824, 2102212464
        %v1837 = vsel %vm1833, %v1821, %v1836
        %v1838 = vsel %vm1832, %v1835, %v1837
        %v1839 = vsel %vm1831, %v1818, %v1821
        %v1840 = vsel %vm1834, %v1827, 920167782
        %v1841 = vsel %vm1833, %v1824, %v1840
        %v1842 = vsel %vm1832, %v1839, %v1841
        %v1843 = vsel %vm1831, %v1821, %v1824
        %v1844 = vsel %vm1834, %v1830, 1326507024
        %v1845 = vsel %vm1833, %v1827, %v1844
        %v1846 = vsel %vm1832, %v1843, %v1845
        %v1847 = vshll.u32 %v1807, 8
        %v1848 = vmul.u32.u64.compose %v1847, %v1846
        %v1849 = vextract.low.u32 %v1848
        %v1850 = vextract.high.u32 %v1848
        %v1851 = vmul.u32.u64.compose %v1847, %v1842
        %v1852 = vextract.low.u32 %v1851
        %v1853 = vextract.high.u32 %v1851
        %v1854 = vmul.u32 %v1847, %v1838
        %v1855 = vadd.s32 %v1850, %v1852
        %vm1856 = vc.u32 %v1850, %v1852
        %v1857 = vadd.s32 %v1853, 1
        %v1858 = vsel %vm1856, %v1857, %v1853
        %v1859 = vadd.s32 %v1854, %v1858
        %v1860 = vadd.s32 %v1859, 536870912
        %v1861 = vshrl.u32 %v1860, 30
        %v1862 = vshll.u32 %v1861, 30
        %v1863 = vsub.s32 %v1859, %v1862
        %vm1864 = vcmp.lt.s32.totalorder %v1863, 0
        %v1865 = vsub.s32 0, %v1863
        %v1866 = vsel %vm1864, %v1865, %v1863
        %v1867 = vclz %v1866
        %v1868 = vsub.s32 %v1867, 2
        %vm1869 = vcmp.gt.s32.totalorder 0, %v1868
        %v1870 = vsel %vm1869, 0, %v1868
        %v1871 = vsub.s32 32, %v1870
        %v1872 = vshll.u32 %v1863, %v1870
        %v1873 = vshrl.u32 %v1855, %v1871
        %v1874 = vor.u32 %v1872, %v1873
        %v1875 = vsub.s32 4294967266, %v1870
        %v1876 = vadd.s32 %v1875, 127
        %v1877 = vshll.u32 %v1876, 23
        %v1878 = vor.u32 4788187, %v1877
        %v1879 = vand.u32 2147483647, %v1878
        %v1881 = vcvt.s32.f32 %v1874
        %v1882 = vmul.f32 %v1881, %v1879
        %v1883 = vxor.u32 %v1882, 2147483648
        %v1884 = vsel %vm1801, %v1883, %v1882
        %v1885 = vsub.s32 4, %v1861
        %v1886 = vsel %vm1801, %v1885, %v1861
        %v1887 = vsel %vm1800, %v453, %v1884
        %v1888 = vsel %vm1800, 0, %v1886
        %v1889 = vcosq.f32.pop %v1887
        %v1890 = vsinq.f32.pop %v1887
        %vm1891 = vweird.f32 %v453
        %v1892 = vadd.s32 %v1888, 3
        %v1893 = vand.u32 %v1892, 3
        %vm1894 = vcmp.lt.s32.totalorder %v1893, 2
        %vm1895 = vcmp.eq.s32.totalorder %v1893, 0
        %v1896 = vxor.u32 %v1890, 2147483648
        %v1897 = vsel %vm1895, %v1889, %v1896
        %vm1898 = vcmp.eq.s32.totalorder %v1893, 2
        %v1899 = vxor.u32 %v1889, 2147483648
        %v1900 = vsel %vm1898, %v1899, %v1890
        %v1901 = vsel %vm1894, %v1897, %v1900
        %v1902 = vsel %vm1891, nan, %v1901
        %v1903 = vand.u32 2147483647, %v458
        %vm1904 = vcmp.le.f32.partialorder %v1903, 0.7853982
        %vm1905 = vcmp.lt.s32.totalorder %v458, 0
        %v1906 = vand.u32 %v458, 2139095040
        %v1907 = vshrl.u32 %v1906, 23
        %v1908 = vsub.s32 %v1907, 127
        %v1909 = vand.u32 2147483647, %v458
        %v1910 = vand.u32 %v1909, 8388607
        %v1911 = vor.u32 %v1910, 8388608
        %v1912 = vsub.s32 0, %v1911
        %v1913 = vadd.s32 %v1908, 1
        %vm1914 = vcmp.gt.s32.totalorder %v1913, 0
        %v1915 = vsel %vm1914, %v1913, 0
        %v1916 = vshrl.u32 %v1915, 5
        %v1917 = vand.u32 %v1915, 31
        %v1918 = vsub.s32 32, %v1917
        %v1919 = vshrl.u32 683565275, %v1918
        %v1920 = vshll.u32 683565275, %v1917
        %v1921 = vshrl.u32 2475754826, %v1918
        %v1922 = vor.u32 %v1920, %v1921
        %v1923 = vshll.u32 2475754826, %v1917
        %v1924 = vshrl.u32 2131351028, %v1918
        %v1925 = vor.u32 %v1923, %v1924
        %v1926 = vshll.u32 2131351028, %v1917
        %v1927 = vshrl.u32 2102212464, %v1918
        %v1928 = vor.u32 %v1926, %v1927
        %v1929 = vshll.u32 2102212464, %v1917
        %v1930 = vshrl.u32 920167782, %v1918
        %v1931 = vor.u32 %v1929, %v1930
        %v1932 = vshll.u32 920167782, %v1917
        %v1933 = vshrl.u32 1326507024, %v1918
        %v1934 = vor.u32 %v1932, %v1933
        %vm1935 = vcmp.lt.s32.totalorder %v1916, 1
        %vm1936 = vcmp.lt.s32.totalorder %v1916, 2
        %vm1937 = vcmp.lt.s32.totalorder %v1916, 3
        %vm1938 = vcmp.lt.s32.totalorder %v1916, 4
        %v1939 = vsel %vm1935, %v1919, %v1922
        %v1940 = vsel %vm1938, %v1928, 2102212464
        %v1941 = vsel %vm1937, %v1925, %v1940
        %v1942 = vsel %vm1936, %v1939, %v1941
        %v1943 = vsel %vm1935, %v1922, %v1925
        %v1944 = vsel %vm1938, %v1931, 920167782
        %v1945 = vsel %vm1937, %v1928, %v1944
        %v1946 = vsel %vm1936, %v1943, %v1945
        %v1947 = vsel %vm1935, %v1925, %v1928
        %v1948 = vsel %vm1938, %v1934, 1326507024
        %v1949 = vsel %vm1937, %v1931, %v1948
        %v1950 = vsel %vm1936, %v1947, %v1949
        %v1951 = vshll.u32 %v1911, 8
        %v1952 = vmul.u32.u64.compose %v1951, %v1950
        %v1953 = vextract.low.u32 %v1952
        %v1954 = vextract.high.u32 %v1952
        %v1955 = vmul.u32.u64.compose %v1951, %v1946
        %v1956 = vextract.low.u32 %v1955
        %v1957 = vextract.high.u32 %v1955
        %v1958 = vmul.u32 %v1951, %v1942
        %v1959 = vadd.s32 %v1954, %v1956
        %vm1960 = vc.u32 %v1954, %v1956
        %v1961 = vadd.s32 %v1957, 1
        %v1962 = vsel %vm1960, %v1961, %v1957
        %v1963 = vadd.s32 %v1958, %v1962
        %v1964 = vadd.s32 %v1963, 536870912
        %v1965 = vshrl.u32 %v1964, 30
        %v1966 = vshll.u32 %v1965, 30
        %v1967 = vsub.s32 %v1963, %v1966
        %vm1968 = vcmp.lt.s32.totalorder %v1967, 0
        %v1969 = vsub.s32 0, %v1967
        %v1970 = vsel %vm1968, %v1969, %v1967
        %v1971 = vclz %v1970
        %v1972 = vsub.s32 %v1971, 2
        %vm1973 = vcmp.gt.s32.totalorder 0, %v1972
        %v1974 = vsel %vm1973, 0, %v1972
        %v1975 = vsub.s32 32, %v1974
        %v1976 = vshll.u32 %v1967, %v1974
        %v1977 = vshrl.u32 %v1959, %v1975
        %v1978 = vor.u32 %v1976, %v1977
        %v1979 = vsub.s32 4294967266, %v1974
        %v1980 = vadd.s32 %v1979, 127
        %v1981 = vshll.u32 %v1980, 23
        %v1982 = vor.u32 4788187, %v1981
        %v1983 = vand.u32 2147483647, %v1982
        %v1985 = vcvt.s32.f32 %v1978
        %v1986 = vmul.f32 %v1985, %v1983
        %v1987 = vxor.u32 %v1986, 2147483648
        %v1988 = vsel %vm1905, %v1987, %v1986
        %v1989 = vsub.s32 4, %v1965
        %v1990 = vsel %vm1905, %v1989, %v1965
        %v1991 = vsel %vm1904, %v458, %v1988
        %v1992 = vsel %vm1904, 0, %v1990
        %v1993 = vcosq.f32.pop %v1991
        %v1994 = vsinq.f32.pop %v1991
        %vm1995 = vweird.f32 %v458
        %v1996 = vadd.s32 %v1992, 3
        %v1997 = vand.u32 %v1996, 3
        %vm1998 = vcmp.lt.s32.totalorder %v1997, 2
        %vm1999 = vcmp.eq.s32.totalorder %v1997, 0
        %v2000 = vxor.u32 %v1994, 2147483648
        %v2001 = vsel %vm1999, %v1993, %v2000
        %vm2002 = vcmp.eq.s32.totalorder %v1997, 2
        %v2003 = vxor.u32 %v1993, 2147483648
        %v2004 = vsel %vm2002, %v2003, %v1994
        %v2005 = vsel %vm1998, %v2001, %v2004
        %v2006 = vsel %vm1995, nan, %v2005
        %v2007 = vand.u32 2147483647, %v463
        %vm2008 = vcmp.le.f32.partialorder %v2007, 0.7853982
        %vm2009 = vcmp.lt.s32.totalorder %v463, 0
        %v2010 = vand.u32 %v463, 2139095040
        %v2011 = vshrl.u32 %v2010, 23
        %v2012 = vsub.s32 %v2011, 127
        %v2013 = vand.u32 2147483647, %v463
        %v2014 = vand.u32 %v2013, 8388607
        %v2015 = vor.u32 %v2014, 8388608
        %v2016 = vsub.s32 0, %v2015
        %v2017 = vadd.s32 %v2012, 1
        %vm2018 = vcmp.gt.s32.totalorder %v2017, 0
        %v2019 = vsel %vm2018, %v2017, 0
        %v2020 = vshrl.u32 %v2019, 5
        %v2021 = vand.u32 %v2019, 31
        %v2022 = vsub.s32 32, %v2021
        %v2023 = vshrl.u32 683565275, %v2022
        %v2024 = vshll.u32 683565275, %v2021
        %v2025 = vshrl.u32 2475754826, %v2022
        %v2026 = vor.u32 %v2024, %v2025
        %v2027 = vshll.u32 2475754826, %v2021
        %v2028 = vshrl.u32 2131351028, %v2022
        %v2029 = vor.u32 %v2027, %v2028
        %v2030 = vshll.u32 2131351028, %v2021
        %v2031 = vshrl.u32 2102212464, %v2022
        %v2032 = vor.u32 %v2030, %v2031
        %v2033 = vshll.u32 2102212464, %v2021
        %v2034 = vshrl.u32 920167782, %v2022
        %v2035 = vor.u32 %v2033, %v2034
        %v2036 = vshll.u32 920167782, %v2021
        %v2037 = vshrl.u32 1326507024, %v2022
        %v2038 = vor.u32 %v2036, %v2037
        %vm2039 = vcmp.lt.s32.totalorder %v2020, 1
        %vm2040 = vcmp.lt.s32.totalorder %v2020, 2
        %vm2041 = vcmp.lt.s32.totalorder %v2020, 3
        %vm2042 = vcmp.lt.s32.totalorder %v2020, 4
        %v2043 = vsel %vm2039, %v2023, %v2026
        %v2044 = vsel %vm2042, %v2032, 2102212464
        %v2045 = vsel %vm2041, %v2029, %v2044
        %v2046 = vsel %vm2040, %v2043, %v2045
        %v2047 = vsel %vm2039, %v2026, %v2029
        %v2048 = vsel %vm2042, %v2035, 920167782
        %v2049 = vsel %vm2041, %v2032, %v2048
        %v2050 = vsel %vm2040, %v2047, %v2049
        %v2051 = vsel %vm2039, %v2029, %v2032
        %v2052 = vsel %vm2042, %v2038, 1326507024
        %v2053 = vsel %vm2041, %v2035, %v2052
        %v2054 = vsel %vm2040, %v2051, %v2053
        %v2055 = vshll.u32 %v2015, 8
        %v2056 = vmul.u32.u64.compose %v2055, %v2054
        %v2057 = vextract.low.u32 %v2056
        %v2058 = vextract.high.u32 %v2056
        %v2059 = vmul.u32.u64.compose %v2055, %v2050
        %v2060 = vextract.low.u32 %v2059
        %v2061 = vextract.high.u32 %v2059
        %v2062 = vmul.u32 %v2055, %v2046
        %v2063 = vadd.s32 %v2058, %v2060
        %vm2064 = vc.u32 %v2058, %v2060
        %v2065 = vadd.s32 %v2061, 1
        %v2066 = vsel %vm2064, %v2065, %v2061
        %v2067 = vadd.s32 %v2062, %v2066
        %v2068 = vadd.s32 %v2067, 536870912
        %v2069 = vshrl.u32 %v2068, 30
        %v2070 = vshll.u32 %v2069, 30
        %v2071 = vsub.s32 %v2067, %v2070
        %vm2072 = vcmp.lt.s32.totalorder %v2071, 0
        %v2073 = vsub.s32 0, %v2071
        %v2074 = vsel %vm2072, %v2073, %v2071
        %v2075 = vclz %v2074
        %v2076 = vsub.s32 %v2075, 2
        %vm2077 = vcmp.gt.s32.totalorder 0, %v2076
        %v2078 = vsel %vm2077, 0, %v2076
        %v2079 = vsub.s32 32, %v2078
        %v2080 = vshll.u32 %v2071, %v2078
        %v2081 = vshrl.u32 %v2063, %v2079
        %v2082 = vor.u32 %v2080, %v2081
        %v2083 = vsub.s32 4294967266, %v2078
        %v2084 = vadd.s32 %v2083, 127
        %v2085 = vshll.u32 %v2084, 23
        %v2086 = vor.u32 4788187, %v2085
        %v2087 = vand.u32 2147483647, %v2086
        %v2089 = vcvt.s32.f32 %v2082
        %v2090 = vmul.f32 %v2089, %v2087
        %v2091 = vxor.u32 %v2090, 2147483648
        %v2092 = vsel %vm2009, %v2091, %v2090
        %v2093 = vsub.s32 4, %v2069
        %v2094 = vsel %vm2009, %v2093, %v2069
        %v2095 = vsel %vm2008, %v463, %v2092
        %v2096 = vsel %vm2008, 0, %v2094
        %v2097 = vcosq.f32.pop %v2095
        %v2098 = vsinq.f32.pop %v2095
        %vm2099 = vweird.f32 %v463
        %v2100 = vadd.s32 %v2096, 3
        %v2101 = vand.u32 %v2100, 3
        %vm2102 = vcmp.lt.s32.totalorder %v2101, 2
        %vm2103 = vcmp.eq.s32.totalorder %v2101, 0
        %v2104 = vxor.u32 %v2098, 2147483648
        %v2105 = vsel %vm2103, %v2097, %v2104
        %vm2106 = vcmp.eq.s32.totalorder %v2101, 2
        %v2107 = vxor.u32 %v2097, 2147483648
        %v2108 = vsel %vm2106, %v2107, %v2098
        %v2109 = vsel %vm2102, %v2105, %v2108
        %v2110 = vsel %vm2099, nan, %v2109
        %v2111 = vand.u32 2147483647, %v468
        %vm2112 = vcmp.le.f32.partialorder %v2111, 0.7853982
        %vm2113 = vcmp.lt.s32.totalorder %v468, 0
        %v2114 = vand.u32 %v468, 2139095040
        %v2115 = vshrl.u32 %v2114, 23
        %v2116 = vsub.s32 %v2115, 127
        %v2117 = vand.u32 2147483647, %v468
        %v2118 = vand.u32 %v2117, 8388607
        %v2119 = vor.u32 %v2118, 8388608
        %v2120 = vsub.s32 0, %v2119
        %v2121 = vadd.s32 %v2116, 1
        %vm2122 = vcmp.gt.s32.totalorder %v2121, 0
        %v2123 = vsel %vm2122, %v2121, 0
        %v2124 = vshrl.u32 %v2123, 5
        %v2125 = vand.u32 %v2123, 31
        %v2126 = vsub.s32 32, %v2125
        %v2127 = vshrl.u32 683565275, %v2126
        %v2128 = vshll.u32 683565275, %v2125
        %v2129 = vshrl.u32 2475754826, %v2126
        %v2130 = vor.u32 %v2128, %v2129
        %v2131 = vshll.u32 2475754826, %v2125
        %v2132 = vshrl.u32 2131351028, %v2126
        %v2133 = vor.u32 %v2131, %v2132
        %v2134 = vshll.u32 2131351028, %v2125
        %v2135 = vshrl.u32 2102212464, %v2126
        %v2136 = vor.u32 %v2134, %v2135
        %v2137 = vshll.u32 2102212464, %v2125
        %v2138 = vshrl.u32 920167782, %v2126
        %v2139 = vor.u32 %v2137, %v2138
        %v2140 = vshll.u32 920167782, %v2125
        %v2141 = vshrl.u32 1326507024, %v2126
        %v2142 = vor.u32 %v2140, %v2141
        %vm2143 = vcmp.lt.s32.totalorder %v2124, 1
        %vm2144 = vcmp.lt.s32.totalorder %v2124, 2
        %vm2145 = vcmp.lt.s32.totalorder %v2124, 3
        %vm2146 = vcmp.lt.s32.totalorder %v2124, 4
        %v2147 = vsel %vm2143, %v2127, %v2130
        %v2148 = vsel %vm2146, %v2136, 2102212464
        %v2149 = vsel %vm2145, %v2133, %v2148
        %v2150 = vsel %vm2144, %v2147, %v2149
        %v2151 = vsel %vm2143, %v2130, %v2133
        %v2152 = vsel %vm2146, %v2139, 920167782
        %v2153 = vsel %vm2145, %v2136, %v2152
        %v2154 = vsel %vm2144, %v2151, %v2153
        %v2155 = vsel %vm2143, %v2133, %v2136
        %v2156 = vsel %vm2146, %v2142, 1326507024
        %v2157 = vsel %vm2145, %v2139, %v2156
        %v2158 = vsel %vm2144, %v2155, %v2157
        %v2159 = vshll.u32 %v2119, 8
        %v2160 = vmul.u32.u64.compose %v2159, %v2158
        %v2161 = vextract.low.u32 %v2160
        %v2162 = vextract.high.u32 %v2160
        %v2163 = vmul.u32.u64.compose %v2159, %v2154
        %v2164 = vextract.low.u32 %v2163
        %v2165 = vextract.high.u32 %v2163
        %v2166 = vmul.u32 %v2159, %v2150
        %v2167 = vadd.s32 %v2162, %v2164
        %vm2168 = vc.u32 %v2162, %v2164
        %v2169 = vadd.s32 %v2165, 1
        %v2170 = vsel %vm2168, %v2169, %v2165
        %v2171 = vadd.s32 %v2166, %v2170
        %v2172 = vadd.s32 %v2171, 536870912
        %v2173 = vshrl.u32 %v2172, 30
        %v2174 = vshll.u32 %v2173, 30
        %v2175 = vsub.s32 %v2171, %v2174
        %vm2176 = vcmp.lt.s32.totalorder %v2175, 0
        %v2177 = vsub.s32 0, %v2175
        %v2178 = vsel %vm2176, %v2177, %v2175
        %v2179 = vclz %v2178
        %v2180 = vsub.s32 %v2179, 2
        %vm2181 = vcmp.gt.s32.totalorder 0, %v2180
        %v2182 = vsel %vm2181, 0, %v2180
        %v2183 = vsub.s32 32, %v2182
        %v2184 = vshll.u32 %v2175, %v2182
        %v2185 = vshrl.u32 %v2167, %v2183
        %v2186 = vor.u32 %v2184, %v2185
        %v2187 = vsub.s32 4294967266, %v2182
        %v2188 = vadd.s32 %v2187, 127
        %v2189 = vshll.u32 %v2188, 23
        %v2190 = vor.u32 4788187, %v2189
        %v2191 = vand.u32 2147483647, %v2190
        %v2193 = vcvt.s32.f32 %v2186
        %v2194 = vmul.f32 %v2193, %v2191
        %v2195 = vxor.u32 %v2194, 2147483648
        %v2196 = vsel %vm2113, %v2195, %v2194
        %v2197 = vsub.s32 4, %v2173
        %v2198 = vsel %vm2113, %v2197, %v2173
        %v2199 = vsel %vm2112, %v468, %v2196
        %v2200 = vsel %vm2112, 0, %v2198
        %v2201 = vcosq.f32.pop %v2199
        %v2202 = vsinq.f32.pop %v2199
        %vm2203 = vweird.f32 %v468
        %v2204 = vadd.s32 %v2200, 3
        %v2205 = vand.u32 %v2204, 3
        %vm2206 = vcmp.lt.s32.totalorder %v2205, 2
        %vm2207 = vcmp.eq.s32.totalorder %v2205, 0
        %v2208 = vxor.u32 %v2202, 2147483648
        %v2209 = vsel %vm2207, %v2201, %v2208
        %vm2210 = vcmp.eq.s32.totalorder %v2205, 2
        %v2211 = vxor.u32 %v2201, 2147483648
        %v2212 = vsel %vm2210, %v2211, %v2202
        %v2213 = vsel %vm2206, %v2209, %v2212
        %v2214 = vsel %vm2203, nan, %v2213
        %v2215 = vand.u32 2147483647, %v473
        %vm2216 = vcmp.le.f32.partialorder %v2215, 0.7853982
        %vm2217 = vcmp.lt.s32.totalorder %v473, 0
        %v2218 = vand.u32 %v473, 2139095040
        %v2219 = vshrl.u32 %v2218, 23
        %v2220 = vsub.s32 %v2219, 127
        %v2221 = vand.u32 2147483647, %v473
        %v2222 = vand.u32 %v2221, 8388607
        %v2223 = vor.u32 %v2222, 8388608
        %v2224 = vsub.s32 0, %v2223
        %v2225 = vadd.s32 %v2220, 1
        %vm2226 = vcmp.gt.s32.totalorder %v2225, 0
        %v2227 = vsel %vm2226, %v2225, 0
        %v2228 = vshrl.u32 %v2227, 5
        %v2229 = vand.u32 %v2227, 31
        %v2230 = vsub.s32 32, %v2229
        %v2231 = vshrl.u32 683565275, %v2230
        %v2232 = vshll.u32 683565275, %v2229
        %v2233 = vshrl.u32 2475754826, %v2230
        %v2234 = vor.u32 %v2232, %v2233
        %v2235 = vshll.u32 2475754826, %v2229
        %v2236 = vshrl.u32 2131351028, %v2230
        %v2237 = vor.u32 %v2235, %v2236
        %v2238 = vshll.u32 2131351028, %v2229
        %v2239 = vshrl.u32 2102212464, %v2230
        %v2240 = vor.u32 %v2238, %v2239
        %v2241 = vshll.u32 2102212464, %v2229
        %v2242 = vshrl.u32 920167782, %v2230
        %v2243 = vor.u32 %v2241, %v2242
        %v2244 = vshll.u32 920167782, %v2229
        %v2245 = vshrl.u32 1326507024, %v2230
        %v2246 = vor.u32 %v2244, %v2245
        %vm2247 = vcmp.lt.s32.totalorder %v2228, 1
        %vm2248 = vcmp.lt.s32.totalorder %v2228, 2
        %vm2249 = vcmp.lt.s32.totalorder %v2228, 3
        %vm2250 = vcmp.lt.s32.totalorder %v2228, 4
        %v2251 = vsel %vm2247, %v2231, %v2234
        %v2252 = vsel %vm2250, %v2240, 2102212464
        %v2253 = vsel %vm2249, %v2237, %v2252
        %v2254 = vsel %vm2248, %v2251, %v2253
        %v2255 = vsel %vm2247, %v2234, %v2237
        %v2256 = vsel %vm2250, %v2243, 920167782
        %v2257 = vsel %vm2249, %v2240, %v2256
        %v2258 = vsel %vm2248, %v2255, %v2257
        %v2259 = vsel %vm2247, %v2237, %v2240
        %v2260 = vsel %vm2250, %v2246, 1326507024
        %v2261 = vsel %vm2249, %v2243, %v2260
        %v2262 = vsel %vm2248, %v2259, %v2261
        %v2263 = vshll.u32 %v2223, 8
        %v2264 = vmul.u32.u64.compose %v2263, %v2262
        %v2265 = vextract.low.u32 %v2264
        %v2266 = vextract.high.u32 %v2264
        %v2267 = vmul.u32.u64.compose %v2263, %v2258
        %v2268 = vextract.low.u32 %v2267
        %v2269 = vextract.high.u32 %v2267
        %v2270 = vmul.u32 %v2263, %v2254
        %v2271 = vadd.s32 %v2266, %v2268
        %vm2272 = vc.u32 %v2266, %v2268
        %v2273 = vadd.s32 %v2269, 1
        %v2274 = vsel %vm2272, %v2273, %v2269
        %v2275 = vadd.s32 %v2270, %v2274
        %v2276 = vadd.s32 %v2275, 536870912
        %v2277 = vshrl.u32 %v2276, 30
        %v2278 = vshll.u32 %v2277, 30
        %v2279 = vsub.s32 %v2275, %v2278
        %vm2280 = vcmp.lt.s32.totalorder %v2279, 0
        %v2281 = vsub.s32 0, %v2279
        %v2282 = vsel %vm2280, %v2281, %v2279
        %v2283 = vclz %v2282
        %v2284 = vsub.s32 %v2283, 2
        %vm2285 = vcmp.gt.s32.totalorder 0, %v2284
        %v2286 = vsel %vm2285, 0, %v2284
        %v2287 = vsub.s32 32, %v2286
        %v2288 = vshll.u32 %v2279, %v2286
        %v2289 = vshrl.u32 %v2271, %v2287
        %v2290 = vor.u32 %v2288, %v2289
        %v2291 = vsub.s32 4294967266, %v2286
        %v2292 = vadd.s32 %v2291, 127
        %v2293 = vshll.u32 %v2292, 23
        %v2294 = vor.u32 4788187, %v2293
        %v2295 = vand.u32 2147483647, %v2294
        %v2297 = vcvt.s32.f32 %v2290
        %v2298 = vmul.f32 %v2297, %v2295
        %v2299 = vxor.u32 %v2298, 2147483648
        %v2300 = vsel %vm2217, %v2299, %v2298
        %v2301 = vsub.s32 4, %v2277
        %v2302 = vsel %vm2217, %v2301, %v2277
        %v2303 = vsel %vm2216, %v473, %v2300
        %v2304 = vsel %vm2216, 0, %v2302
        %v2305 = vcosq.f32.pop %v2303
        %v2306 = vsinq.f32.pop %v2303
        %vm2307 = vweird.f32 %v473
        %v2308 = vadd.s32 %v2304, 3
        %v2309 = vand.u32 %v2308, 3
        %vm2310 = vcmp.lt.s32.totalorder %v2309, 2
        %vm2311 = vcmp.eq.s32.totalorder %v2309, 0
        %v2312 = vxor.u32 %v2306, 2147483648
        %v2313 = vsel %vm2311, %v2305, %v2312
        %vm2314 = vcmp.eq.s32.totalorder %v2309, 2
        %v2315 = vxor.u32 %v2305, 2147483648
        %v2316 = vsel %vm2314, %v2315, %v2306
        %v2317 = vsel %vm2310, %v2313, %v2316
        %v2318 = vsel %vm2307, nan, %v2317
        %v2319 = vand.u32 2147483647, %v478
        %vm2320 = vcmp.le.f32.partialorder %v2319, 0.7853982
        %vm2321 = vcmp.lt.s32.totalorder %v478, 0
        %v2322 = vand.u32 %v478, 2139095040
        %v2323 = vshrl.u32 %v2322, 23
        %v2324 = vsub.s32 %v2323, 127
        %v2325 = vand.u32 2147483647, %v478
        %v2326 = vand.u32 %v2325, 8388607
        %v2327 = vor.u32 %v2326, 8388608
        %v2328 = vsub.s32 0, %v2327
        %v2329 = vadd.s32 %v2324, 1
        %vm2330 = vcmp.gt.s32.totalorder %v2329, 0
        %v2331 = vsel %vm2330, %v2329, 0
        %v2332 = vshrl.u32 %v2331, 5
        %v2333 = vand.u32 %v2331, 31
        %v2334 = vsub.s32 32, %v2333
        %v2335 = vshrl.u32 683565275, %v2334
        %v2336 = vshll.u32 683565275, %v2333
        %v2337 = vshrl.u32 2475754826, %v2334
        %v2338 = vor.u32 %v2336, %v2337
        %v2339 = vshll.u32 2475754826, %v2333
        %v2340 = vshrl.u32 2131351028, %v2334
        %v2341 = vor.u32 %v2339, %v2340
        %v2342 = vshll.u32 2131351028, %v2333
        %v2343 = vshrl.u32 2102212464, %v2334
        %v2344 = vor.u32 %v2342, %v2343
        %v2345 = vshll.u32 2102212464, %v2333
        %v2346 = vshrl.u32 920167782, %v2334
        %v2347 = vor.u32 %v2345, %v2346
        %v2348 = vshll.u32 920167782, %v2333
        %v2349 = vshrl.u32 1326507024, %v2334
        %v2350 = vor.u32 %v2348, %v2349
        %vm2351 = vcmp.lt.s32.totalorder %v2332, 1
        %vm2352 = vcmp.lt.s32.totalorder %v2332, 2
        %vm2353 = vcmp.lt.s32.totalorder %v2332, 3
        %vm2354 = vcmp.lt.s32.totalorder %v2332, 4
        %v2355 = vsel %vm2351, %v2335, %v2338
        %v2356 = vsel %vm2354, %v2344, 2102212464
        %v2357 = vsel %vm2353, %v2341, %v2356
        %v2358 = vsel %vm2352, %v2355, %v2357
        %v2359 = vsel %vm2351, %v2338, %v2341
        %v2360 = vsel %vm2354, %v2347, 920167782
        %v2361 = vsel %vm2353, %v2344, %v2360
        %v2362 = vsel %vm2352, %v2359, %v2361
        %v2363 = vsel %vm2351, %v2341, %v2344
        %v2364 = vsel %vm2354, %v2350, 1326507024
        %v2365 = vsel %vm2353, %v2347, %v2364
        %v2366 = vsel %vm2352, %v2363, %v2365
        %v2367 = vshll.u32 %v2327, 8
        %v2368 = vmul.u32.u64.compose %v2367, %v2366
        %v2369 = vextract.low.u32 %v2368
        %v2370 = vextract.high.u32 %v2368
        %v2371 = vmul.u32.u64.compose %v2367, %v2362
        %v2372 = vextract.low.u32 %v2371
        %v2373 = vextract.high.u32 %v2371
        %v2374 = vmul.u32 %v2367, %v2358
        %v2375 = vadd.s32 %v2370, %v2372
        %vm2376 = vc.u32 %v2370, %v2372
        %v2377 = vadd.s32 %v2373, 1
        %v2378 = vsel %vm2376, %v2377, %v2373
        %v2379 = vadd.s32 %v2374, %v2378
        %v2380 = vadd.s32 %v2379, 536870912
        %v2381 = vshrl.u32 %v2380, 30
        %v2382 = vshll.u32 %v2381, 30
        %v2383 = vsub.s32 %v2379, %v2382
        %vm2384 = vcmp.lt.s32.totalorder %v2383, 0
        %v2385 = vsub.s32 0, %v2383
        %v2386 = vsel %vm2384, %v2385, %v2383
        %v2387 = vclz %v2386
        %v2388 = vsub.s32 %v2387, 2
        %vm2389 = vcmp.gt.s32.totalorder 0, %v2388
        %v2390 = vsel %vm2389, 0, %v2388
        %v2391 = vsub.s32 32, %v2390
        %v2392 = vshll.u32 %v2383, %v2390
        %v2393 = vshrl.u32 %v2375, %v2391
        %v2394 = vor.u32 %v2392, %v2393
        %v2395 = vsub.s32 4294967266, %v2390
        %v2396 = vadd.s32 %v2395, 127
        %v2397 = vshll.u32 %v2396, 23
        %v2398 = vor.u32 4788187, %v2397
        %v2399 = vand.u32 2147483647, %v2398
        %v2401 = vcvt.s32.f32 %v2394
        %v2402 = vmul.f32 %v2401, %v2399
        %v2403 = vxor.u32 %v2402, 2147483648
        %v2404 = vsel %vm2321, %v2403, %v2402
        %v2405 = vsub.s32 4, %v2381
        %v2406 = vsel %vm2321, %v2405, %v2381
        %v2407 = vsel %vm2320, %v478, %v2404
        %v2408 = vsel %vm2320, 0, %v2406
        %v2409 = vcosq.f32.pop %v2407
        %v2410 = vsinq.f32.pop %v2407
        %vm2411 = vweird.f32 %v478
        %v2412 = vadd.s32 %v2408, 3
        %v2413 = vand.u32 %v2412, 3
        %vm2414 = vcmp.lt.s32.totalorder %v2413, 2
        %vm2415 = vcmp.eq.s32.totalorder %v2413, 0
        %v2416 = vxor.u32 %v2410, 2147483648
        %v2417 = vsel %vm2415, %v2409, %v2416
        %vm2418 = vcmp.eq.s32.totalorder %v2413, 2
        %v2419 = vxor.u32 %v2409, 2147483648
        %v2420 = vsel %vm2418, %v2419, %v2410
        %v2421 = vsel %vm2414, %v2417, %v2420
        %v2422 = vsel %vm2411, nan, %v2421
        %v2423 = vand.u32 2147483647, %v483
        %vm2424 = vcmp.le.f32.partialorder %v2423, 0.7853982
        %vm2425 = vcmp.lt.s32.totalorder %v483, 0
        %v2426 = vand.u32 %v483, 2139095040
        %v2427 = vshrl.u32 %v2426, 23
        %v2428 = vsub.s32 %v2427, 127
        %v2429 = vand.u32 2147483647, %v483
        %v2430 = vand.u32 %v2429, 8388607
        %v2431 = vor.u32 %v2430, 8388608
        %v2432 = vsub.s32 0, %v2431
        %v2433 = vadd.s32 %v2428, 1
        %vm2434 = vcmp.gt.s32.totalorder %v2433, 0
        %v2435 = vsel %vm2434, %v2433, 0
        %v2436 = vshrl.u32 %v2435, 5
        %v2437 = vand.u32 %v2435, 31
        %v2438 = vsub.s32 32, %v2437
        %v2439 = vshrl.u32 683565275, %v2438
        %v2440 = vshll.u32 683565275, %v2437
        %v2441 = vshrl.u32 2475754826, %v2438
        %v2442 = vor.u32 %v2440, %v2441
        %v2443 = vshll.u32 2475754826, %v2437
        %v2444 = vshrl.u32 2131351028, %v2438
        %v2445 = vor.u32 %v2443, %v2444
        %v2446 = vshll.u32 2131351028, %v2437
        %v2447 = vshrl.u32 2102212464, %v2438
        %v2448 = vor.u32 %v2446, %v2447
        %v2449 = vshll.u32 2102212464, %v2437
        %v2450 = vshrl.u32 920167782, %v2438
        %v2451 = vor.u32 %v2449, %v2450
        %v2452 = vshll.u32 920167782, %v2437
        %v2453 = vshrl.u32 1326507024, %v2438
        %v2454 = vor.u32 %v2452, %v2453
        %vm2455 = vcmp.lt.s32.totalorder %v2436, 1
        %vm2456 = vcmp.lt.s32.totalorder %v2436, 2
        %vm2457 = vcmp.lt.s32.totalorder %v2436, 3
        %vm2458 = vcmp.lt.s32.totalorder %v2436, 4
        %v2459 = vsel %vm2455, %v2439, %v2442
        %v2460 = vsel %vm2458, %v2448, 2102212464
        %v2461 = vsel %vm2457, %v2445, %v2460
        %v2462 = vsel %vm2456, %v2459, %v2461
        %v2463 = vsel %vm2455, %v2442, %v2445
        %v2464 = vsel %vm2458, %v2451, 920167782
        %v2465 = vsel %vm2457, %v2448, %v2464
        %v2466 = vsel %vm2456, %v2463, %v2465
        %v2467 = vsel %vm2455, %v2445, %v2448
        %v2468 = vsel %vm2458, %v2454, 1326507024
        %v2469 = vsel %vm2457, %v2451, %v2468
        %v2470 = vsel %vm2456, %v2467, %v2469
        %v2471 = vshll.u32 %v2431, 8
        %v2472 = vmul.u32.u64.compose %v2471, %v2470
        %v2473 = vextract.low.u32 %v2472
        %v2474 = vextract.high.u32 %v2472
        %v2475 = vmul.u32.u64.compose %v2471, %v2466
        %v2476 = vextract.low.u32 %v2475
        %v2477 = vextract.high.u32 %v2475
        %v2478 = vmul.u32 %v2471, %v2462
        %v2479 = vadd.s32 %v2474, %v2476
        %vm2480 = vc.u32 %v2474, %v2476
        %v2481 = vadd.s32 %v2477, 1
        %v2482 = vsel %vm2480, %v2481, %v2477
        %v2483 = vadd.s32 %v2478, %v2482
        %v2484 = vadd.s32 %v2483, 536870912
        %v2485 = vshrl.u32 %v2484, 30
        %v2486 = vshll.u32 %v2485, 30
        %v2487 = vsub.s32 %v2483, %v2486
        %vm2488 = vcmp.lt.s32.totalorder %v2487, 0
        %v2489 = vsub.s32 0, %v2487
        %v2490 = vsel %vm2488, %v2489, %v2487
        %v2491 = vclz %v2490
        %v2492 = vsub.s32 %v2491, 2
        %vm2493 = vcmp.gt.s32.totalorder 0, %v2492
        %v2494 = vsel %vm2493, 0, %v2492
        %v2495 = vsub.s32 32, %v2494
        %v2496 = vshll.u32 %v2487, %v2494
        %v2497 = vshrl.u32 %v2479, %v2495
        %v2498 = vor.u32 %v2496, %v2497
        %v2499 = vsub.s32 4294967266, %v2494
        %v2500 = vadd.s32 %v2499, 127
        %v2501 = vshll.u32 %v2500, 23
        %v2502 = vor.u32 4788187, %v2501
        %v2503 = vand.u32 2147483647, %v2502
        %v2505 = vcvt.s32.f32 %v2498
        %v2506 = vmul.f32 %v2505, %v2503
        %v2507 = vxor.u32 %v2506, 2147483648
        %v2508 = vsel %vm2425, %v2507, %v2506
        %v2509 = vsub.s32 4, %v2485
        %v2510 = vsel %vm2425, %v2509, %v2485
        %v2511 = vsel %vm2424, %v483, %v2508
        %v2512 = vsel %vm2424, 0, %v2510
        %v2513 = vcosq.f32.pop %v2511
        %v2514 = vsinq.f32.pop %v2511
        %vm2515 = vweird.f32 %v483
        %v2516 = vadd.s32 %v2512, 3
        %v2517 = vand.u32 %v2516, 3
        %vm2518 = vcmp.lt.s32.totalorder %v2517, 2
        %vm2519 = vcmp.eq.s32.totalorder %v2517, 0
        %v2520 = vxor.u32 %v2514, 2147483648
        %v2521 = vsel %vm2519, %v2513, %v2520
        %vm2522 = vcmp.eq.s32.totalorder %v2517, 2
        %v2523 = vxor.u32 %v2513, 2147483648
        %v2524 = vsel %vm2522, %v2523, %v2514
        %v2525 = vsel %vm2518, %v2521, %v2524
        %v2526 = vsel %vm2515, nan, %v2525
        %v2527 = vand.u32 2147483647, %v488
        %vm2528 = vcmp.le.f32.partialorder %v2527, 0.7853982
        %vm2529 = vcmp.lt.s32.totalorder %v488, 0
        %v2530 = vand.u32 %v488, 2139095040
        %v2531 = vshrl.u32 %v2530, 23
        %v2532 = vsub.s32 %v2531, 127
        %v2533 = vand.u32 2147483647, %v488
        %v2534 = vand.u32 %v2533, 8388607
        %v2535 = vor.u32 %v2534, 8388608
        %v2536 = vsub.s32 0, %v2535
        %v2537 = vadd.s32 %v2532, 1
        %vm2538 = vcmp.gt.s32.totalorder %v2537, 0
        %v2539 = vsel %vm2538, %v2537, 0
        %v2540 = vshrl.u32 %v2539, 5
        %v2541 = vand.u32 %v2539, 31
        %v2542 = vsub.s32 32, %v2541
        %v2543 = vshrl.u32 683565275, %v2542
        %v2544 = vshll.u32 683565275, %v2541
        %v2545 = vshrl.u32 2475754826, %v2542
        %v2546 = vor.u32 %v2544, %v2545
        %v2547 = vshll.u32 2475754826, %v2541
        %v2548 = vshrl.u32 2131351028, %v2542
        %v2549 = vor.u32 %v2547, %v2548
        %v2550 = vshll.u32 2131351028, %v2541
        %v2551 = vshrl.u32 2102212464, %v2542
        %v2552 = vor.u32 %v2550, %v2551
        %v2553 = vshll.u32 2102212464, %v2541
        %v2554 = vshrl.u32 920167782, %v2542
        %v2555 = vor.u32 %v2553, %v2554
        %v2556 = vshll.u32 920167782, %v2541
        %v2557 = vshrl.u32 1326507024, %v2542
        %v2558 = vor.u32 %v2556, %v2557
        %vm2559 = vcmp.lt.s32.totalorder %v2540, 1
        %vm2560 = vcmp.lt.s32.totalorder %v2540, 2
        %vm2561 = vcmp.lt.s32.totalorder %v2540, 3
        %vm2562 = vcmp.lt.s32.totalorder %v2540, 4
        %v2563 = vsel %vm2559, %v2543, %v2546
        %v2564 = vsel %vm2562, %v2552, 2102212464
        %v2565 = vsel %vm2561, %v2549, %v2564
        %v2566 = vsel %vm2560, %v2563, %v2565
        %v2567 = vsel %vm2559, %v2546, %v2549
        %v2568 = vsel %vm2562, %v2555, 920167782
        %v2569 = vsel %vm2561, %v2552, %v2568
        %v2570 = vsel %vm2560, %v2567, %v2569
        %v2571 = vsel %vm2559, %v2549, %v2552
        %v2572 = vsel %vm2562, %v2558, 1326507024
        %v2573 = vsel %vm2561, %v2555, %v2572
        %v2574 = vsel %vm2560, %v2571, %v2573
        %v2575 = vshll.u32 %v2535, 8
        %v2576 = vmul.u32.u64.compose %v2575, %v2574
        %v2577 = vextract.low.u32 %v2576
        %v2578 = vextract.high.u32 %v2576
        %v2579 = vmul.u32.u64.compose %v2575, %v2570
        %v2580 = vextract.low.u32 %v2579
        %v2581 = vextract.high.u32 %v2579
        %v2582 = vmul.u32 %v2575, %v2566
        %v2583 = vadd.s32 %v2578, %v2580
        %vm2584 = vc.u32 %v2578, %v2580
        %v2585 = vadd.s32 %v2581, 1
        %v2586 = vsel %vm2584, %v2585, %v2581
        %v2587 = vadd.s32 %v2582, %v2586
        %v2588 = vadd.s32 %v2587, 536870912
        %v2589 = vshrl.u32 %v2588, 30
        %v2590 = vshll.u32 %v2589, 30
        %v2591 = vsub.s32 %v2587, %v2590
        %vm2592 = vcmp.lt.s32.totalorder %v2591, 0
        %v2593 = vsub.s32 0, %v2591
        %v2594 = vsel %vm2592, %v2593, %v2591
        %v2595 = vclz %v2594
        %v2596 = vsub.s32 %v2595, 2
        %vm2597 = vcmp.gt.s32.totalorder 0, %v2596
        %v2598 = vsel %vm2597, 0, %v2596
        %v2599 = vsub.s32 32, %v2598
        %v2600 = vshll.u32 %v2591, %v2598
        %v2601 = vshrl.u32 %v2583, %v2599
        %v2602 = vor.u32 %v2600, %v2601
        %v2603 = vsub.s32 4294967266, %v2598
        %v2604 = vadd.s32 %v2603, 127
        %v2605 = vshll.u32 %v2604, 23
        %v2606 = vor.u32 4788187, %v2605
        %v2607 = vand.u32 2147483647, %v2606
        %v2609 = vcvt.s32.f32 %v2602
        %v2610 = vmul.f32 %v2609, %v2607
        %v2611 = vxor.u32 %v2610, 2147483648
        %v2612 = vsel %vm2529, %v2611, %v2610
        %v2613 = vsub.s32 4, %v2589
        %v2614 = vsel %vm2529, %v2613, %v2589
        %v2615 = vsel %vm2528, %v488, %v2612
        %v2616 = vsel %vm2528, 0, %v2614
        %v2617 = vcosq.f32.pop %v2615
        %v2618 = vsinq.f32.pop %v2615
        %vm2619 = vweird.f32 %v488
        %v2620 = vadd.s32 %v2616, 3
        %v2621 = vand.u32 %v2620, 3
        %vm2622 = vcmp.lt.s32.totalorder %v2621, 2
        %vm2623 = vcmp.eq.s32.totalorder %v2621, 0
        %v2624 = vxor.u32 %v2618, 2147483648
        %v2625 = vsel %vm2623, %v2617, %v2624
        %vm2626 = vcmp.eq.s32.totalorder %v2621, 2
        %v2627 = vxor.u32 %v2617, 2147483648
        %v2628 = vsel %vm2626, %v2627, %v2618
        %v2629 = vsel %vm2622, %v2625, %v2628
        %v2630 = vsel %vm2619, nan, %v2629
        %v2631 = vand.u32 2147483647, %v493
        %vm2632 = vcmp.le.f32.partialorder %v2631, 0.7853982
        %vm2633 = vcmp.lt.s32.totalorder %v493, 0
        %v2634 = vand.u32 %v493, 2139095040
        %v2635 = vshrl.u32 %v2634, 23
        %v2636 = vsub.s32 %v2635, 127
        %v2637 = vand.u32 2147483647, %v493
        %v2638 = vand.u32 %v2637, 8388607
        %v2639 = vor.u32 %v2638, 8388608
        %v2640 = vsub.s32 0, %v2639
        %v2641 = vadd.s32 %v2636, 1
        %vm2642 = vcmp.gt.s32.totalorder %v2641, 0
        %v2643 = vsel %vm2642, %v2641, 0
        %v2644 = vshrl.u32 %v2643, 5
        %v2645 = vand.u32 %v2643, 31
        %v2646 = vsub.s32 32, %v2645
        %v2647 = vshrl.u32 683565275, %v2646
        %v2648 = vshll.u32 683565275, %v2645
        %v2649 = vshrl.u32 2475754826, %v2646
        %v2650 = vor.u32 %v2648, %v2649
        %v2651 = vshll.u32 2475754826, %v2645
        %v2652 = vshrl.u32 2131351028, %v2646
        %v2653 = vor.u32 %v2651, %v2652
        %v2654 = vshll.u32 2131351028, %v2645
        %v2655 = vshrl.u32 2102212464, %v2646
        %v2656 = vor.u32 %v2654, %v2655
        %v2657 = vshll.u32 2102212464, %v2645
        %v2658 = vshrl.u32 920167782, %v2646
        %v2659 = vor.u32 %v2657, %v2658
        %v2660 = vshll.u32 920167782, %v2645
        %v2661 = vshrl.u32 1326507024, %v2646
        %v2662 = vor.u32 %v2660, %v2661
        %vm2663 = vcmp.lt.s32.totalorder %v2644, 1
        %vm2664 = vcmp.lt.s32.totalorder %v2644, 2
        %vm2665 = vcmp.lt.s32.totalorder %v2644, 3
        %vm2666 = vcmp.lt.s32.totalorder %v2644, 4
        %v2667 = vsel %vm2663, %v2647, %v2650
        %v2668 = vsel %vm2666, %v2656, 2102212464
        %v2669 = vsel %vm2665, %v2653, %v2668
        %v2670 = vsel %vm2664, %v2667, %v2669
        %v2671 = vsel %vm2663, %v2650, %v2653
        %v2672 = vsel %vm2666, %v2659, 920167782
        %v2673 = vsel %vm2665, %v2656, %v2672
        %v2674 = vsel %vm2664, %v2671, %v2673
        %v2675 = vsel %vm2663, %v2653, %v2656
        %v2676 = vsel %vm2666, %v2662, 1326507024
        %v2677 = vsel %vm2665, %v2659, %v2676
        %v2678 = vsel %vm2664, %v2675, %v2677
        %v2679 = vshll.u32 %v2639, 8
        %v2680 = vmul.u32.u64.compose %v2679, %v2678
        %v2681 = vextract.low.u32 %v2680
        %v2682 = vextract.high.u32 %v2680
        %v2683 = vmul.u32.u64.compose %v2679, %v2674
        %v2684 = vextract.low.u32 %v2683
        %v2685 = vextract.high.u32 %v2683
        %v2686 = vmul.u32 %v2679, %v2670
        %v2687 = vadd.s32 %v2682, %v2684
        %vm2688 = vc.u32 %v2682, %v2684
        %v2689 = vadd.s32 %v2685, 1
        %v2690 = vsel %vm2688, %v2689, %v2685
        %v2691 = vadd.s32 %v2686, %v2690
        %v2692 = vadd.s32 %v2691, 536870912
        %v2693 = vshrl.u32 %v2692, 30
        %v2694 = vshll.u32 %v2693, 30
        %v2695 = vsub.s32 %v2691, %v2694
        %vm2696 = vcmp.lt.s32.totalorder %v2695, 0
        %v2697 = vsub.s32 0, %v2695
        %v2698 = vsel %vm2696, %v2697, %v2695
        %v2699 = vclz %v2698
        %v2700 = vsub.s32 %v2699, 2
        %vm2701 = vcmp.gt.s32.totalorder 0, %v2700
        %v2702 = vsel %vm2701, 0, %v2700
        %v2703 = vsub.s32 32, %v2702
        %v2704 = vshll.u32 %v2695, %v2702
        %v2705 = vshrl.u32 %v2687, %v2703
        %v2706 = vor.u32 %v2704, %v2705
        %v2707 = vsub.s32 4294967266, %v2702
        %v2708 = vadd.s32 %v2707, 127
        %v2709 = vshll.u32 %v2708, 23
        %v2710 = vor.u32 4788187, %v2709
        %v2711 = vand.u32 2147483647, %v2710
        %v2713 = vcvt.s32.f32 %v2706
        %v2714 = vmul.f32 %v2713, %v2711
        %v2715 = vxor.u32 %v2714, 2147483648
        %v2716 = vsel %vm2633, %v2715, %v2714
        %v2717 = vsub.s32 4, %v2693
        %v2718 = vsel %vm2633, %v2717, %v2693
        %v2719 = vsel %vm2632, %v493, %v2716
        %v2720 = vsel %vm2632, 0, %v2718
        %v2721 = vcosq.f32.pop %v2719
        %v2722 = vsinq.f32.pop %v2719
        %vm2723 = vweird.f32 %v493
        %v2724 = vadd.s32 %v2720, 3
        %v2725 = vand.u32 %v2724, 3
        %vm2726 = vcmp.lt.s32.totalorder %v2725, 2
        %vm2727 = vcmp.eq.s32.totalorder %v2725, 0
        %v2728 = vxor.u32 %v2722, 2147483648
        %v2729 = vsel %vm2727, %v2721, %v2728
        %vm2730 = vcmp.eq.s32.totalorder %v2725, 2
        %v2731 = vxor.u32 %v2721, 2147483648
        %v2732 = vsel %vm2730, %v2731, %v2722
        %v2733 = vsel %vm2726, %v2729, %v2732
        %v2734 = vsel %vm2723, nan, %v2733
        %v2735 = vand.u32 2147483647, %v498
        %vm2736 = vcmp.le.f32.partialorder %v2735, 0.7853982
        %vm2737 = vcmp.lt.s32.totalorder %v498, 0
        %v2738 = vand.u32 %v498, 2139095040
        %v2739 = vshrl.u32 %v2738, 23
        %v2740 = vsub.s32 %v2739, 127
        %v2741 = vand.u32 2147483647, %v498
        %v2742 = vand.u32 %v2741, 8388607
        %v2743 = vor.u32 %v2742, 8388608
        %v2744 = vsub.s32 0, %v2743
        %v2745 = vadd.s32 %v2740, 1
        %vm2746 = vcmp.gt.s32.totalorder %v2745, 0
        %v2747 = vsel %vm2746, %v2745, 0
        %v2748 = vshrl.u32 %v2747, 5
        %v2749 = vand.u32 %v2747, 31
        %v2750 = vsub.s32 32, %v2749
        %v2751 = vshrl.u32 683565275, %v2750
        %v2752 = vshll.u32 683565275, %v2749
        %v2753 = vshrl.u32 2475754826, %v2750
        %v2754 = vor.u32 %v2752, %v2753
        %v2755 = vshll.u32 2475754826, %v2749
        %v2756 = vshrl.u32 2131351028, %v2750
        %v2757 = vor.u32 %v2755, %v2756
        %v2758 = vshll.u32 2131351028, %v2749
        %v2759 = vshrl.u32 2102212464, %v2750
        %v2760 = vor.u32 %v2758, %v2759
        %v2761 = vshll.u32 2102212464, %v2749
        %v2762 = vshrl.u32 920167782, %v2750
        %v2763 = vor.u32 %v2761, %v2762
        %v2764 = vshll.u32 920167782, %v2749
        %v2765 = vshrl.u32 1326507024, %v2750
        %v2766 = vor.u32 %v2764, %v2765
        %vm2767 = vcmp.lt.s32.totalorder %v2748, 1
        %vm2768 = vcmp.lt.s32.totalorder %v2748, 2
        %vm2769 = vcmp.lt.s32.totalorder %v2748, 3
        %vm2770 = vcmp.lt.s32.totalorder %v2748, 4
        %v2771 = vsel %vm2767, %v2751, %v2754
        %v2772 = vsel %vm2770, %v2760, 2102212464
        %v2773 = vsel %vm2769, %v2757, %v2772
        %v2774 = vsel %vm2768, %v2771, %v2773
        %v2775 = vsel %vm2767, %v2754, %v2757
        %v2776 = vsel %vm2770, %v2763, 920167782
        %v2777 = vsel %vm2769, %v2760, %v2776
        %v2778 = vsel %vm2768, %v2775, %v2777
        %v2779 = vsel %vm2767, %v2757, %v2760
        %v2780 = vsel %vm2770, %v2766, 1326507024
        %v2781 = vsel %vm2769, %v2763, %v2780
        %v2782 = vsel %vm2768, %v2779, %v2781
        %v2783 = vshll.u32 %v2743, 8
        %v2784 = vmul.u32.u64.compose %v2783, %v2782
        %v2785 = vextract.low.u32 %v2784
        %v2786 = vextract.high.u32 %v2784
        %v2787 = vmul.u32.u64.compose %v2783, %v2778
        %v2788 = vextract.low.u32 %v2787
        %v2789 = vextract.high.u32 %v2787
        %v2790 = vmul.u32 %v2783, %v2774
        %v2791 = vadd.s32 %v2786, %v2788
        %vm2792 = vc.u32 %v2786, %v2788
        %v2793 = vadd.s32 %v2789, 1
        %v2794 = vsel %vm2792, %v2793, %v2789
        %v2795 = vadd.s32 %v2790, %v2794
        %v2796 = vadd.s32 %v2795, 536870912
        %v2797 = vshrl.u32 %v2796, 30
        %v2798 = vshll.u32 %v2797, 30
        %v2799 = vsub.s32 %v2795, %v2798
        %vm2800 = vcmp.lt.s32.totalorder %v2799, 0
        %v2801 = vsub.s32 0, %v2799
        %v2802 = vsel %vm2800, %v2801, %v2799
        %v2803 = vclz %v2802
        %v2804 = vsub.s32 %v2803, 2
        %vm2805 = vcmp.gt.s32.totalorder 0, %v2804
        %v2806 = vsel %vm2805, 0, %v2804
        %v2807 = vsub.s32 32, %v2806
        %v2808 = vshll.u32 %v2799, %v2806
        %v2809 = vshrl.u32 %v2791, %v2807
        %v2810 = vor.u32 %v2808, %v2809
        %v2811 = vsub.s32 4294967266, %v2806
        %v2812 = vadd.s32 %v2811, 127
        %v2813 = vshll.u32 %v2812, 23
        %v2814 = vor.u32 4788187, %v2813
        %v2815 = vand.u32 2147483647, %v2814
        %v2817 = vcvt.s32.f32 %v2810
        %v2818 = vmul.f32 %v2817, %v2815
        %v2819 = vxor.u32 %v2818, 2147483648
        %v2820 = vsel %vm2737, %v2819, %v2818
        %v2821 = vsub.s32 4, %v2797
        %v2822 = vsel %vm2737, %v2821, %v2797
        %v2823 = vsel %vm2736, %v498, %v2820
        %v2824 = vsel %vm2736, 0, %v2822
        %v2825 = vcosq.f32.pop %v2823
        %v2826 = vsinq.f32.pop %v2823
        %vm2827 = vweird.f32 %v498
        %v2828 = vadd.s32 %v2824, 3
        %v2829 = vand.u32 %v2828, 3
        %vm2830 = vcmp.lt.s32.totalorder %v2829, 2
        %vm2831 = vcmp.eq.s32.totalorder %v2829, 0
        %v2832 = vxor.u32 %v2826, 2147483648
        %v2833 = vsel %vm2831, %v2825, %v2832
        %vm2834 = vcmp.eq.s32.totalorder %v2829, 2
        %v2835 = vxor.u32 %v2825, 2147483648
        %v2836 = vsel %vm2834, %v2835, %v2826
        %v2837 = vsel %vm2830, %v2833, %v2836
        %v2838 = vsel %vm2827, nan, %v2837
        %v2839 = vand.u32 2147483647, %v503
        %vm2840 = vcmp.le.f32.partialorder %v2839, 0.7853982
        %vm2841 = vcmp.lt.s32.totalorder %v503, 0
        %v2842 = vand.u32 %v503, 2139095040
        %v2843 = vshrl.u32 %v2842, 23
        %v2844 = vsub.s32 %v2843, 127
        %v2845 = vand.u32 2147483647, %v503
        %v2846 = vand.u32 %v2845, 8388607
        %v2847 = vor.u32 %v2846, 8388608
        %v2848 = vsub.s32 0, %v2847
        %v2849 = vadd.s32 %v2844, 1
        %vm2850 = vcmp.gt.s32.totalorder %v2849, 0
        %v2851 = vsel %vm2850, %v2849, 0
        %v2852 = vshrl.u32 %v2851, 5
        %v2853 = vand.u32 %v2851, 31
        %v2854 = vsub.s32 32, %v2853
        %v2855 = vshrl.u32 683565275, %v2854
        %v2856 = vshll.u32 683565275, %v2853
        %v2857 = vshrl.u32 2475754826, %v2854
        %v2858 = vor.u32 %v2856, %v2857
        %v2859 = vshll.u32 2475754826, %v2853
        %v2860 = vshrl.u32 2131351028, %v2854
        %v2861 = vor.u32 %v2859, %v2860
        %v2862 = vshll.u32 2131351028, %v2853
        %v2863 = vshrl.u32 2102212464, %v2854
        %v2864 = vor.u32 %v2862, %v2863
        %v2865 = vshll.u32 2102212464, %v2853
        %v2866 = vshrl.u32 920167782, %v2854
        %v2867 = vor.u32 %v2865, %v2866
        %v2868 = vshll.u32 920167782, %v2853
        %v2869 = vshrl.u32 1326507024, %v2854
        %v2870 = vor.u32 %v2868, %v2869
        %vm2871 = vcmp.lt.s32.totalorder %v2852, 1
        %vm2872 = vcmp.lt.s32.totalorder %v2852, 2
        %vm2873 = vcmp.lt.s32.totalorder %v2852, 3
        %vm2874 = vcmp.lt.s32.totalorder %v2852, 4
        %v2875 = vsel %vm2871, %v2855, %v2858
        %v2876 = vsel %vm2874, %v2864, 2102212464
        %v2877 = vsel %vm2873, %v2861, %v2876
        %v2878 = vsel %vm2872, %v2875, %v2877
        %v2879 = vsel %vm2871, %v2858, %v2861
        %v2880 = vsel %vm2874, %v2867, 920167782
        %v2881 = vsel %vm2873, %v2864, %v2880
        %v2882 = vsel %vm2872, %v2879, %v2881
        %v2883 = vsel %vm2871, %v2861, %v2864
        %v2884 = vsel %vm2874, %v2870, 1326507024
        %v2885 = vsel %vm2873, %v2867, %v2884
        %v2886 = vsel %vm2872, %v2883, %v2885
        %v2887 = vshll.u32 %v2847, 8
        %v2888 = vmul.u32.u64.compose %v2887, %v2886
        %v2889 = vextract.low.u32 %v2888
        %v2890 = vextract.high.u32 %v2888
        %v2891 = vmul.u32.u64.compose %v2887, %v2882
        %v2892 = vextract.low.u32 %v2891
        %v2893 = vextract.high.u32 %v2891
        %v2894 = vmul.u32 %v2887, %v2878
        %v2895 = vadd.s32 %v2890, %v2892
        %vm2896 = vc.u32 %v2890, %v2892
        %v2897 = vadd.s32 %v2893, 1
        %v2898 = vsel %vm2896, %v2897, %v2893
        %v2899 = vadd.s32 %v2894, %v2898
        %v2900 = vadd.s32 %v2899, 536870912
        %v2901 = vshrl.u32 %v2900, 30
        %v2902 = vshll.u32 %v2901, 30
        %v2903 = vsub.s32 %v2899, %v2902
        %vm2904 = vcmp.lt.s32.totalorder %v2903, 0
        %v2905 = vsub.s32 0, %v2903
        %v2906 = vsel %vm2904, %v2905, %v2903
        %v2907 = vclz %v2906
        %v2908 = vsub.s32 %v2907, 2
        %vm2909 = vcmp.gt.s32.totalorder 0, %v2908
        %v2910 = vsel %vm2909, 0, %v2908
        %v2911 = vsub.s32 32, %v2910
        %v2912 = vshll.u32 %v2903, %v2910
        %v2913 = vshrl.u32 %v2895, %v2911
        %v2914 = vor.u32 %v2912, %v2913
        %v2915 = vsub.s32 4294967266, %v2910
        %v2916 = vadd.s32 %v2915, 127
        %v2917 = vshll.u32 %v2916, 23
        %v2918 = vor.u32 4788187, %v2917
        %v2919 = vand.u32 2147483647, %v2918
        %v2921 = vcvt.s32.f32 %v2914
        %v2922 = vmul.f32 %v2921, %v2919
        %v2923 = vxor.u32 %v2922, 2147483648
        %v2924 = vsel %vm2841, %v2923, %v2922
        %v2925 = vsub.s32 4, %v2901
        %v2926 = vsel %vm2841, %v2925, %v2901
        %v2927 = vsel %vm2840, %v503, %v2924
        %v2928 = vsel %vm2840, 0, %v2926
        %v2929 = vcosq.f32.pop %v2927
        %v2930 = vsinq.f32.pop %v2927
        %vm2931 = vweird.f32 %v503
        %v2932 = vadd.s32 %v2928, 3
        %v2933 = vand.u32 %v2932, 3
        %vm2934 = vcmp.lt.s32.totalorder %v2933, 2
        %vm2935 = vcmp.eq.s32.totalorder %v2933, 0
        %v2936 = vxor.u32 %v2930, 2147483648
        %v2937 = vsel %vm2935, %v2929, %v2936
        %vm2938 = vcmp.eq.s32.totalorder %v2933, 2
        %v2939 = vxor.u32 %v2929, 2147483648
        %v2940 = vsel %vm2938, %v2939, %v2930
        %v2941 = vsel %vm2934, %v2937, %v2940
        %v2942 = vsel %vm2931, nan, %v2941
        %v2943 = vand.u32 2147483647, %v508
        %vm2944 = vcmp.le.f32.partialorder %v2943, 0.7853982
        %vm2945 = vcmp.lt.s32.totalorder %v508, 0
        %v2946 = vand.u32 %v508, 2139095040
        %v2947 = vshrl.u32 %v2946, 23
        %v2948 = vsub.s32 %v2947, 127
        %v2949 = vand.u32 2147483647, %v508
        %v2950 = vand.u32 %v2949, 8388607
        %v2951 = vor.u32 %v2950, 8388608
        %v2952 = vsub.s32 0, %v2951
        %v2953 = vadd.s32 %v2948, 1
        %vm2954 = vcmp.gt.s32.totalorder %v2953, 0
        %v2955 = vsel %vm2954, %v2953, 0
        %v2956 = vshrl.u32 %v2955, 5
        %v2957 = vand.u32 %v2955, 31
        %v2958 = vsub.s32 32, %v2957
        %v2959 = vshrl.u32 683565275, %v2958
        %v2960 = vshll.u32 683565275, %v2957
        %v2961 = vshrl.u32 2475754826, %v2958
        %v2962 = vor.u32 %v2960, %v2961
        %v2963 = vshll.u32 2475754826, %v2957
        %v2964 = vshrl.u32 2131351028, %v2958
        %v2965 = vor.u32 %v2963, %v2964
        %v2966 = vshll.u32 2131351028, %v2957
        %v2967 = vshrl.u32 2102212464, %v2958
        %v2968 = vor.u32 %v2966, %v2967
        %v2969 = vshll.u32 2102212464, %v2957
        %v2970 = vshrl.u32 920167782, %v2958
        %v2971 = vor.u32 %v2969, %v2970
        %v2972 = vshll.u32 920167782, %v2957
        %v2973 = vshrl.u32 1326507024, %v2958
        %v2974 = vor.u32 %v2972, %v2973
        %vm2975 = vcmp.lt.s32.totalorder %v2956, 1
        %vm2976 = vcmp.lt.s32.totalorder %v2956, 2
        %vm2977 = vcmp.lt.s32.totalorder %v2956, 3
        %vm2978 = vcmp.lt.s32.totalorder %v2956, 4
        %v2979 = vsel %vm2975, %v2959, %v2962
        %v2980 = vsel %vm2978, %v2968, 2102212464
        %v2981 = vsel %vm2977, %v2965, %v2980
        %v2982 = vsel %vm2976, %v2979, %v2981
        %v2983 = vsel %vm2975, %v2962, %v2965
        %v2984 = vsel %vm2978, %v2971, 920167782
        %v2985 = vsel %vm2977, %v2968, %v2984
        %v2986 = vsel %vm2976, %v2983, %v2985
        %v2987 = vsel %vm2975, %v2965, %v2968
        %v2988 = vsel %vm2978, %v2974, 1326507024
        %v2989 = vsel %vm2977, %v2971, %v2988
        %v2990 = vsel %vm2976, %v2987, %v2989
        %v2991 = vshll.u32 %v2951, 8
        %v2992 = vmul.u32.u64.compose %v2991, %v2990
        %v2993 = vextract.low.u32 %v2992
        %v2994 = vextract.high.u32 %v2992
        %v2995 = vmul.u32.u64.compose %v2991, %v2986
        %v2996 = vextract.low.u32 %v2995
        %v2997 = vextract.high.u32 %v2995
        %v2998 = vmul.u32 %v2991, %v2982
        %v2999 = vadd.s32 %v2994, %v2996
        %vm3000 = vc.u32 %v2994, %v2996
        %v3001 = vadd.s32 %v2997, 1
        %v3002 = vsel %vm3000, %v3001, %v2997
        %v3003 = vadd.s32 %v2998, %v3002
        %v3004 = vadd.s32 %v3003, 536870912
        %v3005 = vshrl.u32 %v3004, 30
        %v3006 = vshll.u32 %v3005, 30
        %v3007 = vsub.s32 %v3003, %v3006
        %vm3008 = vcmp.lt.s32.totalorder %v3007, 0
        %v3009 = vsub.s32 0, %v3007
        %v3010 = vsel %vm3008, %v3009, %v3007
        %v3011 = vclz %v3010
        %v3012 = vsub.s32 %v3011, 2
        %vm3013 = vcmp.gt.s32.totalorder 0, %v3012
        %v3014 = vsel %vm3013, 0, %v3012
        %v3015 = vsub.s32 32, %v3014
        %v3016 = vshll.u32 %v3007, %v3014
        %v3017 = vshrl.u32 %v2999, %v3015
        %v3018 = vor.u32 %v3016, %v3017
        %v3019 = vsub.s32 4294967266, %v3014
        %v3020 = vadd.s32 %v3019, 127
        %v3021 = vshll.u32 %v3020, 23
        %v3022 = vor.u32 4788187, %v3021
        %v3023 = vand.u32 2147483647, %v3022
        %v3025 = vcvt.s32.f32 %v3018
        %v3026 = vmul.f32 %v3025, %v3023
        %v3027 = vxor.u32 %v3026, 2147483648
        %v3028 = vsel %vm2945, %v3027, %v3026
        %v3029 = vsub.s32 4, %v3005
        %v3030 = vsel %vm2945, %v3029, %v3005
        %v3031 = vsel %vm2944, %v508, %v3028
        %v3032 = vsel %vm2944, 0, %v3030
        %v3033 = vcosq.f32.pop %v3031
        %v3034 = vsinq.f32.pop %v3031
        %vm3035 = vweird.f32 %v508
        %v3036 = vadd.s32 %v3032, 3
        %v3037 = vand.u32 %v3036, 3
        %vm3038 = vcmp.lt.s32.totalorder %v3037, 2
        %vm3039 = vcmp.eq.s32.totalorder %v3037, 0
        %v3040 = vxor.u32 %v3034, 2147483648
        %v3041 = vsel %vm3039, %v3033, %v3040
        %vm3042 = vcmp.eq.s32.totalorder %v3037, 2
        %v3043 = vxor.u32 %v3033, 2147483648
        %v3044 = vsel %vm3042, %v3043, %v3034
        %v3045 = vsel %vm3038, %v3041, %v3044
        %v3046 = vsel %vm3035, nan, %v3045
        %v3047 = vand.u32 2147483647, %v513
        %vm3048 = vcmp.le.f32.partialorder %v3047, 0.7853982
        %vm3049 = vcmp.lt.s32.totalorder %v513, 0
        %v3050 = vand.u32 %v513, 2139095040
        %v3051 = vshrl.u32 %v3050, 23
        %v3052 = vsub.s32 %v3051, 127
        %v3053 = vand.u32 2147483647, %v513
        %v3054 = vand.u32 %v3053, 8388607
        %v3055 = vor.u32 %v3054, 8388608
        %v3056 = vsub.s32 0, %v3055
        %v3057 = vadd.s32 %v3052, 1
        %vm3058 = vcmp.gt.s32.totalorder %v3057, 0
        %v3059 = vsel %vm3058, %v3057, 0
        %v3060 = vshrl.u32 %v3059, 5
        %v3061 = vand.u32 %v3059, 31
        %v3062 = vsub.s32 32, %v3061
        %v3063 = vshrl.u32 683565275, %v3062
        %v3064 = vshll.u32 683565275, %v3061
        %v3065 = vshrl.u32 2475754826, %v3062
        %v3066 = vor.u32 %v3064, %v3065
        %v3067 = vshll.u32 2475754826, %v3061
        %v3068 = vshrl.u32 2131351028, %v3062
        %v3069 = vor.u32 %v3067, %v3068
        %v3070 = vshll.u32 2131351028, %v3061
        %v3071 = vshrl.u32 2102212464, %v3062
        %v3072 = vor.u32 %v3070, %v3071
        %v3073 = vshll.u32 2102212464, %v3061
        %v3074 = vshrl.u32 920167782, %v3062
        %v3075 = vor.u32 %v3073, %v3074
        %v3076 = vshll.u32 920167782, %v3061
        %v3077 = vshrl.u32 1326507024, %v3062
        %v3078 = vor.u32 %v3076, %v3077
        %vm3079 = vcmp.lt.s32.totalorder %v3060, 1
        %vm3080 = vcmp.lt.s32.totalorder %v3060, 2
        %vm3081 = vcmp.lt.s32.totalorder %v3060, 3
        %vm3082 = vcmp.lt.s32.totalorder %v3060, 4
        %v3083 = vsel %vm3079, %v3063, %v3066
        %v3084 = vsel %vm3082, %v3072, 2102212464
        %v3085 = vsel %vm3081, %v3069, %v3084
        %v3086 = vsel %vm3080, %v3083, %v3085
        %v3087 = vsel %vm3079, %v3066, %v3069
        %v3088 = vsel %vm3082, %v3075, 920167782
        %v3089 = vsel %vm3081, %v3072, %v3088
        %v3090 = vsel %vm3080, %v3087, %v3089
        %v3091 = vsel %vm3079, %v3069, %v3072
        %v3092 = vsel %vm3082, %v3078, 1326507024
        %v3093 = vsel %vm3081, %v3075, %v3092
        %v3094 = vsel %vm3080, %v3091, %v3093
        %v3095 = vshll.u32 %v3055, 8
        %v3096 = vmul.u32.u64.compose %v3095, %v3094
        %v3097 = vextract.low.u32 %v3096
        %v3098 = vextract.high.u32 %v3096
        %v3099 = vmul.u32.u64.compose %v3095, %v3090
        %v3100 = vextract.low.u32 %v3099
        %v3101 = vextract.high.u32 %v3099
        %v3102 = vmul.u32 %v3095, %v3086
        %v3103 = vadd.s32 %v3098, %v3100
        %vm3104 = vc.u32 %v3098, %v3100
        %v3105 = vadd.s32 %v3101, 1
        %v3106 = vsel %vm3104, %v3105, %v3101
        %v3107 = vadd.s32 %v3102, %v3106
        %v3108 = vadd.s32 %v3107, 536870912
        %v3109 = vshrl.u32 %v3108, 30
        %v3110 = vshll.u32 %v3109, 30
        %v3111 = vsub.s32 %v3107, %v3110
        %vm3112 = vcmp.lt.s32.totalorder %v3111, 0
        %v3113 = vsub.s32 0, %v3111
        %v3114 = vsel %vm3112, %v3113, %v3111
        %v3115 = vclz %v3114
        %v3116 = vsub.s32 %v3115, 2
        %vm3117 = vcmp.gt.s32.totalorder 0, %v3116
        %v3118 = vsel %vm3117, 0, %v3116
        %v3119 = vsub.s32 32, %v3118
        %v3120 = vshll.u32 %v3111, %v3118
        %v3121 = vshrl.u32 %v3103, %v3119
        %v3122 = vor.u32 %v3120, %v3121
        %v3123 = vsub.s32 4294967266, %v3118
        %v3124 = vadd.s32 %v3123, 127
        %v3125 = vshll.u32 %v3124, 23
        %v3126 = vor.u32 4788187, %v3125
        %v3127 = vand.u32 2147483647, %v3126
        %v3129 = vcvt.s32.f32 %v3122
        %v3130 = vmul.f32 %v3129, %v3127
        %v3131 = vxor.u32 %v3130, 2147483648
        %v3132 = vsel %vm3049, %v3131, %v3130
        %v3133 = vsub.s32 4, %v3109
        %v3134 = vsel %vm3049, %v3133, %v3109
        %v3135 = vsel %vm3048, %v513, %v3132
        %v3136 = vsel %vm3048, 0, %v3134
        %v3137 = vcosq.f32.pop %v3135
        %v3138 = vsinq.f32.pop %v3135
        %vm3139 = vweird.f32 %v513
        %v3140 = vadd.s32 %v3136, 3
        %v3141 = vand.u32 %v3140, 3
        %vm3142 = vcmp.lt.s32.totalorder %v3141, 2
        %vm3143 = vcmp.eq.s32.totalorder %v3141, 0
        %v3144 = vxor.u32 %v3138, 2147483648
        %v3145 = vsel %vm3143, %v3137, %v3144
        %vm3146 = vcmp.eq.s32.totalorder %v3141, 2
        %v3147 = vxor.u32 %v3137, 2147483648
        %v3148 = vsel %vm3146, %v3147, %v3138
        %v3149 = vsel %vm3142, %v3145, %v3148
        %v3150 = vsel %vm3139, nan, %v3149
        %v3151 = vand.u32 2147483647, %v518
        %vm3152 = vcmp.le.f32.partialorder %v3151, 0.7853982
        %vm3153 = vcmp.lt.s32.totalorder %v518, 0
        %v3154 = vand.u32 %v518, 2139095040
        %v3155 = vshrl.u32 %v3154, 23
        %v3156 = vsub.s32 %v3155, 127
        %v3157 = vand.u32 2147483647, %v518
        %v3158 = vand.u32 %v3157, 8388607
        %v3159 = vor.u32 %v3158, 8388608
        %v3160 = vsub.s32 0, %v3159
        %v3161 = vadd.s32 %v3156, 1
        %vm3162 = vcmp.gt.s32.totalorder %v3161, 0
        %v3163 = vsel %vm3162, %v3161, 0
        %v3164 = vshrl.u32 %v3163, 5
        %v3165 = vand.u32 %v3163, 31
        %v3166 = vsub.s32 32, %v3165
        %v3167 = vshrl.u32 683565275, %v3166
        %v3168 = vshll.u32 683565275, %v3165
        %v3169 = vshrl.u32 2475754826, %v3166
        %v3170 = vor.u32 %v3168, %v3169
        %v3171 = vshll.u32 2475754826, %v3165
        %v3172 = vshrl.u32 2131351028, %v3166
        %v3173 = vor.u32 %v3171, %v3172
        %v3174 = vshll.u32 2131351028, %v3165
        %v3175 = vshrl.u32 2102212464, %v3166
        %v3176 = vor.u32 %v3174, %v3175
        %v3177 = vshll.u32 2102212464, %v3165
        %v3178 = vshrl.u32 920167782, %v3166
        %v3179 = vor.u32 %v3177, %v3178
        %v3180 = vshll.u32 920167782, %v3165
        %v3181 = vshrl.u32 1326507024, %v3166
        %v3182 = vor.u32 %v3180, %v3181
        %vm3183 = vcmp.lt.s32.totalorder %v3164, 1
        %vm3184 = vcmp.lt.s32.totalorder %v3164, 2
        %vm3185 = vcmp.lt.s32.totalorder %v3164, 3
        %vm3186 = vcmp.lt.s32.totalorder %v3164, 4
        %v3187 = vsel %vm3183, %v3167, %v3170
        %v3188 = vsel %vm3186, %v3176, 2102212464
        %v3189 = vsel %vm3185, %v3173, %v3188
        %v3190 = vsel %vm3184, %v3187, %v3189
        %v3191 = vsel %vm3183, %v3170, %v3173
        %v3192 = vsel %vm3186, %v3179, 920167782
        %v3193 = vsel %vm3185, %v3176, %v3192
        %v3194 = vsel %vm3184, %v3191, %v3193
        %v3195 = vsel %vm3183, %v3173, %v3176
        %v3196 = vsel %vm3186, %v3182, 1326507024
        %v3197 = vsel %vm3185, %v3179, %v3196
        %v3198 = vsel %vm3184, %v3195, %v3197
        %v3199 = vshll.u32 %v3159, 8
        %v3200 = vmul.u32.u64.compose %v3199, %v3198
        %v3201 = vextract.low.u32 %v3200
        %v3202 = vextract.high.u32 %v3200
        %v3203 = vmul.u32.u64.compose %v3199, %v3194
        %v3204 = vextract.low.u32 %v3203
        %v3205 = vextract.high.u32 %v3203
        %v3206 = vmul.u32 %v3199, %v3190
        %v3207 = vadd.s32 %v3202, %v3204
        %vm3208 = vc.u32 %v3202, %v3204
        %v3209 = vadd.s32 %v3205, 1
        %v3210 = vsel %vm3208, %v3209, %v3205
        %v3211 = vadd.s32 %v3206, %v3210
        %v3212 = vadd.s32 %v3211, 536870912
        %v3213 = vshrl.u32 %v3212, 30
        %v3214 = vshll.u32 %v3213, 30
        %v3215 = vsub.s32 %v3211, %v3214
        %vm3216 = vcmp.lt.s32.totalorder %v3215, 0
        %v3217 = vsub.s32 0, %v3215
        %v3218 = vsel %vm3216, %v3217, %v3215
        %v3219 = vclz %v3218
        %v3220 = vsub.s32 %v3219, 2
        %vm3221 = vcmp.gt.s32.totalorder 0, %v3220
        %v3222 = vsel %vm3221, 0, %v3220
        %v3223 = vsub.s32 32, %v3222
        %v3224 = vshll.u32 %v3215, %v3222
        %v3225 = vshrl.u32 %v3207, %v3223
        %v3226 = vor.u32 %v3224, %v3225
        %v3227 = vsub.s32 4294967266, %v3222
        %v3228 = vadd.s32 %v3227, 127
        %v3229 = vshll.u32 %v3228, 23
        %v3230 = vor.u32 4788187, %v3229
        %v3231 = vand.u32 2147483647, %v3230
        %v3233 = vcvt.s32.f32 %v3226
        %v3234 = vmul.f32 %v3233, %v3231
        %v3235 = vxor.u32 %v3234, 2147483648
        %v3236 = vsel %vm3153, %v3235, %v3234
        %v3237 = vsub.s32 4, %v3213
        %v3238 = vsel %vm3153, %v3237, %v3213
        %v3239 = vsel %vm3152, %v518, %v3236
        %v3240 = vsel %vm3152, 0, %v3238
        %v3241 = vcosq.f32.pop %v3239
        %v3242 = vsinq.f32.pop %v3239
        %vm3243 = vweird.f32 %v518
        %v3244 = vadd.s32 %v3240, 3
        %v3245 = vand.u32 %v3244, 3
        %vm3246 = vcmp.lt.s32.totalorder %v3245, 2
        %vm3247 = vcmp.eq.s32.totalorder %v3245, 0
        %v3248 = vxor.u32 %v3242, 2147483648
        %v3249 = vsel %vm3247, %v3241, %v3248
        %vm3250 = vcmp.eq.s32.totalorder %v3245, 2
        %v3251 = vxor.u32 %v3241, 2147483648
        %v3252 = vsel %vm3250, %v3251, %v3242
        %v3253 = vsel %vm3246, %v3249, %v3252
        %v3254 = vsel %vm3243, nan, %v3253
        %v3255 = vand.u32 2147483647, %v523
        %vm3256 = vcmp.le.f32.partialorder %v3255, 0.7853982
        %vm3257 = vcmp.lt.s32.totalorder %v523, 0
        %v3258 = vand.u32 %v523, 2139095040
        %v3259 = vshrl.u32 %v3258, 23
        %v3260 = vsub.s32 %v3259, 127
        %v3261 = vand.u32 2147483647, %v523
        %v3262 = vand.u32 %v3261, 8388607
        %v3263 = vor.u32 %v3262, 8388608
        %v3264 = vsub.s32 0, %v3263
        %v3265 = vadd.s32 %v3260, 1
        %vm3266 = vcmp.gt.s32.totalorder %v3265, 0
        %v3267 = vsel %vm3266, %v3265, 0
        %v3268 = vshrl.u32 %v3267, 5
        %v3269 = vand.u32 %v3267, 31
        %v3270 = vsub.s32 32, %v3269
        %v3271 = vshrl.u32 683565275, %v3270
        %v3272 = vshll.u32 683565275, %v3269
        %v3273 = vshrl.u32 2475754826, %v3270
        %v3274 = vor.u32 %v3272, %v3273
        %v3275 = vshll.u32 2475754826, %v3269
        %v3276 = vshrl.u32 2131351028, %v3270
        %v3277 = vor.u32 %v3275, %v3276
        %v3278 = vshll.u32 2131351028, %v3269
        %v3279 = vshrl.u32 2102212464, %v3270
        %v3280 = vor.u32 %v3278, %v3279
        %v3281 = vshll.u32 2102212464, %v3269
        %v3282 = vshrl.u32 920167782, %v3270
        %v3283 = vor.u32 %v3281, %v3282
        %v3284 = vshll.u32 920167782, %v3269
        %v3285 = vshrl.u32 1326507024, %v3270
        %v3286 = vor.u32 %v3284, %v3285
        %vm3287 = vcmp.lt.s32.totalorder %v3268, 1
        %vm3288 = vcmp.lt.s32.totalorder %v3268, 2
        %vm3289 = vcmp.lt.s32.totalorder %v3268, 3
        %vm3290 = vcmp.lt.s32.totalorder %v3268, 4
        %v3291 = vsel %vm3287, %v3271, %v3274
        %v3292 = vsel %vm3290, %v3280, 2102212464
        %v3293 = vsel %vm3289, %v3277, %v3292
        %v3294 = vsel %vm3288, %v3291, %v3293
        %v3295 = vsel %vm3287, %v3274, %v3277
        %v3296 = vsel %vm3290, %v3283, 920167782
        %v3297 = vsel %vm3289, %v3280, %v3296
        %v3298 = vsel %vm3288, %v3295, %v3297
        %v3299 = vsel %vm3287, %v3277, %v3280
        %v3300 = vsel %vm3290, %v3286, 1326507024
        %v3301 = vsel %vm3289, %v3283, %v3300
        %v3302 = vsel %vm3288, %v3299, %v3301
        %v3303 = vshll.u32 %v3263, 8
        %v3304 = vmul.u32.u64.compose %v3303, %v3302
        %v3305 = vextract.low.u32 %v3304
        %v3306 = vextract.high.u32 %v3304
        %v3307 = vmul.u32.u64.compose %v3303, %v3298
        %v3308 = vextract.low.u32 %v3307
        %v3309 = vextract.high.u32 %v3307
        %v3310 = vmul.u32 %v3303, %v3294
        %v3311 = vadd.s32 %v3306, %v3308
        %vm3312 = vc.u32 %v3306, %v3308
        %v3313 = vadd.s32 %v3309, 1
        %v3314 = vsel %vm3312, %v3313, %v3309
        %v3315 = vadd.s32 %v3310, %v3314
        %v3316 = vadd.s32 %v3315, 536870912
        %v3317 = vshrl.u32 %v3316, 30
        %v3318 = vshll.u32 %v3317, 30
        %v3319 = vsub.s32 %v3315, %v3318
        %vm3320 = vcmp.lt.s32.totalorder %v3319, 0
        %v3321 = vsub.s32 0, %v3319
        %v3322 = vsel %vm3320, %v3321, %v3319
        %v3323 = vclz %v3322
        %v3324 = vsub.s32 %v3323, 2
        %vm3325 = vcmp.gt.s32.totalorder 0, %v3324
        %v3326 = vsel %vm3325, 0, %v3324
        %v3327 = vsub.s32 32, %v3326
        %v3328 = vshll.u32 %v3319, %v3326
        %v3329 = vshrl.u32 %v3311, %v3327
        %v3330 = vor.u32 %v3328, %v3329
        %v3331 = vsub.s32 4294967266, %v3326
        %v3332 = vadd.s32 %v3331, 127
        %v3333 = vshll.u32 %v3332, 23
        %v3334 = vor.u32 4788187, %v3333
        %v3335 = vand.u32 2147483647, %v3334
        %v3337 = vcvt.s32.f32 %v3330
        %v3338 = vmul.f32 %v3337, %v3335
        %v3339 = vxor.u32 %v3338, 2147483648
        %v3340 = vsel %vm3257, %v3339, %v3338
        %v3341 = vsub.s32 4, %v3317
        %v3342 = vsel %vm3257, %v3341, %v3317
        %v3343 = vsel %vm3256, %v523, %v3340
        %v3344 = vsel %vm3256, 0, %v3342
        %v3345 = vcosq.f32.pop %v3343
        %v3346 = vsinq.f32.pop %v3343
        %vm3347 = vweird.f32 %v523
        %v3348 = vadd.s32 %v3344, 3
        %v3349 = vand.u32 %v3348, 3
        %vm3350 = vcmp.lt.s32.totalorder %v3349, 2
        %vm3351 = vcmp.eq.s32.totalorder %v3349, 0
        %v3352 = vxor.u32 %v3346, 2147483648
        %v3353 = vsel %vm3351, %v3345, %v3352
        %vm3354 = vcmp.eq.s32.totalorder %v3349, 2
        %v3355 = vxor.u32 %v3345, 2147483648
        %v3356 = vsel %vm3354, %v3355, %v3346
        %v3357 = vsel %vm3350, %v3353, %v3356
        %v3358 = vsel %vm3347, nan, %v3357
        %v3359 = vand.u32 2147483647, %v528
        %vm3360 = vcmp.le.f32.partialorder %v3359, 0.7853982
        %vm3361 = vcmp.lt.s32.totalorder %v528, 0
        %v3362 = vand.u32 %v528, 2139095040
        %v3363 = vshrl.u32 %v3362, 23
        %v3364 = vsub.s32 %v3363, 127
        %v3365 = vand.u32 2147483647, %v528
        %v3366 = vand.u32 %v3365, 8388607
        %v3367 = vor.u32 %v3366, 8388608
        %v3368 = vsub.s32 0, %v3367
        %v3369 = vadd.s32 %v3364, 1
        %vm3370 = vcmp.gt.s32.totalorder %v3369, 0
        %v3371 = vsel %vm3370, %v3369, 0
        %v3372 = vshrl.u32 %v3371, 5
        %v3373 = vand.u32 %v3371, 31
        %v3374 = vsub.s32 32, %v3373
        %v3375 = vshrl.u32 683565275, %v3374
        %v3376 = vshll.u32 683565275, %v3373
        %v3377 = vshrl.u32 2475754826, %v3374
        %v3378 = vor.u32 %v3376, %v3377
        %v3379 = vshll.u32 2475754826, %v3373
        %v3380 = vshrl.u32 2131351028, %v3374
        %v3381 = vor.u32 %v3379, %v3380
        %v3382 = vshll.u32 2131351028, %v3373
        %v3383 = vshrl.u32 2102212464, %v3374
        %v3384 = vor.u32 %v3382, %v3383
        %v3385 = vshll.u32 2102212464, %v3373
        %v3386 = vshrl.u32 920167782, %v3374
        %v3387 = vor.u32 %v3385, %v3386
        %v3388 = vshll.u32 920167782, %v3373
        %v3389 = vshrl.u32 1326507024, %v3374
        %v3390 = vor.u32 %v3388, %v3389
        %vm3391 = vcmp.lt.s32.totalorder %v3372, 1
        %vm3392 = vcmp.lt.s32.totalorder %v3372, 2
        %vm3393 = vcmp.lt.s32.totalorder %v3372, 3
        %vm3394 = vcmp.lt.s32.totalorder %v3372, 4
        %v3395 = vsel %vm3391, %v3375, %v3378
        %v3396 = vsel %vm3394, %v3384, 2102212464
        %v3397 = vsel %vm3393, %v3381, %v3396
        %v3398 = vsel %vm3392, %v3395, %v3397
        %v3399 = vsel %vm3391, %v3378, %v3381
        %v3400 = vsel %vm3394, %v3387, 920167782
        %v3401 = vsel %vm3393, %v3384, %v3400
        %v3402 = vsel %vm3392, %v3399, %v3401
        %v3403 = vsel %vm3391, %v3381, %v3384
        %v3404 = vsel %vm3394, %v3390, 1326507024
        %v3405 = vsel %vm3393, %v3387, %v3404
        %v3406 = vsel %vm3392, %v3403, %v3405
        %v3407 = vshll.u32 %v3367, 8
        %v3408 = vmul.u32.u64.compose %v3407, %v3406
        %v3409 = vextract.low.u32 %v3408
        %v3410 = vextract.high.u32 %v3408
        %v3411 = vmul.u32.u64.compose %v3407, %v3402
        %v3412 = vextract.low.u32 %v3411
        %v3413 = vextract.high.u32 %v3411
        %v3414 = vmul.u32 %v3407, %v3398
        %v3415 = vadd.s32 %v3410, %v3412
        %vm3416 = vc.u32 %v3410, %v3412
        %v3417 = vadd.s32 %v3413, 1
        %v3418 = vsel %vm3416, %v3417, %v3413
        %v3419 = vadd.s32 %v3414, %v3418
        %v3420 = vadd.s32 %v3419, 536870912
        %v3421 = vshrl.u32 %v3420, 30
        %v3422 = vshll.u32 %v3421, 30
        %v3423 = vsub.s32 %v3419, %v3422
        %vm3424 = vcmp.lt.s32.totalorder %v3423, 0
        %v3425 = vsub.s32 0, %v3423
        %v3426 = vsel %vm3424, %v3425, %v3423
        %v3427 = vclz %v3426
        %v3428 = vsub.s32 %v3427, 2
        %vm3429 = vcmp.gt.s32.totalorder 0, %v3428
        %v3430 = vsel %vm3429, 0, %v3428
        %v3431 = vsub.s32 32, %v3430
        %v3432 = vshll.u32 %v3423, %v3430
        %v3433 = vshrl.u32 %v3415, %v3431
        %v3434 = vor.u32 %v3432, %v3433
        %v3435 = vsub.s32 4294967266, %v3430
        %v3436 = vadd.s32 %v3435, 127
        %v3437 = vshll.u32 %v3436, 23
        %v3438 = vor.u32 4788187, %v3437
        %v3439 = vand.u32 2147483647, %v3438
        %v3441 = vcvt.s32.f32 %v3434
        %v3442 = vmul.f32 %v3441, %v3439
        %v3443 = vxor.u32 %v3442, 2147483648
        %v3444 = vsel %vm3361, %v3443, %v3442
        %v3445 = vsub.s32 4, %v3421
        %v3446 = vsel %vm3361, %v3445, %v3421
        %v3447 = vsel %vm3360, %v528, %v3444
        %v3448 = vsel %vm3360, 0, %v3446
        %v3449 = vcosq.f32.pop %v3447
        %v3450 = vsinq.f32.pop %v3447
        %vm3451 = vweird.f32 %v528
        %v3452 = vadd.s32 %v3448, 3
        %v3453 = vand.u32 %v3452, 3
        %vm3454 = vcmp.lt.s32.totalorder %v3453, 2
        %vm3455 = vcmp.eq.s32.totalorder %v3453, 0
        %v3456 = vxor.u32 %v3450, 2147483648
        %v3457 = vsel %vm3455, %v3449, %v3456
        %vm3458 = vcmp.eq.s32.totalorder %v3453, 2
        %v3459 = vxor.u32 %v3449, 2147483648
        %v3460 = vsel %vm3458, %v3459, %v3450
        %v3461 = vsel %vm3454, %v3457, %v3460
        %v3462 = vsel %vm3451, nan, %v3461
        %v3463 = vand.u32 2147483647, %v533
        %vm3464 = vcmp.le.f32.partialorder %v3463, 0.7853982
        %vm3465 = vcmp.lt.s32.totalorder %v533, 0
        %v3466 = vand.u32 %v533, 2139095040
        %v3467 = vshrl.u32 %v3466, 23
        %v3468 = vsub.s32 %v3467, 127
        %v3469 = vand.u32 2147483647, %v533
        %v3470 = vand.u32 %v3469, 8388607
        %v3471 = vor.u32 %v3470, 8388608
        %v3472 = vsub.s32 0, %v3471
        %v3473 = vadd.s32 %v3468, 1
        %vm3474 = vcmp.gt.s32.totalorder %v3473, 0
        %v3475 = vsel %vm3474, %v3473, 0
        %v3476 = vshrl.u32 %v3475, 5
        %v3477 = vand.u32 %v3475, 31
        %v3478 = vsub.s32 32, %v3477
        %v3479 = vshrl.u32 683565275, %v3478
        %v3480 = vshll.u32 683565275, %v3477
        %v3481 = vshrl.u32 2475754826, %v3478
        %v3482 = vor.u32 %v3480, %v3481
        %v3483 = vshll.u32 2475754826, %v3477
        %v3484 = vshrl.u32 2131351028, %v3478
        %v3485 = vor.u32 %v3483, %v3484
        %v3486 = vshll.u32 2131351028, %v3477
        %v3487 = vshrl.u32 2102212464, %v3478
        %v3488 = vor.u32 %v3486, %v3487
        %v3489 = vshll.u32 2102212464, %v3477
        %v3490 = vshrl.u32 920167782, %v3478
        %v3491 = vor.u32 %v3489, %v3490
        %v3492 = vshll.u32 920167782, %v3477
        %v3493 = vshrl.u32 1326507024, %v3478
        %v3494 = vor.u32 %v3492, %v3493
        %vm3495 = vcmp.lt.s32.totalorder %v3476, 1
        %vm3496 = vcmp.lt.s32.totalorder %v3476, 2
        %vm3497 = vcmp.lt.s32.totalorder %v3476, 3
        %vm3498 = vcmp.lt.s32.totalorder %v3476, 4
        %v3499 = vsel %vm3495, %v3479, %v3482
        %v3500 = vsel %vm3498, %v3488, 2102212464
        %v3501 = vsel %vm3497, %v3485, %v3500
        %v3502 = vsel %vm3496, %v3499, %v3501
        %v3503 = vsel %vm3495, %v3482, %v3485
        %v3504 = vsel %vm3498, %v3491, 920167782
        %v3505 = vsel %vm3497, %v3488, %v3504
        %v3506 = vsel %vm3496, %v3503, %v3505
        %v3507 = vsel %vm3495, %v3485, %v3488
        %v3508 = vsel %vm3498, %v3494, 1326507024
        %v3509 = vsel %vm3497, %v3491, %v3508
        %v3510 = vsel %vm3496, %v3507, %v3509
        %v3511 = vshll.u32 %v3471, 8
        %v3512 = vmul.u32.u64.compose %v3511, %v3510
        %v3513 = vextract.low.u32 %v3512
        %v3514 = vextract.high.u32 %v3512
        %v3515 = vmul.u32.u64.compose %v3511, %v3506
        %v3516 = vextract.low.u32 %v3515
        %v3517 = vextract.high.u32 %v3515
        %v3518 = vmul.u32 %v3511, %v3502
        %v3519 = vadd.s32 %v3514, %v3516
        %vm3520 = vc.u32 %v3514, %v3516
        %v3521 = vadd.s32 %v3517, 1
        %v3522 = vsel %vm3520, %v3521, %v3517
        %v3523 = vadd.s32 %v3518, %v3522
        %v3524 = vadd.s32 %v3523, 536870912
        %v3525 = vshrl.u32 %v3524, 30
        %v3526 = vshll.u32 %v3525, 30
        %v3527 = vsub.s32 %v3523, %v3526
        %vm3528 = vcmp.lt.s32.totalorder %v3527, 0
        %v3529 = vsub.s32 0, %v3527
        %v3530 = vsel %vm3528, %v3529, %v3527
        %v3531 = vclz %v3530
        %v3532 = vsub.s32 %v3531, 2
        %vm3533 = vcmp.gt.s32.totalorder 0, %v3532
        %v3534 = vsel %vm3533, 0, %v3532
        %v3535 = vsub.s32 32, %v3534
        %v3536 = vshll.u32 %v3527, %v3534
        %v3537 = vshrl.u32 %v3519, %v3535
        %v3538 = vor.u32 %v3536, %v3537
        %v3539 = vsub.s32 4294967266, %v3534
        %v3540 = vadd.s32 %v3539, 127
        %v3541 = vshll.u32 %v3540, 23
        %v3542 = vor.u32 4788187, %v3541
        %v3543 = vand.u32 2147483647, %v3542
        %v3545 = vcvt.s32.f32 %v3538
        %v3546 = vmul.f32 %v3545, %v3543
        %v3547 = vxor.u32 %v3546, 2147483648
        %v3548 = vsel %vm3465, %v3547, %v3546
        %v3549 = vsub.s32 4, %v3525
        %v3550 = vsel %vm3465, %v3549, %v3525
        %v3551 = vsel %vm3464, %v533, %v3548
        %v3552 = vsel %vm3464, 0, %v3550
        %v3553 = vcosq.f32.pop %v3551
        %v3554 = vsinq.f32.pop %v3551
        %vm3555 = vweird.f32 %v533
        %v3556 = vadd.s32 %v3552, 3
        %v3557 = vand.u32 %v3556, 3
        %vm3558 = vcmp.lt.s32.totalorder %v3557, 2
        %vm3559 = vcmp.eq.s32.totalorder %v3557, 0
        %v3560 = vxor.u32 %v3554, 2147483648
        %v3561 = vsel %vm3559, %v3553, %v3560
        %vm3562 = vcmp.eq.s32.totalorder %v3557, 2
        %v3563 = vxor.u32 %v3553, 2147483648
        %v3564 = vsel %vm3562, %v3563, %v3554
        %v3565 = vsel %vm3558, %v3561, %v3564
        %v3566 = vsel %vm3555, nan, %v3565
        %v3567 = vand.u32 2147483647, %v538
        %vm3568 = vcmp.le.f32.partialorder %v3567, 0.7853982
        %vm3569 = vcmp.lt.s32.totalorder %v538, 0
        %v3570 = vand.u32 %v538, 2139095040
        %v3571 = vshrl.u32 %v3570, 23
        %v3572 = vsub.s32 %v3571, 127
        %v3573 = vand.u32 2147483647, %v538
        %v3574 = vand.u32 %v3573, 8388607
        %v3575 = vor.u32 %v3574, 8388608
        %v3576 = vsub.s32 0, %v3575
        %v3577 = vadd.s32 %v3572, 1
        %vm3578 = vcmp.gt.s32.totalorder %v3577, 0
        %v3579 = vsel %vm3578, %v3577, 0
        %v3580 = vshrl.u32 %v3579, 5
        %v3581 = vand.u32 %v3579, 31
        %v3582 = vsub.s32 32, %v3581
        %v3583 = vshrl.u32 683565275, %v3582
        %v3584 = vshll.u32 683565275, %v3581
        %v3585 = vshrl.u32 2475754826, %v3582
        %v3586 = vor.u32 %v3584, %v3585
        %v3587 = vshll.u32 2475754826, %v3581
        %v3588 = vshrl.u32 2131351028, %v3582
        %v3589 = vor.u32 %v3587, %v3588
        %v3590 = vshll.u32 2131351028, %v3581
        %v3591 = vshrl.u32 2102212464, %v3582
        %v3592 = vor.u32 %v3590, %v3591
        %v3593 = vshll.u32 2102212464, %v3581
        %v3594 = vshrl.u32 920167782, %v3582
        %v3595 = vor.u32 %v3593, %v3594
        %v3596 = vshll.u32 920167782, %v3581
        %v3597 = vshrl.u32 1326507024, %v3582
        %v3598 = vor.u32 %v3596, %v3597
        %vm3599 = vcmp.lt.s32.totalorder %v3580, 1
        %vm3600 = vcmp.lt.s32.totalorder %v3580, 2
        %vm3601 = vcmp.lt.s32.totalorder %v3580, 3
        %vm3602 = vcmp.lt.s32.totalorder %v3580, 4
        %v3603 = vsel %vm3599, %v3583, %v3586
        %v3604 = vsel %vm3602, %v3592, 2102212464
        %v3605 = vsel %vm3601, %v3589, %v3604
        %v3606 = vsel %vm3600, %v3603, %v3605
        %v3607 = vsel %vm3599, %v3586, %v3589
        %v3608 = vsel %vm3602, %v3595, 920167782
        %v3609 = vsel %vm3601, %v3592, %v3608
        %v3610 = vsel %vm3600, %v3607, %v3609
        %v3611 = vsel %vm3599, %v3589, %v3592
        %v3612 = vsel %vm3602, %v3598, 1326507024
        %v3613 = vsel %vm3601, %v3595, %v3612
        %v3614 = vsel %vm3600, %v3611, %v3613
        %v3615 = vshll.u32 %v3575, 8
        %v3616 = vmul.u32.u64.compose %v3615, %v3614
        %v3617 = vextract.low.u32 %v3616
        %v3618 = vextract.high.u32 %v3616
        %v3619 = vmul.u32.u64.compose %v3615, %v3610
        %v3620 = vextract.low.u32 %v3619
        %v3621 = vextract.high.u32 %v3619
        %v3622 = vmul.u32 %v3615, %v3606
        %v3623 = vadd.s32 %v3618, %v3620
        %vm3624 = vc.u32 %v3618, %v3620
        %v3625 = vadd.s32 %v3621, 1
        %v3626 = vsel %vm3624, %v3625, %v3621
        %v3627 = vadd.s32 %v3622, %v3626
        %v3628 = vadd.s32 %v3627, 536870912
        %v3629 = vshrl.u32 %v3628, 30
        %v3630 = vshll.u32 %v3629, 30
        %v3631 = vsub.s32 %v3627, %v3630
        %vm3632 = vcmp.lt.s32.totalorder %v3631, 0
        %v3633 = vsub.s32 0, %v3631
        %v3634 = vsel %vm3632, %v3633, %v3631
        %v3635 = vclz %v3634
        %v3636 = vsub.s32 %v3635, 2
        %vm3637 = vcmp.gt.s32.totalorder 0, %v3636
        %v3638 = vsel %vm3637, 0, %v3636
        %v3639 = vsub.s32 32, %v3638
        %v3640 = vshll.u32 %v3631, %v3638
        %v3641 = vshrl.u32 %v3623, %v3639
        %v3642 = vor.u32 %v3640, %v3641
        %v3643 = vsub.s32 4294967266, %v3638
        %v3644 = vadd.s32 %v3643, 127
        %v3645 = vshll.u32 %v3644, 23
        %v3646 = vor.u32 4788187, %v3645
        %v3647 = vand.u32 2147483647, %v3646
        %v3649 = vcvt.s32.f32 %v3642
        %v3650 = vmul.f32 %v3649, %v3647
        %v3651 = vxor.u32 %v3650, 2147483648
        %v3652 = vsel %vm3569, %v3651, %v3650
        %v3653 = vsub.s32 4, %v3629
        %v3654 = vsel %vm3569, %v3653, %v3629
        %v3655 = vsel %vm3568, %v538, %v3652
        %v3656 = vsel %vm3568, 0, %v3654
        %v3657 = vcosq.f32.pop %v3655
        %v3658 = vsinq.f32.pop %v3655
        %vm3659 = vweird.f32 %v538
        %v3660 = vadd.s32 %v3656, 3
        %v3661 = vand.u32 %v3660, 3
        %vm3662 = vcmp.lt.s32.totalorder %v3661, 2
        %vm3663 = vcmp.eq.s32.totalorder %v3661, 0
        %v3664 = vxor.u32 %v3658, 2147483648
        %v3665 = vsel %vm3663, %v3657, %v3664
        %vm3666 = vcmp.eq.s32.totalorder %v3661, 2
        %v3667 = vxor.u32 %v3657, 2147483648
        %v3668 = vsel %vm3666, %v3667, %v3658
        %v3669 = vsel %vm3662, %v3665, %v3668
        %v3670 = vsel %vm3659, nan, %v3669
        %v3671 = vand.u32 2147483647, %v543
        %vm3672 = vcmp.le.f32.partialorder %v3671, 0.7853982
        %vm3673 = vcmp.lt.s32.totalorder %v543, 0
        %v3674 = vand.u32 %v543, 2139095040
        %v3675 = vshrl.u32 %v3674, 23
        %v3676 = vsub.s32 %v3675, 127
        %v3677 = vand.u32 2147483647, %v543
        %v3678 = vand.u32 %v3677, 8388607
        %v3679 = vor.u32 %v3678, 8388608
        %v3680 = vsub.s32 0, %v3679
        %v3681 = vadd.s32 %v3676, 1
        %vm3682 = vcmp.gt.s32.totalorder %v3681, 0
        %v3683 = vsel %vm3682, %v3681, 0
        %v3684 = vshrl.u32 %v3683, 5
        %v3685 = vand.u32 %v3683, 31
        %v3686 = vsub.s32 32, %v3685
        %v3687 = vshrl.u32 683565275, %v3686
        %v3688 = vshll.u32 683565275, %v3685
        %v3689 = vshrl.u32 2475754826, %v3686
        %v3690 = vor.u32 %v3688, %v3689
        %v3691 = vshll.u32 2475754826, %v3685
        %v3692 = vshrl.u32 2131351028, %v3686
        %v3693 = vor.u32 %v3691, %v3692
        %v3694 = vshll.u32 2131351028, %v3685
        %v3695 = vshrl.u32 2102212464, %v3686
        %v3696 = vor.u32 %v3694, %v3695
        %v3697 = vshll.u32 2102212464, %v3685
        %v3698 = vshrl.u32 920167782, %v3686
        %v3699 = vor.u32 %v3697, %v3698
        %v3700 = vshll.u32 920167782, %v3685
        %v3701 = vshrl.u32 1326507024, %v3686
        %v3702 = vor.u32 %v3700, %v3701
        %vm3703 = vcmp.lt.s32.totalorder %v3684, 1
        %vm3704 = vcmp.lt.s32.totalorder %v3684, 2
        %vm3705 = vcmp.lt.s32.totalorder %v3684, 3
        %vm3706 = vcmp.lt.s32.totalorder %v3684, 4
        %v3707 = vsel %vm3703, %v3687, %v3690
        %v3708 = vsel %vm3706, %v3696, 2102212464
        %v3709 = vsel %vm3705, %v3693, %v3708
        %v3710 = vsel %vm3704, %v3707, %v3709
        %v3711 = vsel %vm3703, %v3690, %v3693
        %v3712 = vsel %vm3706, %v3699, 920167782
        %v3713 = vsel %vm3705, %v3696, %v3712
        %v3714 = vsel %vm3704, %v3711, %v3713
        %v3715 = vsel %vm3703, %v3693, %v3696
        %v3716 = vsel %vm3706, %v3702, 1326507024
        %v3717 = vsel %vm3705, %v3699, %v3716
        %v3718 = vsel %vm3704, %v3715, %v3717
        %v3719 = vshll.u32 %v3679, 8
        %v3720 = vmul.u32.u64.compose %v3719, %v3718
        %v3721 = vextract.low.u32 %v3720
        %v3722 = vextract.high.u32 %v3720
        %v3723 = vmul.u32.u64.compose %v3719, %v3714
        %v3724 = vextract.low.u32 %v3723
        %v3725 = vextract.high.u32 %v3723
        %v3726 = vmul.u32 %v3719, %v3710
        %v3727 = vadd.s32 %v3722, %v3724
        %vm3728 = vc.u32 %v3722, %v3724
        %v3729 = vadd.s32 %v3725, 1
        %v3730 = vsel %vm3728, %v3729, %v3725
        %v3731 = vadd.s32 %v3726, %v3730
        %v3732 = vadd.s32 %v3731, 536870912
        %v3733 = vshrl.u32 %v3732, 30
        %v3734 = vshll.u32 %v3733, 30
        %v3735 = vsub.s32 %v3731, %v3734
        %vm3736 = vcmp.lt.s32.totalorder %v3735, 0
        %v3737 = vsub.s32 0, %v3735
        %v3738 = vsel %vm3736, %v3737, %v3735
        %v3739 = vclz %v3738
        %v3740 = vsub.s32 %v3739, 2
        %vm3741 = vcmp.gt.s32.totalorder 0, %v3740
        %v3742 = vsel %vm3741, 0, %v3740
        %v3743 = vsub.s32 32, %v3742
        %v3744 = vshll.u32 %v3735, %v3742
        %v3745 = vshrl.u32 %v3727, %v3743
        %v3746 = vor.u32 %v3744, %v3745
        %v3747 = vsub.s32 4294967266, %v3742
        %v3748 = vadd.s32 %v3747, 127
        %v3749 = vshll.u32 %v3748, 23
        %v3750 = vor.u32 4788187, %v3749
        %v3751 = vand.u32 2147483647, %v3750
        %v3753 = vcvt.s32.f32 %v3746
        %v3754 = vmul.f32 %v3753, %v3751
        %v3755 = vxor.u32 %v3754, 2147483648
        %v3756 = vsel %vm3673, %v3755, %v3754
        %v3757 = vsub.s32 4, %v3733
        %v3758 = vsel %vm3673, %v3757, %v3733
        %v3759 = vsel %vm3672, %v543, %v3756
        %v3760 = vsel %vm3672, 0, %v3758
        %v3761 = vcosq.f32.pop %v3759
        %v3762 = vsinq.f32.pop %v3759
        %vm3763 = vweird.f32 %v543
        %v3764 = vadd.s32 %v3760, 3
        %v3765 = vand.u32 %v3764, 3
        %vm3766 = vcmp.lt.s32.totalorder %v3765, 2
        %vm3767 = vcmp.eq.s32.totalorder %v3765, 0
        %v3768 = vxor.u32 %v3762, 2147483648
        %v3769 = vsel %vm3767, %v3761, %v3768
        %vm3770 = vcmp.eq.s32.totalorder %v3765, 2
        %v3771 = vxor.u32 %v3761, 2147483648
        %v3772 = vsel %vm3770, %v3771, %v3762
        %v3773 = vsel %vm3766, %v3769, %v3772
        %v3774 = vsel %vm3763, nan, %v3773
        %v3775 = vand.u32 2147483647, %v548
        %vm3776 = vcmp.le.f32.partialorder %v3775, 0.7853982
        %vm3777 = vcmp.lt.s32.totalorder %v548, 0
        %v3778 = vand.u32 %v548, 2139095040
        %v3779 = vshrl.u32 %v3778, 23
        %v3780 = vsub.s32 %v3779, 127
        %v3781 = vand.u32 2147483647, %v548
        %v3782 = vand.u32 %v3781, 8388607
        %v3783 = vor.u32 %v3782, 8388608
        %v3784 = vsub.s32 0, %v3783
        %v3785 = vadd.s32 %v3780, 1
        %vm3786 = vcmp.gt.s32.totalorder %v3785, 0
        %v3787 = vsel %vm3786, %v3785, 0
        %v3788 = vshrl.u32 %v3787, 5
        %v3789 = vand.u32 %v3787, 31
        %v3790 = vsub.s32 32, %v3789
        %v3791 = vshrl.u32 683565275, %v3790
        %v3792 = vshll.u32 683565275, %v3789
        %v3793 = vshrl.u32 2475754826, %v3790
        %v3794 = vor.u32 %v3792, %v3793
        %v3795 = vshll.u32 2475754826, %v3789
        %v3796 = vshrl.u32 2131351028, %v3790
        %v3797 = vor.u32 %v3795, %v3796
        %v3798 = vshll.u32 2131351028, %v3789
        %v3799 = vshrl.u32 2102212464, %v3790
        %v3800 = vor.u32 %v3798, %v3799
        %v3801 = vshll.u32 2102212464, %v3789
        %v3802 = vshrl.u32 920167782, %v3790
        %v3803 = vor.u32 %v3801, %v3802
        %v3804 = vshll.u32 920167782, %v3789
        %v3805 = vshrl.u32 1326507024, %v3790
        %v3806 = vor.u32 %v3804, %v3805
        %vm3807 = vcmp.lt.s32.totalorder %v3788, 1
        %vm3808 = vcmp.lt.s32.totalorder %v3788, 2
        %vm3809 = vcmp.lt.s32.totalorder %v3788, 3
        %vm3810 = vcmp.lt.s32.totalorder %v3788, 4
        %v3811 = vsel %vm3807, %v3791, %v3794
        %v3812 = vsel %vm3810, %v3800, 2102212464
        %v3813 = vsel %vm3809, %v3797, %v3812
        %v3814 = vsel %vm3808, %v3811, %v3813
        %v3815 = vsel %vm3807, %v3794, %v3797
        %v3816 = vsel %vm3810, %v3803, 920167782
        %v3817 = vsel %vm3809, %v3800, %v3816
        %v3818 = vsel %vm3808, %v3815, %v3817
        %v3819 = vsel %vm3807, %v3797, %v3800
        %v3820 = vsel %vm3810, %v3806, 1326507024
        %v3821 = vsel %vm3809, %v3803, %v3820
        %v3822 = vsel %vm3808, %v3819, %v3821
        %v3823 = vshll.u32 %v3783, 8
        %v3824 = vmul.u32.u64.compose %v3823, %v3822
        %v3825 = vextract.low.u32 %v3824
        %v3826 = vextract.high.u32 %v3824
        %v3827 = vmul.u32.u64.compose %v3823, %v3818
        %v3828 = vextract.low.u32 %v3827
        %v3829 = vextract.high.u32 %v3827
        %v3830 = vmul.u32 %v3823, %v3814
        %v3831 = vadd.s32 %v3826, %v3828
        %vm3832 = vc.u32 %v3826, %v3828
        %v3833 = vadd.s32 %v3829, 1
        %v3834 = vsel %vm3832, %v3833, %v3829
        %v3835 = vadd.s32 %v3830, %v3834
        %v3836 = vadd.s32 %v3835, 536870912
        %v3837 = vshrl.u32 %v3836, 30
        %v3838 = vshll.u32 %v3837, 30
        %v3839 = vsub.s32 %v3835, %v3838
        %vm3840 = vcmp.lt.s32.totalorder %v3839, 0
        %v3841 = vsub.s32 0, %v3839
        %v3842 = vsel %vm3840, %v3841, %v3839
        %v3843 = vclz %v3842
        %v3844 = vsub.s32 %v3843, 2
        %vm3845 = vcmp.gt.s32.totalorder 0, %v3844
        %v3846 = vsel %vm3845, 0, %v3844
        %v3847 = vsub.s32 32, %v3846
        %v3848 = vshll.u32 %v3839, %v3846
        %v3849 = vshrl.u32 %v3831, %v3847
        %v3850 = vor.u32 %v3848, %v3849
        %v3851 = vsub.s32 4294967266, %v3846
        %v3852 = vadd.s32 %v3851, 127
        %v3853 = vshll.u32 %v3852, 23
        %v3854 = vor.u32 4788187, %v3853
        %v3855 = vand.u32 2147483647, %v3854
        %v3857 = vcvt.s32.f32 %v3850
        %v3858 = vmul.f32 %v3857, %v3855
        %v3859 = vxor.u32 %v3858, 2147483648
        %v3860 = vsel %vm3777, %v3859, %v3858
        %v3861 = vsub.s32 4, %v3837
        %v3862 = vsel %vm3777, %v3861, %v3837
        %v3863 = vsel %vm3776, %v548, %v3860
        %v3864 = vsel %vm3776, 0, %v3862
        %v3865 = vcosq.f32.pop %v3863
        %v3866 = vsinq.f32.pop %v3863
        %vm3867 = vweird.f32 %v548
        %v3868 = vadd.s32 %v3864, 3
        %v3869 = vand.u32 %v3868, 3
        %vm3870 = vcmp.lt.s32.totalorder %v3869, 2
        %vm3871 = vcmp.eq.s32.totalorder %v3869, 0
        %v3872 = vxor.u32 %v3866, 2147483648
        %v3873 = vsel %vm3871, %v3865, %v3872
        %vm3874 = vcmp.eq.s32.totalorder %v3869, 2
        %v3875 = vxor.u32 %v3865, 2147483648
        %v3876 = vsel %vm3874, %v3875, %v3866
        %v3877 = vsel %vm3870, %v3873, %v3876
        %v3878 = vsel %vm3867, nan, %v3877
        %3879 = vst [vmem:[%s178] sm:$0xff] %v654
        %3880 = vst [vmem:[%s178 + $0x8] sm:$0xff] %v758
        %3881 = vst [vmem:[%s178 + $0x10] sm:$0xff] %v862
        %3882 = vst [vmem:[%s178 + $0x18] sm:$0xff] %v966
        %3883 = vst [vmem:[%s178 + $0x20] sm:$0xff] %v1070
        %3884 = vst [vmem:[%s178 + $0x28] sm:$0xff] %v1174
        %3885 = vst [vmem:[%s178 + $0x30] sm:$0xff] %v1278
        %3886 = vst [vmem:[%s178 + $0x38] sm:$0xff] %v1382
        %3887 = vst [vmem:[%s178 + $0x40] sm:$0xff] %v1486
        %3888 = vst [vmem:[%s178 + $0x48] sm:$0xff] %v1590
        %3889 = vst [vmem:[%s178 + $0x50] sm:$0xff] %v1694
        %3890 = vst [vmem:[%s178 + $0x58] sm:$0xff] %v1798
        %3891 = vst [vmem:[%s178 + $0x60] sm:$0xff] %v1902
        %3892 = vst [vmem:[%s178 + $0x68] sm:$0xff] %v2006
        %3893 = vst [vmem:[%s178 + $0x70] sm:$0xff] %v2110
        %3894 = vst [vmem:[%s178 + $0x78] sm:$0xff] %v2214
        %3895 = vst [vmem:[%s178 + $0x80] sm:$0xff] %v2318
        %3896 = vst [vmem:[%s178 + $0x88] sm:$0xff] %v2422
        %3897 = vst [vmem:[%s178 + $0x90] sm:$0xff] %v2526
        %3898 = vst [vmem:[%s178 + $0x98] sm:$0xff] %v2630
        %3899 = vst [vmem:[%s178 + $0xa0] sm:$0xff] %v2734
        %3900 = vst [vmem:[%s178 + $0xa8] sm:$0xff] %v2838
        %3901 = vst [vmem:[%s178 + $0xb0] sm:$0xff] %v2942
        %3902 = vst [vmem:[%s178 + $0xb8] sm:$0xff] %v3046
        %3903 = vst [vmem:[%s178 + $0xc0] sm:$0xff] %v3150
        %3904 = vst [vmem:[%s178 + $0xc8] sm:$0xff] %v3254
        %3905 = vst [vmem:[%s178 + $0xd0] sm:$0xff] %v3358
        %3906 = vst [vmem:[%s178 + $0xd8] sm:$0xff] %v3462
        %3907 = vst [vmem:[%s178 + $0xe0] sm:$0xff] %v3566
        %3908 = vst [vmem:[%s178 + $0xe8] sm:$0xff] %v3670
        %3909 = vst [vmem:[%s178 + $0xf0] sm:$0xff] %v3774
        %3910 = vst [vmem:[%s178 + $0xf8] sm:$0xff] %v3878
        %s3911 = sand.u32 %s107, 1
        %s3912 = scalar_lea.sflag [#allocation3], %s3911
        %s3913 = sand.u32 %s107, 1
        %s3914 = smul.addr %s3913, 256
        %s3915 = scalar_lea.vmem [#allocation2], %s3914
        // Predicated region
        $region33: #{tpu_custom_call.1} parent=31 // pred_check
          %p3916 = pneg %p117
        $region34: #{tpu_custom_call.1} parent=31 // pred_check_branch
          %3918 = sbr.rel (%p3916) target = $region36
        $region35: #{tpu_custom_call.1} parent=31 // pred_region
          %s3919 = smul.u32 32, %s22
          %s3921 = ssub.s32 4096, 4096
          %3922 = vsyncadd %s3912, %s3921
          %s3923 = sadd.s32 %s21, %s3919
          %s3924 = smul.addr %s3923, 128
          %s3925 = scalar_lea.hbm %s3, %s3924
          %s3926 = sshll.u32 %s3915, 4
          %s3927 = int_to_ptr.vmem [resolvable:$true] %s3926
          %3932 = dma.vmem_to_hbm [thread:$0]  %s3927, 4096, %s3925, %s3912, 128, 128, 8
        $region36: #{tpu_custom_call.1} parent=31 // pred_fallthru
          _
      $region32: #{tpu_custom_call.1} parent=5 // pred_fallthru
        _
      %p3933 = scmp.le.s32.totalorder 2, %s12
      // Predicated region
      $region37: #{tpu_custom_call.1} parent=5 // pred_check
        %p3934 = pneg %p3933
      $region38: #{tpu_custom_call.1} parent=5 // pred_check_branch
        %3936 = sbr.rel (%p3934) target = $region40
      $region39: #{tpu_custom_call.1} parent=5 // pred_region
        %s3937 = ssub.s32 %s12, 2
        // Predicated region
        $region41: #{tpu_custom_call.1} parent=39 // pred_check
          %p3938 = pneg %p123
        $region42: #{tpu_custom_call.1} parent=39 // pred_check_branch
          %3940 = sbr.rel (%p3938) target = $region44
        $region43: #{tpu_custom_call.1} parent=39 // pred_region
          %s3941 = sand.u32 %s108, 1
          %s3942 = scalar_lea.sflag [#allocation3], %s3941
          %s3943 = sand.u32 %s108, 1
          %s3944 = smul.addr %s3943, 256
          %s3945 = scalar_lea.vmem [#allocation2], %s3944
          %3946 = dma.done %s3942, 4096
        $region44: #{tpu_custom_call.1} parent=39 // pred_fallthru
          _
      $region40: #{tpu_custom_call.1} parent=5 // pred_fallthru
        _
    $region6: #{tpu_custom_call.1} parent=1 // loop_footer
      %s16 = sadd.s32 1, %s12
    $region7: #{tpu_custom_call.1} parent=1 // loop_footer_branch
      %11 = sbr.rel target = $region3
    $region8: #{tpu_custom_call.1} parent=1 // loop_exit
      _
    %3947 = vsyncpa [#allocation3], 1
    %s3948 = scalar_lea.sflag [#allocation3], 1
    %3949 = vsyncpa %s3948, 1

</llo_original>
